<compile_context>
chip_gen: v7x
topology: tpu7x:2x2x1
jax: 0.10.0
libtpu: 0.0.40
codegen_flags: <defaults>
</compile_context>

<pallas_src>
import numpy as np
import jax
import jax.numpy as jnp
from jax.experimental import pallas as pl
from jax.experimental.pallas import tpu as pltpu


# Scoped-VMEM ceiling: safe on every generation (v7x physical is 64 MiB).
_VMEM_LIMIT_BYTES = 48 * 1024 * 1024


def _cparams(semantics):
    return pltpu.CompilerParams(dimension_semantics=semantics,
                                vmem_limit_bytes=_VMEM_LIMIT_BYTES)


def _pick_block(n, unit_bytes, max_bytes, align=1):
    """Largest divisor d of n with d*unit_bytes <= max_bytes and
    (d == n or d % align == 0); falls back to the smallest legal divisor."""
    cands = [d for d in range(1, n + 1)
             if n % d == 0 and (d == n or d % align == 0)]
    fitting = [d for d in cands if d * unit_bytes <= max_bytes]
    return max(fitting) if fitting else min(cands)


# --------------------------------------------------------------------------
# host-side (numpy) parameter construction, mirroring parpareparam()
# --------------------------------------------------------------------------
def _gaussianwin(L, alpha):
    N = L - 1
    n = np.arange(0, N + 1, dtype=np.float64) - N / 2.0
    return np.exp(-0.5 * (alpha * n / (N / 2.0)) ** 2)


def waveconvparam(bin_resolution, virtual_wavelength, cycles):
    c = 3e8
    s_z = bin_resolution * c
    samples = int(round(cycles * virtual_wavelength / (bin_resolution * c)))
    num_cycles = samples * s_z / virtual_wavelength
    sigma = 0.3
    grids = np.arange(1, samples + 1, dtype=np.float64)
    sin_wave = np.sin(2 * np.pi * (num_cycles * grids) / samples)
    cos_wave = np.cos(2 * np.pi * (num_cycles * grids) / samples)
    window = _gaussianwin(samples, 1.0 / sigma)
    return cos_wave * window, sin_wave * window


def definePsf(sptial_grid, temprol_grid, slope):
    U, V = sptial_grid, temprol_grid
    x = np.linspace(-1.0, 1.0, 2 * U)
    y = np.linspace(-1.0, 1.0, 2 * U)
    z = np.linspace(0.0, 2.0, 2 * V)
    grid_z, grid_y, grid_x = np.meshgrid(z, y, x, indexing="ij")
    psf = np.abs((4.0 * slope) ** 2 * (grid_x ** 2 + grid_y ** 2) - grid_z)
    psf = (psf == psf.min(axis=0, keepdims=True)).astype(np.float64)
    psf = psf / np.sum(psf[:, U, U])
    psf = psf / np.linalg.norm(psf.ravel())
    psf = np.roll(psf, U, axis=1)
    psf = np.roll(psf, U, axis=2)
    return psf


def resamplingOperator(M):
    mtx = np.zeros((M * M, M), dtype=np.float64)
    x = np.arange(1, M * M + 1)
    mtx[x - 1, np.ceil(np.sqrt(x)).astype(np.int64) - 1] = 1.0
    mtx = mtx / np.sqrt(x)[:, None]
    mtxi = mtx.T.copy()
    K = int(np.log2(M))
    for _ in range(K):
        mtx = 0.5 * (mtx[0::2, :] + mtx[1::2, :])
        mtxi = 0.5 * (mtxi[:, 0::2] + mtxi[:, 1::2])
    return mtx, mtxi


def _band_matrix(w_rev_k, T, pad, off):
    """Dense (T, T) operator equivalent to the zero-padded cross-correlation
       out[t] = sum_j xpad[t + off + j] * w_rev_k[j],  xpad = pad(x, pad)."""
    k = int(w_rev_k.shape[0])
    W = np.zeros((T, T), dtype=np.float64)
    t = np.arange(T)
    for j in range(k):
        d = off + j - pad
        tp = t + d
        valid = (tp >= 0) & (tp < T)
        W[t[valid], tp[valid]] = w_rev_k[j]
    return W


# --------------------------------------------------------------------------
# Pallas kernel 1: tiled batched left matmul   out[g*B + b] = A[g] @ X[b]
#   (used for the fused wave-correlation + mtx resampling)
# --------------------------------------------------------------------------
def _bmm_kernel(a_ref, x_ref, o_ref):
    o_ref[...] = jnp.dot(a_ref[...], x_ref[...],
                         preferred_element_type=jnp.float32)


def batched_left_matmul(a_gmm, x_bmn, tn):
    G, M1, M2 = a_gmm.shape
    Bt, M2b, N = x_bmn.shape
    assert M2 == M2b and N % tn == 0
    return pl.pallas_call(
        _bmm_kernel,
        out_shape=jax.ShapeDtypeStruct((G * Bt, M1, N), jnp.float32),
        grid=(G, Bt, N // tn),
        in_specs=[
            pl.BlockSpec((None, M1, M2), lambda g, b, n: (g, 0, 0)),
            pl.BlockSpec((None, M2, tn), lambda g, b, n: (b, 0, n)),
        ],
        out_specs=pl.BlockSpec((None, M1, tn),
                               lambda g, b, n: (g * Bt + b, 0, n)),
        compiler_params=_cparams(("parallel", "parallel", "parallel")),
    )(a_gmm, x_bmn)


# --------------------------------------------------------------------------
# Pallas kernel 2: fused FCA global sums (real + imag) with tiled reduction
# --------------------------------------------------------------------------
def _chansum_kernel(dre_ref, dim_ref, ore_ref, oim_ref, accr_ref, acci_ref):
    b = pl.program_id(0)
    k = pl.program_id(1)

    @pl.when(k == 0)
    def _():
        accr_ref[...] = jnp.zeros_like(accr_ref)
        acci_ref[...] = jnp.zeros_like(acci_ref)

    # axis-0 is the (untiled) batch-of-slabs axis -> pure VPU adds
    accr_ref[...] += jnp.sum(dre_ref[...], axis=0)
    acci_ref[...] += jnp.sum(dim_ref[...], axis=0)

    @pl.when(k == pl.num_programs(1) - 1)
    def _():
        ore_ref[b] = jnp.sum(accr_ref[...])
        oim_ref[b] = jnp.sum(acci_ref[...])


def fused_channel_sums(dre, dim, tt):
    BC, T2, H2, W2 = dre.shape
    assert T2 % tt == 0
    spec = pl.BlockSpec((None, tt, H2, W2), lambda b, k: (b, k, 0, 0))
    return pl.pallas_call(
        _chansum_kernel,
        out_shape=(jax.ShapeDtypeStruct((BC,), jnp.float32),
                   jax.ShapeDtypeStruct((BC,), jnp.float32)),
        grid=(BC, T2 // tt),
        in_specs=[spec, spec],
        out_specs=(pl.BlockSpec(memory_space=pltpu.MemorySpace.SMEM),
                   pl.BlockSpec(memory_space=pltpu.MemorySpace.SMEM)),
        scratch_shapes=[pltpu.VMEM((H2, W2), jnp.float32),
                        pltpu.VMEM((H2, W2), jnp.float32)],
        compiler_params=_cparams(("arbitrary", "arbitrary")),
    )(dre, dim)


# --------------------------------------------------------------------------
# Pallas kernel 3: fused FCA channel scaling + complex PSF multiply (tiled)
# --------------------------------------------------------------------------
def _fca_psf_kernel(zre_ref, zim_ref, dre_ref, dim_ref, w1_ref, w2_ref,
                    ore_ref, oim_ref):
    b = pl.program_id(1)
    a = dre_ref[...] * zre_ref[b]           # FCA-scaled real part
    c = dim_ref[...] * zim_ref[b]           # FCA-scaled imag part
    w1 = w1_ref[...]
    w2 = w2_ref[...]
    ore_ref[...] = a * w1 - c * w2
    oim_ref[...] = a * w2 + c * w1


def fca_scale_psf_mult(zre, zim, dre, dim, w1, w2, tt):
    B2D, T2, H2, W2 = dre.shape
    assert T2 % tt == 0
    spec_d = pl.BlockSpec((None, tt, H2, W2), lambda t, b: (b, t, 0, 0))
    spec_w = pl.BlockSpec((tt, H2, W2), lambda t, b: (t, 0, 0))
    # grid ordered (t, b): PSF tiles keep the same block index across the
    # inner batch axis and are not re-DMAed.
    return pl.pallas_call(
        _fca_psf_kernel,
        out_shape=(jax.ShapeDtypeStruct(dre.shape, jnp.float32),
                   jax.ShapeDtypeStruct(dre.shape, jnp.float32)),
        grid=(T2 // tt, B2D),
        in_specs=[
            pl.BlockSpec(memory_space=pltpu.MemorySpace.SMEM),
            pl.BlockSpec(memory_space=pltpu.MemorySpace.SMEM),
            spec_d, spec_d, spec_w, spec_w,
        ],
        out_specs=(spec_d, spec_d),
        compiler_params=_cparams(("parallel", "parallel")),
    )(zre, zim, dre, dim, w1, w2)


# --------------------------------------------------------------------------
# Pallas kernel 4: FUSED phasor magnitude + inverse temporal resampling
#   out[b] = mtxi @ magnitude(cos/sin streams of the cropped ifft volume)
#   The magnitude tile never touches HBM: elementwise on VPU/EUP, straight
#   into the MXU matmul.
# --------------------------------------------------------------------------
def _mag_resample_kernel(mtxi_ref, cr_ref, ci_ref, sr_ref, si_ref, o_ref):
    cr = cr_ref[...]
    ci = ci_ref[...]
    sr = sr_ref[...]
    si = si_ref[...]
    sum_real = cr * cr - ci * ci + sr * sr - si * si
    sum_imag = 2.0 * (cr * ci + sr * si)
    tmp = (jnp.sqrt(sum_real * sum_real + sum_imag * sum_imag) + sum_real) * 0.5
    mag = jnp.sqrt(jnp.maximum(tmp, 0.0)).astype(mtxi_ref.dtype)
    o_ref[...] = jnp.dot(mtxi_ref[...], mag,
                         preferred_element_type=jnp.float32)


def fused_magnitude_resample(mtxi, vr, vi, bd, tn):
    # vr, vi: (2*BD, T, HW); cos stream = rows [0:BD], sin stream = [BD:2BD]
    two_bd, T, HW = vr.shape
    assert two_bd == 2 * bd and HW % tn == 0
    spec_cos = pl.BlockSpec((None, T, tn), lambda b, n: (b, 0, n))
    spec_sin = pl.BlockSpec((None, T, tn), lambda b, n: (b + bd, 0, n))
    return pl.pallas_call(
        _mag_resample_kernel,
        out_shape=jax.ShapeDtypeStruct((bd, T, HW), jnp.float32),
        grid=(bd, HW // tn),
        in_specs=[pl.BlockSpec((T, T), lambda b, n: (0, 0)),   # mtxi resident
                  spec_cos, spec_cos, spec_sin, spec_sin],
        out_specs=pl.BlockSpec((None, T, tn), lambda b, n: (b, 0, n)),
        compiler_params=_cparams(("parallel", "parallel")),
    )(mtxi, vr, vi, vr, vi)


# --------------------------------------------------------------------------
# Full module (forward pass of tfphasor_atten_fcachannel)
# --------------------------------------------------------------------------
class TFPhasorAttenFCAChannel:
    def __init__(self, spatial=256, crop=512, bin_len=0.01, wall_size=2.0,
                 sampling_coeff=2.0, cycles=5, in_chans=1, f_channel=64,
                 seed=0, use_bf16_matmul=False):
        self.spatial_grid = spatial
        self.crop = crop
        assert 2 ** int(np.log2(crop)) == crop
        self.f_channel = f_channel
        # bf16 MXU path (~3x throughput on v6e/v7x); default off to preserve
        # f32 numerics of the reference module.
        self.use_bf16_matmul = use_bf16_matmul

        c = 3e8
        self.width = wall_size / 2.0
        self.bin_resolution = bin_len / c
        self.trange = crop * c * self.bin_resolution

        s_lamda_limit = wall_size / (spatial - 1)
        virtual_wavelength = sampling_coeff * (s_lamda_limit * 2)
        cos_k, sin_k = waveconvparam(self.bin_resolution, virtual_wavelength,
                                     cycles)
        wave_2xk_np = np.stack([cos_k, sin_k], axis=0)[:, ::-1].copy()  # reversed
        self.wave_2xk = jnp.asarray(wave_2xk_np, dtype=jnp.float32)
        k = int(wave_2xk_np.shape[1])
        self.knum = k
        pad = k // 2
        off = 1 if k % 2 == 0 else 0

        slope = self.width / self.trange
        psf = definePsf(spatial, crop, slope)
        fpsf = np.fft.fftn(psf)
        invpsf = np.conjugate(fpsf)
        self.invpsf_real = jnp.asarray(np.real(invpsf), dtype=jnp.float32)
        self.invpsf_imag = jnp.asarray(np.imag(invpsf), dtype=jnp.float32)

        mtx, mtxi = resamplingOperator(crop)
        self.mtx_f32 = jnp.asarray(mtx, dtype=jnp.float32)
        self.mtxi_f32 = jnp.asarray(mtxi, dtype=jnp.float32)

        # Fused operator: virtual-wave banded correlation followed by the
        # temporal resampling collapses into one (T x T) matrix per stream.
        band_c = _band_matrix(wave_2xk_np[0], crop, pad, off)
        band_s = _band_matrix(wave_2xk_np[1], crop, pad, off)
        a_wave = np.stack([mtx @ band_c, mtx @ band_s], axis=0)
        self.wave_mtx_2xTxT = jnp.asarray(a_wave, dtype=jnp.float32)

        # FCABlock parameters (deterministic synthetic init; conv/softmax/
        # avg_pool/sigmoid exist in the torch __init__ but are unused in
        # forward and are omitted).
        mid = f_channel // 16
        assert mid >= 1, "f_channel must be >= 16 (FCA reduction=16)"
        k1, k2 = jax.random.split(jax.random.PRNGKey(seed))
        self.dct_weight = jnp.float32(1.0)
        self.fca_w1 = (jax.random.normal(k1, (mid, f_channel), jnp.float32)
                       / np.sqrt(f_channel))
        self.fca_w2 = (jax.random.normal(k2, (f_channel, mid), jnp.float32)
                       / np.sqrt(mid))

        # tile tables (per-block byte budgets keep double-buffered working
        # sets well inside the 48 MiB scoped VMEM limit on every generation)
        T, H, W = crop, spatial, spatial
        T2, H2, W2 = 2 * T, 2 * H, 2 * W
        self._tn = _pick_block(H * W, T * 4, 4 << 20, align=128)       # matmul lanes
        self._tt_fca = _pick_block(T2, H2 * W2 * 4, 2 << 20, align=1)  # fca/psf T2 tile
        self._tt_sum = _pick_block(T2, H2 * W2 * 4, 4 << 20, align=1)  # chansum T2 tile
        # fused magnitude+resample: 4 input tiles + 1 output tile per lane column
        self._tn_mag = _pick_block(H * W, T * 4 * 5, 10 << 20, align=128)

    def _fca_excitation(self, y_bxc):
        # tiny (C -> C//16 -> C) MLP, kept in plain JAX glue
        h = jnp.maximum(y_bxc @ self.fca_w1.T, 0.0)
        return jax.nn.sigmoid(h @ self.fca_w2.T)

    def __call__(self, x_bxdxtxhxw):
        B, D, T, H, W = x_bxdxtxhxw.shape
        assert H == W == self.spatial_grid
        assert T == self.crop
        assert 2 * D == self.f_channel
        BD = B * D
        HW = H * W

        x = x_bxdxtxhxw.astype(jnp.float32)

        # 1+2) fused wave correlation + temporal resampling on the ORIGINAL
        #      (BD, T, H*W) layout: one tiled MXU matmul, no transposes.
        right = x.reshape(BD, T, HW)
        a_wave = self.wave_mtx_2xTxT
        if self.use_bf16_matmul:
            right = right.astype(jnp.bfloat16)
            a_wave = a_wave.astype(jnp.bfloat16)
        tmp = batched_left_matmul(a_wave, right, self._tn)   # (2BD, T, HW)
        tmp2 = tmp.reshape(2 * BD, T, H, W)   # flat order (stream, B, D), as torch

        # 3) zero-pad to (2T,2H,2W) and 4-D FFT (over ALL dims, like torch fftn)
        datapad = jnp.pad(tmp2, ((0, 0), (0, T), (0, H), (0, W)))
        # TODO(synk): fftn/ifftn have no Pallas TPU equivalent; use jnp.fft
        # (3-D FFT over (T,H,W) + 1-D FFT over the batch axis == 4-D fftn).
        datafre = jnp.fft.fft(jnp.fft.fftn(datapad, axes=(1, 2, 3)), axis=0)
        dre = jnp.real(datafre)
        dim = jnp.imag(datafre)

        # 4) FCA channel attention: fused tiled global sums (Pallas) + tiny MLP.
        #    The (2*BD) flat axis is re-viewed as (B, 2*D) without reordering,
        #    exactly matching torch's `datafre.view(bnum, 2*dnum, ...)`.
        C = self.f_channel
        sre, sim = fused_channel_sums(dre, dim, self._tt_sum)
        sre = sre * self.dct_weight
        sim = sim * self.dct_weight
        zre = self._fca_excitation(sre.reshape(B, C)).reshape(-1)
        zim = self._fca_excitation(sim.reshape(B, C)).reshape(-1)

        # 5) fused FCA scaling + complex PSF multiply (tiled over T2)
        ore, oim = fca_scale_psf_mult(zre, zim, dre, dim,
                                      self.invpsf_real, self.invpsf_imag,
                                      self._tt_fca)

        # 6) inverse 4-D FFT, crop to (2BD, T, H, W)
        refre = jax.lax.complex(ore, oim)
        re = jnp.fft.ifft(jnp.fft.ifftn(refre, axes=(1, 2, 3)), axis=0)
        vol = re[:, :T, :H, :W]
        vr = jnp.real(vol).reshape(2 * BD, T, HW)
        vi = jnp.imag(vol).reshape(2 * BD, T, HW)

        # 7+8) fused phasor magnitude + inverse temporal resampling (mtxi @ .)
        #      — magnitude tiles never round-trip through HBM.
        mtxi = self.mtxi_f32
        if self.use_bf16_matmul:
            mtxi = mtxi.astype(jnp.bfloat16)
        out = fused_magnitude_resample(mtxi, vr, vi, BD, self._tn_mag)
        return out.reshape(B, D, T, H, W)


# --------------------------------------------------------------------------
# pure-jnp reference of the torch forward (for in-script validation)
# --------------------------------------------------------------------------
def _reference_forward(model, x):
    B, D, T, H, W = x.shape
    BD = B * D
    k = model.knum
    p = k // 2
    off = 1 if k % 2 == 0 else 0
    hp = jax.lax.Precision.HIGHEST

    xf = x.astype(jnp.float32).reshape(BD, T, H, W)
    data = xf.transpose(0, 2, 3, 1).reshape(-1, T)           # (BD*H*W, T)
    xpad = jnp.pad(data, ((0, 0), (p, p)))
    outs = []
    for m in range(2):
        acc = jnp.zeros_like(data)
        for j in range(k):
            acc = acc + xpad[:, off + j: off + j + T] * model.wave_2xk[m, j]
        outs.append(acc)
    d2 = jnp.stack(outs, 0).reshape(2, BD, H, W, T).transpose(0, 1, 4, 2, 3)
    d2 = d2.reshape(2 * BD, T, H, W)

    tmp = jnp.einsum('ij,bjk->bik', model.mtx_f32,
                     d2.reshape(2 * BD, T, H * W), precision=hp)
    tmp2 = tmp.reshape(2 * BD, T, H, W)
    datapad = jnp.pad(tmp2, ((0, 0), (0, T), (0, H), (0, W)))
    datafre = jnp.fft.fft(jnp.fft.fftn(datapad, axes=(1, 2, 3)), axis=0)
    dre, dim = jnp.real(datafre), jnp.imag(datafre)

    C = 2 * D
    y_re = jnp.sum(dre.reshape(2 * BD, -1), axis=-1) * model.dct_weight
    y_im = jnp.sum(dim.reshape(2 * BD, -1), axis=-1) * model.dct_weight
    z_re = model._fca_excitation(y_re.reshape(B, C)).reshape(-1)
    z_im = model._fca_excitation(y_im.reshape(B, C)).reshape(-1)
    a = dre * z_re.reshape(2 * BD, 1, 1, 1)
    b_ = dim * z_im.reshape(2 * BD, 1, 1, 1)
    w1, w2 = model.invpsf_real, model.invpsf_imag
    refre = jax.lax.complex(a * w1 - b_ * w2, a * w2 + b_ * w1)
    re = jnp.fft.ifft(jnp.fft.ifftn(refre, axes=(1, 2, 3)), axis=0)
    vol = re[:, :T, :H, :W]
    cr, ci = jnp.real(vol[:BD]), jnp.imag(vol[:BD])
    sr, si = jnp.real(vol[BD:]), jnp.imag(vol[BD:])
    sum_real = cr * cr - ci * ci + sr * sr - si * si
    sum_imag = 2.0 * (cr * ci + sr * si)
    t = jnp.maximum((jnp.sqrt(sum_real ** 2 + sum_imag ** 2) + sum_real) * 0.5, 0.0)
    s = jnp.sqrt(t)
    out = jnp.einsum('ij,bjk->bik', model.mtxi_f32,
                     s.reshape(BD, T, H * W), precision=hp)
    return out.reshape(B, D, T, H, W)


# --------------------------------------------------------------------------
if __name__ == "__main__":
    spatial = 16
    crop = 16
    bnum, dnum = 2, 8                 # B > 1 exercises the FCA view semantics
    f_channel = 2 * dnum

    model = TFPhasorAttenFCAChannel(spatial=spatial, crop=crop, bin_len=0.2,
                                    wall_size=2.0, sampling_coeff=2.0,
                                    cycles=5, in_chans=1,
                                    f_channel=f_channel, seed=0)

    key = jax.random.PRNGKey(0)
    x = jax.random.normal(key, (bnum, dnum, crop, spatial, spatial),
                          dtype=jnp.float32)

    fwd = jax.jit(lambda v: model(v))
    out = jax.block_until_ready(fwd(x))
    assert out.shape == (bnum, dnum, crop, spatial, spatial)
    assert bool(jnp.all(jnp.isfinite(out)))

    # cross-check against the pure-jnp reference of the torch forward
    ref = jax.block_until_ready(jax.jit(lambda v: _reference_forward(model, v))(x))
    err = float(jnp.max(jnp.abs(out - ref)) / (jnp.max(jnp.abs(ref)) + 1e-8))
    assert err < 5e-2, f"mismatch vs reference: normalized max err {err}"

    print("KERNEL_OK")
</pallas_src>

<mosaic_0001>
module attributes {stable_mosaic.version = 11 : i64} {
  func.func @_bmm_kernel(%arg0: i32, %arg1: i32, %arg2: i32, %arg3: memref<1x16x16xf32, #tpu.memory_space<vmem>>, %arg4: memref<1x16x256xf32, #tpu.memory_space<vmem>>, %arg5: memref<1x16x256xf32, #tpu.memory_space<vmem>>) attributes {dimension_semantics = [#tpu.dimension_semantics<parallel>, #tpu.dimension_semantics<parallel>, #tpu.dimension_semantics<parallel>], iteration_bounds = array<i64: 2, 16, 1>, scalar_prefetch = 0 : i64, scratch_operands = 0 : i64, tpu.core_type = #tpu.core_type<tc>, window_params = [{transform_indices = @transform_0, window_bounds = array<i64: 1, 16, 16>}, {transform_indices = @transform_1, window_bounds = array<i64: 1, 16, 256>}, {transform_indices = @transform_2, window_bounds = array<i64: 1, 16, 256>}]} {
    %c0 = arith.constant 0 : index
    %c0_0 = arith.constant 0 : index
    %c0_1 = arith.constant 0 : index
    %0 = vector.load %arg3[%c0, %c0_0, %c0_1] : memref<1x16x16xf32, #tpu.memory_space<vmem>>, vector<1x16x16xf32>
    %1 = vector.shape_cast %0 : vector<1x16x16xf32> to vector<16x16xf32>
    %c0_2 = arith.constant 0 : index
    %c0_3 = arith.constant 0 : index
    %c0_4 = arith.constant 0 : index
    %2 = vector.load %arg4[%c0_2, %c0_3, %c0_4] : memref<1x16x256xf32, #tpu.memory_space<vmem>>, vector<1x16x256xf32>
    %3 = vector.shape_cast %2 : vector<1x16x256xf32> to vector<16x256xf32>
    %cst = arith.constant dense<0.000000e+00> : vector<16x256xf32>
    %4 = tpu.matmul %1, %3, %cst {dimension_numbers = #tpu.dot_dimension_numbers<[1], [0], [0], [1], [0, 0, 1, 1], [], []>} : vector<16x16xf32>, vector<16x256xf32>, vector<16x256xf32> -> vector<16x256xf32>
    %c0_5 = arith.constant 0 : index
    %c0_6 = arith.constant 0 : index
    %c0_7 = arith.constant 0 : index
    %5 = vector.load %arg5[%c0_5, %c0_6, %c0_7] : memref<1x16x256xf32, #tpu.memory_space<vmem>>, vector<1x16x256xf32>
    %6 = vector.shape_cast %5 : vector<1x16x256xf32> to vector<16x256xf32>
    %7 = vector.shape_cast %4 : vector<16x256xf32> to vector<1x16x256xf32>
    tpu.vector_store %arg5[%c0_5, %c0_6, %c0_7], %7 {strides = array<i32>} : memref<1x16x256xf32, #tpu.memory_space<vmem>>, vector<1x16x256xf32>,
    return
  }
  func.func @transform_0(%arg0: i32, %arg1: i32, %arg2: i32) -> (i32, i32, i32) {
    %c0_i32 = arith.constant 0 : i32
    %c0_i32_0 = arith.constant 0 : i32
    %c0_i32_1 = arith.constant 0 : i32
    return %arg0, %c0_i32, %c0_i32_0 : i32, i32, i32
  }
  func.func @transform_1(%arg0: i32, %arg1: i32, %arg2: i32) -> (i32, i32, i32) {
    %c0_i32 = arith.constant 0 : i32
    %c0_i32_0 = arith.constant 0 : i32
    return %arg1, %c0_i32, %arg2 : i32, i32, i32
  }
  func.func @transform_2(%arg0: i32, %arg1: i32, %arg2: i32) -> (i32, i32, i32) {
    %c16_i32 = arith.constant 16 : i32
    %0 = arith.muli %arg0, %c16_i32 : i32
    %1 = arith.addi %0, %arg1 : i32
    %c0_i32 = arith.constant 0 : i32
    %c0_i32_0 = arith.constant 0 : i32
    return %1, %c0_i32, %arg2 : i32, i32, i32
  }
}

module attributes {stable_mosaic.version = 11 : i64} {
  func.func @_chansum_kernel(%arg0: i32, %arg1: i32, %arg2: memref<1x32x32x32xf32, #tpu.memory_space<vmem>>, %arg3: memref<1x32x32x32xf32, #tpu.memory_space<vmem>>, %arg4: memref<32xf32, #tpu.memory_space<smem>>, %arg5: memref<32xf32, #tpu.memory_space<smem>>, %arg6: memref<32x32xf32, #tpu.memory_space<vmem>>, %arg7: memref<32x32xf32, #tpu.memory_space<vmem>>) attributes {dimension_semantics = [#tpu.dimension_semantics<arbitrary>, #tpu.dimension_semantics<arbitrary>], iteration_bounds = array<i64: 32, 1>, scalar_prefetch = 0 : i64, scratch_operands = 2 : i64, tpu.core_type = #tpu.core_type<tc>, window_params = [{transform_indices = @transform_0, window_bounds = array<i64: 1, 32, 32, 32>}, {transform_indices = @transform_1, window_bounds = array<i64: 1, 32, 32, 32>}, {transform_indices = @transform_2, window_bounds = array<i64: 32>}, {transform_indices = @transform_3, window_bounds = array<i64: 32>}]} {
    %c0_i32 = arith.constant 0 : i32
    %0 = arith.cmpi eq, %arg1, %c0_i32 : i32
    %1 = arith.extui %0 : i1 to i32
    %c0_i32_0 = arith.constant 0 : i32
    %2 = arith.cmpi ne, %1, %c0_i32_0 : i32
    scf.if %2 {
      %cst_19 = arith.constant 0.000000e+00 : f32
      %18 = vector.broadcast %cst_19 : f32 to vector<32x32xf32>
      %c0_20 = arith.constant 0 : index
      %c0_21 = arith.constant 0 : index
      %19 = vector.load %arg6[%c0_20, %c0_21] : memref<32x32xf32, #tpu.memory_space<vmem>>, vector<32x32xf32>
      tpu.vector_store %arg6[%c0_20, %c0_21], %18 {strides = array<i32>} : memref<32x32xf32, #tpu.memory_space<vmem>>, vector<32x32xf32>,
      %cst_22 = arith.constant 0.000000e+00 : f32
      %20 = vector.broadcast %cst_22 : f32 to vector<32x32xf32>
      %c0_23 = arith.constant 0 : index
      %c0_24 = arith.constant 0 : index
      %21 = vector.load %arg7[%c0_23, %c0_24] : memref<32x32xf32, #tpu.memory_space<vmem>>, vector<32x32xf32>
      tpu.vector_store %arg7[%c0_23, %c0_24], %20 {strides = array<i32>} : memref<32x32xf32, #tpu.memory_space<vmem>>, vector<32x32xf32>,
    } else {
    }
    %c0 = arith.constant 0 : index
    %c0_1 = arith.constant 0 : index
    %3 = vector.load %arg6[%c0, %c0_1] : memref<32x32xf32, #tpu.memory_space<vmem>>, vector<32x32xf32>
    %c0_2 = arith.constant 0 : index
    %c0_3 = arith.constant 0 : index
    %c0_4 = arith.constant 0 : index
    %c0_5 = arith.constant 0 : index
    %4 = vector.load %arg2[%c0_2, %c0_3, %c0_4, %c0_5] : memref<1x32x32x32xf32, #tpu.memory_space<vmem>>, vector<1x32x32x32xf32>
    %5 = vector.shape_cast %4 : vector<1x32x32x32xf32> to vector<32x32x32xf32>
    %cst = arith.constant dense<0.000000e+00> : vector<32x32xf32>
    %6 = vector.multi_reduction <add>, %5, %cst [0] : vector<32x32x32xf32> to vector<32x32xf32>
    %7 = arith.addf %3, %6 : vector<32x32xf32>
    %c0_6 = arith.constant 0 : index
    %c0_7 = arith.constant 0 : index
    %8 = vector.load %arg6[%c0_6, %c0_7] : memref<32x32xf32, #tpu.memory_space<vmem>>, vector<32x32xf32>
    tpu.vector_store %arg6[%c0_6, %c0_7], %7 {strides = array<i32>} : memref<32x32xf32, #tpu.memory_space<vmem>>, vector<32x32xf32>,
    %c0_8 = arith.constant 0 : index
    %c0_9 = arith.constant 0 : index
    %9 = vector.load %arg7[%c0_8, %c0_9] : memref<32x32xf32, #tpu.memory_space<vmem>>, vector<32x32xf32>
    %c0_10 = arith.constant 0 : index
    %c0_11 = arith.constant 0 : index
    %c0_12 = arith.constant 0 : index
    %c0_13 = arith.constant 0 : index
    %10 = vector.load %arg3[%c0_10, %c0_11, %c0_12, %c0_13] : memref<1x32x32x32xf32, #tpu.memory_space<vmem>>, vector<1x32x32x32xf32>
    %11 = vector.shape_cast %10 : vector<1x32x32x32xf32> to vector<32x32x32xf32>
    %cst_14 = arith.constant dense<0.000000e+00> : vector<32x32xf32>
    %12 = vector.multi_reduction <add>, %11, %cst_14 [0] : vector<32x32x32xf32> to vector<32x32xf32>
    %13 = arith.addf %9, %12 : vector<32x32xf32>
    %c0_15 = arith.constant 0 : index
    %c0_16 = arith.constant 0 : index
    %14 = vector.load %arg7[%c0_15, %c0_16] : memref<32x32xf32, #tpu.memory_space<vmem>>, vector<32x32xf32>
    tpu.vector_store %arg7[%c0_15, %c0_16], %13 {strides = array<i32>} : memref<32x32xf32, #tpu.memory_space<vmem>>, vector<32x32xf32>,
    %c0_i32_17 = arith.constant 0 : i32
    %15 = arith.cmpi eq, %arg1, %c0_i32_17 : i32
    %16 = arith.extui %15 : i1 to i32
    %c0_i32_18 = arith.constant 0 : i32
    %17 = arith.cmpi ne, %16, %c0_i32_18 : i32
    scf.if %17 {
      %c0_19 = arith.constant 0 : index
      %c0_20 = arith.constant 0 : index
      %18 = vector.load %arg6[%c0_19, %c0_20] : memref<32x32xf32, #tpu.memory_space<vmem>>, vector<32x32xf32>
      %19 = vector.shape_cast %18 : vector<32x32xf32> to vector<1x32x32xf32>
      %cst_21 = arith.constant dense<0.000000e+00> : vector<1xf32>
      %20 = vector.multi_reduction <add>, %19, %cst_21 [1, 2] : vector<1x32x32xf32> to vector<1xf32>
      %21 = vector.shape_cast %20 : vector<1xf32> to vector<1x1x1xf32>
      %22 = vector.extract %21[0, 0, 0] : f32 from vector<1x1x1xf32>
      %23 = arith.index_cast %arg0 : i32 to index
      %24 = memref.load %arg4[%23] : memref<32xf32, #tpu.memory_space<smem>>
      memref.store %22, %arg4[%23] : memref<32xf32, #tpu.memory_space<smem>>
      %c0_22 = arith.constant 0 : index
      %c0_23 = arith.constant 0 : index
      %25 = vector.load %arg7[%c0_22, %c0_23] : memref<32x32xf32, #tpu.memory_space<vmem>>, vector<32x32xf32>
      %26 = vector.shape_cast %25 : vector<32x32xf32> to vector<1x32x32xf32>
      %cst_24 = arith.constant dense<0.000000e+00> : vector<1xf32>
      %27 = vector.multi_reduction <add>, %26, %cst_24 [1, 2] : vector<1x32x32xf32> to vector<1xf32>
      %28 = vector.shape_cast %27 : vector<1xf32> to vector<1x1x1xf32>
      %29 = vector.extract %28[0, 0, 0] : f32 from vector<1x1x1xf32>
      %30 = arith.index_cast %arg0 : i32 to index
      %31 = memref.load %arg5[%30] : memref<32xf32, #tpu.memory_space<smem>>
      memref.store %29, %arg5[%30] : memref<32xf32, #tpu.memory_space<smem>>
    } else {
    }
    return
  }
  func.func @transform_0(%arg0: i32, %arg1: i32) -> (i32, i32, i32, i32) {
    %c0_i32 = arith.constant 0 : i32
    %c0_i32_0 = arith.constant 0 : i32
    %c0_i32_1 = arith.constant 0 : i32
    return %arg0, %arg1, %c0_i32, %c0_i32_0 : i32, i32, i32, i32
  }
  func.func @transform_1(%arg0: i32, %arg1: i32) -> (i32, i32, i32, i32) {
    %c0_i32 = arith.constant 0 : i32
    %c0_i32_0 = arith.constant 0 : i32
    %c0_i32_1 = arith.constant 0 : i32
    return %arg0, %arg1, %c0_i32, %c0_i32_0 : i32, i32, i32, i32
  }
  func.func @transform_2(%arg0: i32, %arg1: i32) -> i32 {
    %c0_i32 = arith.constant 0 : i32
    %c0_i32_0 = arith.constant 0 : i32
    return %c0_i32 : i32
  }
  func.func @transform_3(%arg0: i32, %arg1: i32) -> i32 {
    %c0_i32 = arith.constant 0 : i32
    %c0_i32_0 = arith.constant 0 : i32
    return %c0_i32 : i32
  }
}

module attributes {stable_mosaic.version = 11 : i64} {
  func.func @_fca_psf_kernel(%arg0: i32, %arg1: i32, %arg2: memref<32xf32, #tpu.memory_space<smem>>, %arg3: memref<32xf32, #tpu.memory_space<smem>>, %arg4: memref<1x32x32x32xf32, #tpu.memory_space<vmem>>, %arg5: memref<1x32x32x32xf32, #tpu.memory_space<vmem>>, %arg6: memref<32x32x32xf32, #tpu.memory_space<vmem>>, %arg7: memref<32x32x32xf32, #tpu.memory_space<vmem>>, %arg8: memref<1x32x32x32xf32, #tpu.memory_space<vmem>>, %arg9: memref<1x32x32x32xf32, #tpu.memory_space<vmem>>) attributes {dimension_semantics = [#tpu.dimension_semantics<parallel>, #tpu.dimension_semantics<parallel>], iteration_bounds = array<i64: 1, 32>, scalar_prefetch = 0 : i64, scratch_operands = 0 : i64, tpu.core_type = #tpu.core_type<tc>, window_params = [{transform_indices = @transform_0, window_bounds = array<i64: 32>}, {transform_indices = @transform_1, window_bounds = array<i64: 32>}, {transform_indices = @transform_2, window_bounds = array<i64: 1, 32, 32, 32>}, {transform_indices = @transform_3, window_bounds = array<i64: 1, 32, 32, 32>}, {transform_indices = @transform_4, window_bounds = array<i64: 32, 32, 32>}, {transform_indices = @transform_5, window_bounds = array<i64: 32, 32, 32>}, {transform_indices = @transform_6, window_bounds = array<i64: 1, 32, 32, 32>}, {transform_indices = @transform_7, window_bounds = array<i64: 1, 32, 32, 32>}]} {
    %c0 = arith.constant 0 : index
    %c0_0 = arith.constant 0 : index
    %c0_1 = arith.constant 0 : index
    %c0_2 = arith.constant 0 : index
    %0 = vector.load %arg4[%c0, %c0_0, %c0_1, %c0_2] : memref<1x32x32x32xf32, #tpu.memory_space<vmem>>, vector<1x32x32x32xf32>
    %1 = vector.shape_cast %0 : vector<1x32x32x32xf32> to vector<32x32x32xf32>
    %2 = arith.index_cast %arg1 : i32 to index
    %3 = memref.load %arg2[%2] : memref<32xf32, #tpu.memory_space<smem>>
    %4 = vector.broadcast %3 : f32 to vector<32x32x32xf32>
    %5 = arith.mulf %1, %4 : vector<32x32x32xf32>
    %c0_3 = arith.constant 0 : index
    %c0_4 = arith.constant 0 : index
    %c0_5 = arith.constant 0 : index
    %c0_6 = arith.constant 0 : index
    %6 = vector.load %arg5[%c0_3, %c0_4, %c0_5, %c0_6] : memref<1x32x32x32xf32, #tpu.memory_space<vmem>>, vector<1x32x32x32xf32>
    %7 = vector.shape_cast %6 : vector<1x32x32x32xf32> to vector<32x32x32xf32>
    %8 = arith.index_cast %arg1 : i32 to index
    %9 = memref.load %arg3[%8] : memref<32xf32, #tpu.memory_space<smem>>
    %10 = vector.broadcast %9 : f32 to vector<32x32x32xf32>
    %11 = arith.mulf %7, %10 : vector<32x32x32xf32>
    %c0_7 = arith.constant 0 : index
    %c0_8 = arith.constant 0 : index
    %c0_9 = arith.constant 0 : index
    %12 = vector.load %arg6[%c0_7, %c0_8, %c0_9] : memref<32x32x32xf32, #tpu.memory_space<vmem>>, vector<32x32x32xf32>
    %c0_10 = arith.constant 0 : index
    %c0_11 = arith.constant 0 : index
    %c0_12 = arith.constant 0 : index
    %13 = vector.load %arg7[%c0_10, %c0_11, %c0_12] : memref<32x32x32xf32, #tpu.memory_space<vmem>>, vector<32x32x32xf32>
    %14 = arith.mulf %5, %12 : vector<32x32x32xf32>
    %15 = arith.mulf %11, %13 : vector<32x32x32xf32>
    %16 = arith.subf %14, %15 : vector<32x32x32xf32>
    %c0_13 = arith.constant 0 : index
    %c0_14 = arith.constant 0 : index
    %c0_15 = arith.constant 0 : index
    %c0_16 = arith.constant 0 : index
    %17 = vector.load %arg8[%c0_13, %c0_14, %c0_15, %c0_16] : memref<1x32x32x32xf32, #tpu.memory_space<vmem>>, vector<1x32x32x32xf32>
    %18 = vector.shape_cast %17 : vector<1x32x32x32xf32> to vector<32x32x32xf32>
    %19 = vector.shape_cast %16 : vector<32x32x32xf32> to vector<1x32x32x32xf32>
    tpu.vector_store %arg8[%c0_13, %c0_14, %c0_15, %c0_16], %19 {strides = array<i32>} : memref<1x32x32x32xf32, #tpu.memory_space<vmem>>, vector<1x32x32x32xf32>,
    %20 = arith.mulf %5, %13 : vector<32x32x32xf32>
    %21 = arith.mulf %11, %12 : vector<32x32x32xf32>
    %22 = arith.addf %20, %21 : vector<32x32x32xf32>
    %c0_17 = arith.constant 0 : index
    %c0_18 = arith.constant 0 : index
    %c0_19 = arith.constant 0 : index
    %c0_20 = arith.constant 0 : index
    %23 = vector.load %arg9[%c0_17, %c0_18, %c0_19, %c0_20] : memref<1x32x32x32xf32, #tpu.memory_space<vmem>>, vector<1x32x32x32xf32>
    %24 = vector.shape_cast %23 : vector<1x32x32x32xf32> to vector<32x32x32xf32>
    %25 = vector.shape_cast %22 : vector<32x32x32xf32> to vector<1x32x32x32xf32>
    tpu.vector_store %arg9[%c0_17, %c0_18, %c0_19, %c0_20], %25 {strides = array<i32>} : memref<1x32x32x32xf32, #tpu.memory_space<vmem>>, vector<1x32x32x32xf32>,
    return
  }
  func.func @transform_0(%arg0: i32, %arg1: i32) -> i32 {
    %c0_i32 = arith.constant 0 : i32
    %c0_i32_0 = arith.constant 0 : i32
    return %c0_i32 : i32
  }
  func.func @transform_1(%arg0: i32, %arg1: i32) -> i32 {
    %c0_i32 = arith.constant 0 : i32
    %c0_i32_0 = arith.constant 0 : i32
    return %c0_i32 : i32
  }
  func.func @transform_2(%arg0: i32, %arg1: i32) -> (i32, i32, i32, i32) {
    %c0_i32 = arith.constant 0 : i32
    %c0_i32_0 = arith.constant 0 : i32
    %c0_i32_1 = arith.constant 0 : i32
    return %arg1, %arg0, %c0_i32, %c0_i32_0 : i32, i32, i32, i32
  }
  func.func @transform_3(%arg0: i32, %arg1: i32) -> (i32, i32, i32, i32) {
    %c0_i32 = arith.constant 0 : i32
    %c0_i32_0 = arith.constant 0 : i32
    %c0_i32_1 = arith.constant 0 : i32
    return %arg1, %arg0, %c0_i32, %c0_i32_0 : i32, i32, i32, i32
  }
  func.func @transform_4(%arg0: i32, %arg1: i32) -> (i32, i32, i32) {
    %c0_i32 = arith.constant 0 : i32
    %c0_i32_0 = arith.constant 0 : i32
    %c0_i32_1 = arith.constant 0 : i32
    return %arg0, %c0_i32, %c0_i32_0 : i32, i32, i32
  }
  func.func @transform_5(%arg0: i32, %arg1: i32) -> (i32, i32, i32) {
    %c0_i32 = arith.constant 0 : i32
    %c0_i32_0 = arith.constant 0 : i32
    %c0_i32_1 = arith.constant 0 : i32
    return %arg0, %c0_i32, %c0_i32_0 : i32, i32, i32
  }
  func.func @transform_6(%arg0: i32, %arg1: i32) -> (i32, i32, i32, i32) {
    %c0_i32 = arith.constant 0 : i32
    %c0_i32_0 = arith.constant 0 : i32
    %c0_i32_1 = arith.constant 0 : i32
    return %arg1, %arg0, %c0_i32, %c0_i32_0 : i32, i32, i32, i32
  }
  func.func @transform_7(%arg0: i32, %arg1: i32) -> (i32, i32, i32, i32) {
    %c0_i32 = arith.constant 0 : i32
    %c0_i32_0 = arith.constant 0 : i32
    %c0_i32_1 = arith.constant 0 : i32
    return %arg1, %arg0, %c0_i32, %c0_i32_0 : i32, i32, i32, i32
  }
}

module attributes {stable_mosaic.version = 11 : i64} {
  func.func @_mag_resample_kernel(%arg0: i32, %arg1: i32, %arg2: memref<16x16xf32, #tpu.memory_space<vmem>>, %arg3: memref<1x16x256xf32, #tpu.memory_space<vmem>>, %arg4: memref<1x16x256xf32, #tpu.memory_space<vmem>>, %arg5: memref<1x16x256xf32, #tpu.memory_space<vmem>>, %arg6: memref<1x16x256xf32, #tpu.memory_space<vmem>>, %arg7: memref<1x16x256xf32, #tpu.memory_space<vmem>>) attributes {dimension_semantics = [#tpu.dimension_semantics<parallel>, #tpu.dimension_semantics<parallel>], iteration_bounds = array<i64: 16, 1>, scalar_prefetch = 0 : i64, scratch_operands = 0 : i64, tpu.core_type = #tpu.core_type<tc>, window_params = [{pipeline_mode = #tpu.pipeline_mode<synchronous>, transform_indices = @transform_0, window_bounds = array<i64: 16, 16>}, {transform_indices = @transform_1, window_bounds = array<i64: 1, 16, 256>}, {transform_indices = @transform_2, window_bounds = array<i64: 1, 16, 256>}, {transform_indices = @transform_3, window_bounds = array<i64: 1, 16, 256>}, {transform_indices = @transform_4, window_bounds = array<i64: 1, 16, 256>}, {transform_indices = @transform_5, window_bounds = array<i64: 1, 16, 256>}]} {
    %c0 = arith.constant 0 : index
    %c0_0 = arith.constant 0 : index
    %c0_1 = arith.constant 0 : index
    %0 = vector.load %arg3[%c0, %c0_0, %c0_1] : memref<1x16x256xf32, #tpu.memory_space<vmem>>, vector<1x16x256xf32>
    %1 = vector.shape_cast %0 : vector<1x16x256xf32> to vector<16x256xf32>
    %c0_2 = arith.constant 0 : index
    %c0_3 = arith.constant 0 : index
    %c0_4 = arith.constant 0 : index
    %2 = vector.load %arg4[%c0_2, %c0_3, %c0_4] : memref<1x16x256xf32, #tpu.memory_space<vmem>>, vector<1x16x256xf32>
    %3 = vector.shape_cast %2 : vector<1x16x256xf32> to vector<16x256xf32>
    %c0_5 = arith.constant 0 : index
    %c0_6 = arith.constant 0 : index
    %c0_7 = arith.constant 0 : index
    %4 = vector.load %arg5[%c0_5, %c0_6, %c0_7] : memref<1x16x256xf32, #tpu.memory_space<vmem>>, vector<1x16x256xf32>
    %5 = vector.shape_cast %4 : vector<1x16x256xf32> to vector<16x256xf32>
    %c0_8 = arith.constant 0 : index
    %c0_9 = arith.constant 0 : index
    %c0_10 = arith.constant 0 : index
    %6 = vector.load %arg6[%c0_8, %c0_9, %c0_10] : memref<1x16x256xf32, #tpu.memory_space<vmem>>, vector<1x16x256xf32>
    %7 = vector.shape_cast %6 : vector<1x16x256xf32> to vector<16x256xf32>
    %8 = arith.mulf %1, %1 : vector<16x256xf32>
    %9 = arith.mulf %3, %3 : vector<16x256xf32>
    %10 = arith.subf %8, %9 : vector<16x256xf32>
    %11 = arith.mulf %5, %5 : vector<16x256xf32>
    %12 = arith.addf %10, %11 : vector<16x256xf32>
    %13 = arith.mulf %7, %7 : vector<16x256xf32>
    %14 = arith.subf %12, %13 : vector<16x256xf32>
    %15 = arith.mulf %1, %3 : vector<16x256xf32>
    %16 = arith.mulf %5, %7 : vector<16x256xf32>
    %17 = arith.addf %15, %16 : vector<16x256xf32>
    %cst = arith.constant 2.000000e+00 : f32
    %18 = vector.broadcast %cst : f32 to vector<16x256xf32>
    %19 = arith.mulf %18, %17 : vector<16x256xf32>
    %20 = arith.mulf %14, %14 : vector<16x256xf32>
    %21 = arith.mulf %19, %19 : vector<16x256xf32>
    %22 = arith.addf %20, %21 : vector<16x256xf32>
    %23 = math.sqrt %22 : vector<16x256xf32>
    %24 = arith.addf %23, %14 : vector<16x256xf32>
    %cst_11 = arith.constant 5.000000e-01 : f32
    %25 = vector.broadcast %cst_11 : f32 to vector<16x256xf32>
    %26 = arith.mulf %24, %25 : vector<16x256xf32>
    %cst_12 = arith.constant 0.000000e+00 : f32
    %27 = vector.broadcast %cst_12 : f32 to vector<16x256xf32>
    %28 = arith.maximumf %26, %27 : vector<16x256xf32>
    %29 = math.sqrt %28 : vector<16x256xf32>
    %c0_13 = arith.constant 0 : index
    %c0_14 = arith.constant 0 : index
    %30 = vector.load %arg2[%c0_13, %c0_14] : memref<16x16xf32, #tpu.memory_space<vmem>>, vector<16x16xf32>
    %cst_15 = arith.constant dense<0.000000e+00> : vector<16x256xf32>
    %31 = tpu.matmul %30, %29, %cst_15 {dimension_numbers = #tpu.dot_dimension_numbers<[1], [0], [0], [1], [0, 0, 1, 1], [], []>} : vector<16x16xf32>, vector<16x256xf32>, vector<16x256xf32> -> vector<16x256xf32>
    %c0_16 = arith.constant 0 : index
    %c0_17 = arith.constant 0 : index
    %c0_18 = arith.constant 0 : index
    %32 = vector.load %arg7[%c0_16, %c0_17, %c0_18] : memref<1x16x256xf32, #tpu.memory_space<vmem>>, vector<1x16x256xf32>
    %33 = vector.shape_cast %32 : vector<1x16x256xf32> to vector<16x256xf32>
    %34 = vector.shape_cast %31 : vector<16x256xf32> to vector<1x16x256xf32>
    tpu.vector_store %arg7[%c0_16, %c0_17, %c0_18], %34 {strides = array<i32>} : memref<1x16x256xf32, #tpu.memory_space<vmem>>, vector<1x16x256xf32>,
    return
  }
  func.func @transform_0(%arg0: i32, %arg1: i32) -> (i32, i32) {
    %c0_i32 = arith.constant 0 : i32
    %c0_i32_0 = arith.constant 0 : i32
    %c0_i32_1 = arith.constant 0 : i32
    return %c0_i32, %c0_i32_0 : i32, i32
  }
  func.func @transform_1(%arg0: i32, %arg1: i32) -> (i32, i32, i32) {
    %c0_i32 = arith.constant 0 : i32
    %c0_i32_0 = arith.constant 0 : i32
    return %arg0, %c0_i32, %arg1 : i32, i32, i32
  }
  func.func @transform_2(%arg0: i32, %arg1: i32) -> (i32, i32, i32) {
    %c0_i32 = arith.constant 0 : i32
    %c0_i32_0 = arith.constant 0 : i32
    return %arg0, %c0_i32, %arg1 : i32, i32, i32
  }
  func.func @transform_3(%arg0: i32, %arg1: i32) -> (i32, i32, i32) {
    %c16_i32 = arith.constant 16 : i32
    %0 = arith.addi %arg0, %c16_i32 : i32
    %c0_i32 = arith.constant 0 : i32
    %c0_i32_0 = arith.constant 0 : i32
    return %0, %c0_i32, %arg1 : i32, i32, i32
  }
  func.func @transform_4(%arg0: i32, %arg1: i32) -> (i32, i32, i32) {
    %c16_i32 = arith.constant 16 : i32
    %0 = arith.addi %arg0, %c16_i32 : i32
    %c0_i32 = arith.constant 0 : i32
    %c0_i32_0 = arith.constant 0 : i32
    return %0, %c0_i32, %arg1 : i32, i32, i32
  }
  func.func @transform_5(%arg0: i32, %arg1: i32) -> (i32, i32, i32) {
    %c0_i32 = arith.constant 0 : i32
    %c0_i32_0 = arith.constant 0 : i32
    return %arg0, %c0_i32, %arg1 : i32, i32, i32
  }
}

</mosaic_0001>

<llo_original>
// kernel: _lambda_.4
$region0: #{_lambda_.4}
  #allocation0 [shape = 'u32[]', space=smem, size = 0x4, offset = 0x4, fixed_abs, tag = 'smem constant byte address 0x4 - core index']
  #allocation1 [shape = 'u32[144,128]{1,0:T(1,128)}', space=vmem, size = 0x12000, scoped, tag = 'internal scratch']
  %s0 = inlined_call_operand.hbm [shape: f32[2,16,16], index: 0, kind: input, shape index: {}]
  %s1 = inlined_call_operand.vmem [shape: f32[16,16,256], index: 1, kind: input, shape index: {}]
  %s2 = inlined_call_operand.vmem [shape: f32[32,16,256], index: 2, kind: output, shape index: {}]
  %s3 = sld [smem:[#allocation0]]
  $region45: #{_lambda_.4} parent=0
    _
  %s5 = ssub.s32 1, %s3
  %s6 = scalar_select 0, %s5, %s3
  $region1: #{_lambda_.4} parent=0
    #allocation2 [shape = 'u8[16384]{0}', space=vmem, size = 0x4000, scoped, tag = 'input window, operand 0']
    #allocation3 [shape = 's32[2]{0}', space=sflag, size = 0x8, scoped, tag = 'scoped memory for _lambda_.4']
    %7 = vsyncpa [#allocation3], 0
    %s8 = scalar_lea.sflag [#allocation3], 1
    %9 = vsyncpa %s8, 0
    loop: start=0, step=1, limit=34
    $region2: #{_lambda_.4} parent=1 // loop_pre_header
      _
    $region3: #{_lambda_.4} parent=1 // loop_header
      %s11 = sphi 0, %s15
      %p12 = scmp.ge.s32.totalorder %s11, 34
      %s18 = sphi 0, %s37
      %s19 = sphi 0, %s33
      %s20 = sphi 0, %s29
      %s21 = sphi 0, %s18
      %s22 = sphi 0, %s19
      %s23 = sphi 0, %s20
      %s24 = sphi 0, %s21
      %s25 = sphi 0, %s22
      %s26 = sphi 0, %s23
      %s40 = sphi 0, %s42
      %s43 = sphi 0, %s40
      %s44 = sphi 0, %s43
      %s60 = sphi 0, %s44
      %s68 = sphi 0, %s70
      %s71 = sphi 0, %s68
      %s72 = sphi 0, %s71
      %s88 = sphi 0, %s72
      %s100 = sphi 0, %s102
      %s103 = sphi 0, %s100
      %s104 = sphi 0, %s103
      %s120 = sphi 0, %s104
    $region4: #{_lambda_.4} parent=1 // loop_header_branch
      %14 = sbr.rel (%p12) target = $region8
    $region5: #{_lambda_.4} parent=1 // loop_body
      %s16 = ssub.s32 %s11, 1
      %s17 = ssub.s32 %s11, 2
      %s27 = sadd.s32 1, %s20
      %p28 = scmp.ge.s32.totalorder %s27, 1
      %s29 = scalar_select %p28, 0, %s27
      %s30 = sadd.s32 1, %s19
      %s31 = scalar_select %p28, %s30, %s19
      %p32 = scmp.ge.s32.totalorder %s31, 16
      %s33 = scalar_select %p32, 0, %s31
      %s34 = sadd.s32 1, %s18
      %s35 = scalar_select %p32, %s34, %s18
      %p36 = scmp.ge.s32.totalorder %s35, 2
      %s37 = scalar_select %p36, 0, %s35
      %s38 = ssub.s32 %s18, %s37
      %p39 = scmp.eq.s32.totalorder %s38, 0
      %s41 = sadd.s32 %s40, 1
      %s42 = scalar_select %p39, %s40, %s41
      %p45 = pneg %p39
      %p46 = scmp.eq.s32.totalorder %s11, 31
      %p47 = por %p45, %p46
      %p48 = scmp.ne.s32.totalorder %s40, %s43
      %p49 = scmp.eq.s32.totalorder %s11, 0
      %p50 = por %p48, %p49
      %p51 = scmp.ne.s32.totalorder %s40, %s43
      %p52 = scmp.eq.s32.totalorder %s16, 31
      %p53 = por %p51, %p52
      %p54 = scmp.ne.s32.totalorder %s43, %s44
      %p55 = scmp.eq.s32.totalorder %s16, 0
      %p56 = por %p54, %p55
      %p57 = scmp.ne.s32.totalorder %s43, %s44
      %p58 = scmp.eq.s32.totalorder %s17, 31
      %p59 = por %p57, %p58
      %p61 = scmp.ne.s32.totalorder %s44, %s60
      %p62 = scmp.eq.s32.totalorder %s17, 0
      %p63 = por %p61, %p62
      %s64 = ssub.s32 %s19, %s33
      %s65 = ssub.s32 %s20, %s29
      %s66 = sor.u32 %s64, %s65
      %p67 = scmp.eq.s32.totalorder %s66, 0
      %s69 = sadd.s32 %s68, 1
      %s70 = scalar_select %p67, %s68, %s69
      %p73 = pneg %p67
      %p74 = scmp.eq.s32.totalorder %s11, 31
      %p75 = por %p73, %p74
      %p76 = scmp.ne.s32.totalorder %s68, %s71
      %p77 = scmp.eq.s32.totalorder %s11, 0
      %p78 = por %p76, %p77
      %p79 = scmp.ne.s32.totalorder %s68, %s71
      %p80 = scmp.eq.s32.totalorder %s16, 31
      %p81 = por %p79, %p80
      %p82 = scmp.ne.s32.totalorder %s71, %s72
      %p83 = scmp.eq.s32.totalorder %s16, 0
      %p84 = por %p82, %p83
      %p85 = scmp.ne.s32.totalorder %s71, %s72
      %p86 = scmp.eq.s32.totalorder %s17, 31
      %p87 = por %p85, %p86
      %p89 = scmp.ne.s32.totalorder %s72, %s88
      %p90 = scmp.eq.s32.totalorder %s17, 0
      %p91 = por %p89, %p90
      %s92 = smul.u32 %s18, 16
      %s93 = sadd.s32 %s92, %s19
      %s94 = smul.u32 %s37, 16
      %s95 = sadd.s32 %s94, %s33
      %s96 = ssub.s32 %s93, %s95
      %s97 = ssub.s32 %s20, %s29
      %s98 = sor.u32 %s96, %s97
      %p99 = scmp.eq.s32.totalorder %s98, 0
      %s101 = sadd.s32 %s100, 1
      %s102 = scalar_select %p99, %s100, %s101
      %p105 = pneg %p99
      %p106 = scmp.eq.s32.totalorder %s11, 31
      %p107 = por %p105, %p106
      %p108 = scmp.ne.s32.totalorder %s100, %s103
      %p109 = scmp.eq.s32.totalorder %s11, 0
      %p110 = por %p108, %p109
      %p111 = scmp.ne.s32.totalorder %s100, %s103
      %p112 = scmp.eq.s32.totalorder %s16, 31
      %p113 = por %p111, %p112
      %p114 = scmp.ne.s32.totalorder %s103, %s104
      %p115 = scmp.eq.s32.totalorder %s16, 0
      %p116 = por %p114, %p115
      %p117 = scmp.ne.s32.totalorder %s103, %s104
      %p118 = scmp.eq.s32.totalorder %s17, 31
      %p119 = por %p117, %p118
      %p121 = scmp.ne.s32.totalorder %s104, %s120
      %p122 = scmp.eq.s32.totalorder %s17, 0
      %p123 = por %p121, %p122
      %p124 = scmp.le.s32.totalorder 1, %s11
      %p125 = scmp.lt.s32.totalorder %s11, 33
      %p126 = pnand %p124, %p125
      %p127 = pneg %p126
      // Predicated region
      $region9: #{_lambda_.4} parent=5 // pred_check
        _
      $region10: #{_lambda_.4} parent=5 // pred_check_branch
        %129 = sbr.rel (%p126) target = $region12
      $region11: #{_lambda_.4} parent=5 // pred_region
        %s130 = ssub.s32 %s11, 1
      $region12: #{_lambda_.4} parent=5 // pred_fallthru
        _
      %p131 = scmp.lt.s32.totalorder %s11, 32
      // Predicated region
      $region13: #{_lambda_.4} parent=5 // pred_check
        %p132 = pneg %p131
      $region14: #{_lambda_.4} parent=5 // pred_check_branch
        %134 = sbr.rel (%p132) target = $region16
      $region15: #{_lambda_.4} parent=5 // pred_region
        // Predicated region
        $region17: #{_lambda_.4} parent=15 // pred_check
          %p135 = pneg %p50
        $region18: #{_lambda_.4} parent=15 // pred_check_branch
          %137 = sbr.rel (%p135) target = $region20
        $region19: #{_lambda_.4} parent=15 // pred_region
          %s138 = sand.u32 %s40, 1
          %s139 = scalar_lea.sflag [#allocation3], %s138
          %s140 = sand.u32 %s40, 1
          %s141 = smul.addr %s140, 16
          %s142 = scalar_lea.vmem [#allocation2], %s141
          %s144 = ssub.s32 256, 256
          %145 = vsyncadd %s139, %s144
          %s146 = smul.addr %s18, 2
          %s147 = smul.addr %s146, 128
          %s148 = scalar_lea.hbm %s0, %s147
          %s149 = sshll.u32 %s142, 4
          %s150 = int_to_ptr.vmem [resolvable:$true] %s149
          %155 = dma.hbm_to_vmem [thread:$0]  %s148, 256, %s150, %s139, 128, 128, 8
        $region20: #{_lambda_.4} parent=15 // pred_fallthru
          _
        // Predicated region
        $region21: #{_lambda_.4} parent=15 // pred_check
          %p156 = pneg %p78
        $region22: #{_lambda_.4} parent=15 // pred_check_branch
          %158 = sbr.rel (%p156) target = $region24
        $region23: #{_lambda_.4} parent=15 // pred_region
          %s159 = smul.u32 2, %s20
          %p160 = scmp.lt.s32.totalorder %s19, 15
          %s161 = scalar_select %p160, %s19, 15
          %p162 = scmp.lt.s32.totalorder %s159, 1
          %s163 = scalar_select %p162, %s159, 1
          %s164 = smul.addr %s161, 4
          %s165 = sadd.s32 %s163, %s164
          %s166 = smul.addr %s165, 8
          %s167 = scalar_lea.vmem %s1, %s166
          %s168 = smul.u32 2, %s20
        $region24: #{_lambda_.4} parent=15 // pred_fallthru
          _
      $region16: #{_lambda_.4} parent=5 // pred_fallthru
        _
      %p169 = scmp.le.s32.totalorder 1, %s11
      %p170 = scmp.lt.s32.totalorder %s11, 33
      %p171 = pnand %p169, %p170
      %p172 = pneg %p171
      // Predicated region
      $region25: #{_lambda_.4} parent=5 // pred_check
        _
      $region26: #{_lambda_.4} parent=5 // pred_check_branch
        %174 = sbr.rel (%p171) target = $region28
      $region27: #{_lambda_.4} parent=5 // pred_region
        %s175 = ssub.s32 %s11, 1
        %s176 = sand.u32 %s43, 1
        %s177 = scalar_lea.sflag [#allocation3], %s176
        %s178 = sand.u32 %s43, 1
        %s179 = smul.addr %s178, 16
        %s180 = scalar_lea.vmem [#allocation2], %s179
        // Predicated region
        $region29: #{_lambda_.4} parent=27 // pred_check
          %p181 = pneg %p56
        $region30: #{_lambda_.4} parent=27 // pred_check_branch
          %183 = sbr.rel (%p181) target = $region32
        $region31: #{_lambda_.4} parent=27 // pred_region
          %184 = dma.done %s177, 256
        $region32: #{_lambda_.4} parent=27 // pred_fallthru
          _
        %s185 = sand.u32 %s43, 1
        %s186 = scalar_lea.sflag [#allocation3], %s185
        %s187 = sand.u32 %s43, 1
        %s188 = smul.addr %s187, 16
        %s189 = scalar_lea.vmem [#allocation2], %s188
        %p190 = pneg %p56
        %p191 = pneg %p53
        %s192 = smul.u32 2, %s23
        %p193 = scmp.lt.s32.totalorder %s22, 15
        %s194 = scalar_select %p193, %s22, 15
        %p195 = scmp.lt.s32.totalorder %s192, 1
        %s196 = scalar_select %p195, %s192, 1
        %s197 = smul.addr %s194, 4
        %s198 = sadd.s32 %s196, %s197
        %s199 = smul.addr %s198, 8
        %s200 = scalar_lea.vmem %s1, %s199
        %p201 = pneg %p84
        %p202 = pneg %p81
        %p203 = pneg %p116
        %p204 = pneg %p113
        %s205 = smul.u32 %s21, 16
        %s206 = sadd.s32 %s205, %s22
        %s207 = smul.u32 2, %s23
        %p208 = scmp.lt.s32.totalorder %s206, 31
        %s209 = scalar_select %p208, %s206, 31
        %p210 = scmp.lt.s32.totalorder %s207, 1
        %s211 = scalar_select %p210, %s207, 1
        %s212 = smul.addr %s209, 4
        %s213 = sadd.s32 %s211, %s212
        %s214 = smul.addr %s213, 8
        %s215 = scalar_lea.vmem %s2, %s214
        %s216 = smul.u32 2, %s23
        %p217 = scmp.lt.s32.totalorder %s22, 15
        %s218 = scalar_select %p217, %s22, 15
        %p219 = scmp.lt.s32.totalorder %s216, 1
        %s220 = scalar_select %p219, %s216, 1
        %s221 = smul.addr %s218, 4
        %s222 = sadd.s32 %s220, %s221
        %s223 = smul.addr %s222, 8
        %s224 = scalar_lea.vmem %s1, %s223
        %s225 = smul.u32 2, %s23
        %s226 = smul.u32 %s21, 16
        %s227 = sadd.s32 %s226, %s22
        %s228 = smul.u32 2, %s23
        %p229 = scmp.lt.s32.totalorder %s227, 31
        %s230 = scalar_select %p229, %s227, 31
        %p231 = scmp.lt.s32.totalorder %s228, 1
        %s232 = scalar_select %p231, %s228, 1
        %s233 = smul.addr %s230, 4
        %s234 = sadd.s32 %s232, %s233
        %s235 = smul.addr %s234, 8
        %s236 = scalar_lea.vmem %s2, %s235
        %s237 = smul.u32 %s21, 16
        %s238 = sadd.s32 %s237, %s22
        %s239 = smul.u32 2, %s23
        %v240 = vld [vmem:[%s180] sm:$0xff]
        %v241 = vld [vmem:[%s180 + $0x8] sm:$0xff]
        %v242 = vld [vmem:[%s224] sm:$0xff]
        %v243 = vld [vmem:[%s224 + $0x8] sm:$0xff]
        %v244 = vld [vmem:[%s224 + $0x10] sm:$0xff]
        %v245 = vld [vmem:[%s224 + $0x18] sm:$0xff]
        %vm246 = vcmask 130048
        %v248 = vsel %vm246, %v240, 0
        %v251 = vsel %vm246, %v241, 0
        %253 = vmatprep.subr.mxu0 %v243
        %254 = vmatpush1.msra.mxu0 %v242
        %255 = vmatprep.subr.mxu0 %v245
        %256 = vmatpush1.msra.mxu0 %v244
        %257 = vmatprep.subr.mxu0 0.0
        %258 = vmatpush1.msra.mxu0 0.0
        %259 = vmatprep.subr.mxu0 0.0
        %260 = vmatpush1.msra.mxu0 0.0
        %261 = vmatprep.subr.mxu0 0.0
        %262 = vmatpush1.msra.mxu0 0.0
        %263 = vmatprep.subr.mxu0 0.0
        %264 = vmatpush1.msra.mxu0 0.0
        %265 = vmatprep.subr.mxu0 0.0
        %266 = vmatpush1.msra.mxu0 0.0
        %267 = vmatprep.subr.mxu0 0.0
        %268 = vmatpush1.msra.mxu0 0.0
        %269 = vmatprep.subr.mxu0 0.0
        %270 = vmatpush1.msra.mxu0 0.0
        %271 = vmatprep.subr.mxu0 0.0
        %272 = vmatpush1.msra.mxu0 0.0
        %273 = vmatprep.subr.mxu0 0.0
        %274 = vmatpush1.msra.mxu0 0.0
        %275 = vmatprep.subr.mxu0 0.0
        %276 = vmatpush1.msra.mxu0 0.0
        %277 = vmatprep.subr.mxu0 0.0
        %278 = vmatpush1.msra.mxu0 0.0
        %279 = vmatprep.subr.mxu0 0.0
        %280 = vmatpush1.msra.mxu0 0.0
        %281 = vmatprep.subr.mxu0 0.0
        %282 = vmatpush1.msra.mxu0 0.0
        %283 = vmatprep.subr.mxu0 0.0
        %284 = vmatpush1.msra.mxu0 0.0
        %285 = vmatprep.subr.mxu0 0.0
        %286 = vmatpush1.msra.mxu0 0.0
        %287 = vmatprep.subr.mxu0 0.0
        %288 = vmatpush1.msra.mxu0 0.0
        %289 = vmatprep.subr.mxu0 0.0
        %290 = vmatpush1.msra.mxu0 0.0
        %291 = vmatprep.subr.mxu0 0.0
        %292 = vmatpush1.msra.mxu0 0.0
        %293 = vmatprep.subr.mxu0 0.0
        %294 = vmatpush1.msra.mxu0 0.0
        %295 = vmatprep.subr.mxu0 0.0
        %296 = vmatpush1.msra.mxu0 0.0
        %297 = vmatprep.subr.mxu0 0.0
        %298 = vmatpush1.msra.mxu0 0.0
        %299 = vmatprep.subr.mxu0 0.0
        %300 = vmatpush1.msra.mxu0 0.0
        %301 = vmatprep.subr.mxu0 0.0
        %302 = vmatpush1.msra.mxu0 0.0
        %303 = vmatprep.subr.mxu0 0.0
        %304 = vmatpush1.msra.mxu0 0.0
        %305 = vmatprep.subr.mxu0 0.0
        %306 = vmatpush1.msra.mxu0 0.0
        %307 = vmatprep.subr.mxu0 0.0
        %308 = vmatpush1.msra.mxu0 0.0
        %309 = vmatprep.subr.mxu0 0.0
        %310 = vmatpush1.msra.mxu0 0.0
        %311 = vmatprep.subr.mxu0 0.0
        %312 = vmatpush1.msra.mxu0 0.0
        %313 = vmatprep.subr.mxu0 0.0
        %314 = vmatpush1.msra.mxu0 0.0
        %315 = vmatprep.subr.mxu0 0.0
        %316 = vmatpush1.msra.mxu0 0.0
        %317 = vmatprep.mubr.f32.mxu0 0.0
        %318 = vmatmul.mubr.f32.gmra.mrb[0].mxu0 %v248
        %v319 = vpop.f32.mrb[0].mxu0
        %v320 = vadd.f32 0.0, %v319
        %v321 = vpop.f32.mrb[0].mxu0
        %v322 = vadd.f32 0.0, %v321
        %323 = vmatprep.mubr.f32.mxu0 0.0
        %324 = vmatmul.mubr.f32.gmra.mrb[0].mxu0 %v251
        %v325 = vpop.f32.mrb[0].mxu0
        %v326 = vadd.f32 0.0, %v325
        %v327 = vpop.f32.mrb[0].mxu0
        %v328 = vadd.f32 0.0, %v327
        %329 = vdwg.mxu0
        %330 = vst [vmem:[%s236] sm:$0xff] %v320
        %331 = vst [vmem:[%s236 + $0x8] sm:$0xff] %v322
        %332 = vst [vmem:[%s236 + $0x10] sm:$0xff] %v326
        %333 = vst [vmem:[%s236 + $0x18] sm:$0xff] %v328
        %s334 = smul.u32 %s21, 16
        %s335 = sadd.s32 %s334, %s22
        %s336 = smul.u32 2, %s23
        %p337 = scmp.lt.s32.totalorder %s335, 31
        %s338 = scalar_select %p337, %s335, 31
        %p339 = scmp.lt.s32.totalorder %s336, 1
        %s340 = scalar_select %p339, %s336, 1
        %s341 = smul.addr %s338, 4
        %s342 = sadd.s32 %s340, %s341
        %s343 = smul.addr %s342, 8
        %s344 = scalar_lea.vmem %s2, %s343
        // Predicated region
        $region33: #{_lambda_.4} parent=27 // pred_check
          %p345 = pneg %p113
        $region34: #{_lambda_.4} parent=27 // pred_check_branch
          %347 = sbr.rel (%p345) target = $region36
        $region35: #{_lambda_.4} parent=27 // pred_region
          %s348 = smul.u32 %s21, 16
          %s349 = sadd.s32 %s348, %s22
          %s350 = smul.u32 2, %s23
        $region36: #{_lambda_.4} parent=27 // pred_fallthru
          _
      $region28: #{_lambda_.4} parent=5 // pred_fallthru
        _
      %p351 = scmp.le.s32.totalorder 2, %s11
      // Predicated region
      $region37: #{_lambda_.4} parent=5 // pred_check
        %p352 = pneg %p351
      $region38: #{_lambda_.4} parent=5 // pred_check_branch
        %354 = sbr.rel (%p352) target = $region40
      $region39: #{_lambda_.4} parent=5 // pred_region
        %s355 = ssub.s32 %s11, 2
        // Predicated region
        $region41: #{_lambda_.4} parent=39 // pred_check
          %p356 = pneg %p119
        $region42: #{_lambda_.4} parent=39 // pred_check_branch
          %358 = sbr.rel (%p356) target = $region44
        $region43: #{_lambda_.4} parent=39 // pred_region
          %s359 = smul.u32 %s24, 16
          %s360 = sadd.s32 %s359, %s25
          %s361 = smul.u32 2, %s26
          %p362 = scmp.lt.s32.totalorder %s360, 31
          %s363 = scalar_select %p362, %s360, 31
          %p364 = scmp.lt.s32.totalorder %s361, 1
          %s365 = scalar_select %p364, %s361, 1
          %s366 = smul.addr %s363, 4
          %s367 = sadd.s32 %s365, %s366
          %s368 = smul.addr %s367, 8
          %s369 = scalar_lea.vmem %s2, %s368
        $region44: #{_lambda_.4} parent=39 // pred_fallthru
          _
      $region40: #{_lambda_.4} parent=5 // pred_fallthru
        _
    $region6: #{_lambda_.4} parent=1 // loop_footer
      %s15 = sadd.s32 1, %s11
    $region7: #{_lambda_.4} parent=1 // loop_footer_branch
      %10 = sbr.rel target = $region3
    $region8: #{_lambda_.4} parent=1 // loop_exit
      _
    %370 = vsyncpa [#allocation3], 1
    %s371 = scalar_lea.sflag [#allocation3], 1
    %372 = vsyncpa %s371, 1

// kernel: _lambda_.5
$region0: #{_lambda_.5}
  #allocation0 [shape = 'u32[]', space=smem, size = 0x4, offset = 0x4, fixed_abs, tag = 'smem constant byte address 0x4 - core index']
  #allocation1 [shape = 'u32[144,128]{1,0:T(1,128)}', space=vmem, size = 0x12000, scoped, tag = 'internal scratch']
  #allocation2 [shape = 'f32[32,32]{1,0:T(8,128)}', space=vmem, size = 0x4000, scoped, tag = 'scratch operand']
  #allocation3 [shape = 'f32[32,32]{1,0:T(8,128)}', space=vmem, size = 0x4000, scoped, tag = 'scratch operand']
  %s0 = inlined_call_operand.hbm [shape: f32[32,32,32,32], index: 0, kind: input, shape index: {}]
  %s1 = inlined_call_operand.vmem [shape: f32[32,32,32,32], index: 1, kind: input, shape index: {}]
  %s2 = inlined_call_operand.hbm [shape: f32[32], index: 2, kind: output, shape index: {0}]
  %s3 = inlined_call_operand.hbm [shape: f32[32], index: 3, kind: output, shape index: {1}]
  %4 = xla_tuple %s2, %s3
  %s5 = sld [smem:[#allocation0]]
  $region61: #{_lambda_.5} parent=0
    _
  %s7 = ssub.s32 1, %s5
  %s8 = scalar_select 0, %s7, %s5
  $region1: #{_lambda_.5} parent=0
    #allocation4 [shape = 'u8[1048576]{0}', space=vmem, size = 0x100000, scoped, tag = 'input window, operand 0']
    #allocation5 [shape = 's32[2]{0}', space=sflag, size = 0x8, scoped, tag = 'scoped memory for _lambda_.5']
    #allocation6 [shape = 's32[2]{0}', space=sflag, size = 0x8, scoped, tag = 'scoped memory for _lambda_.5']
    #allocation7 [shape = 'u8[512]{0}', space=smem, size = 0x200, scoped, tag = 'output window, operand 0, single buffered']
    #allocation8 [shape = 'u8[512]{0}', space=smem, size = 0x200, scoped, tag = 'output window, operand 1, single buffered']
    #allocation9 [shape = 's32[1]{0}', space=sflag, size = 0x4, scoped, tag = 'scoped memory for _lambda_.5']
    %9 = vsyncpa [#allocation5], 0
    %s10 = scalar_lea.sflag [#allocation5], 1
    %11 = vsyncpa %s10, 0
    %12 = vsyncpa [#allocation6], 0
    %13 = vsyncpa [#allocation9], 0
    loop: start=0, step=1, limit=34
    $region2: #{_lambda_.5} parent=1 // loop_pre_header
      _
    $region3: #{_lambda_.5} parent=1 // loop_header
      %s15 = sphi 0, %s19
      %p16 = scmp.ge.s32.totalorder %s15, 34
      %s22 = sphi 0, %s34
      %s23 = sphi 0, %s30
      %s24 = sphi 0, %s22
      %s25 = sphi 0, %s23
      %s26 = sphi 0, %s24
      %s27 = sphi 0, %s25
      %s39 = sphi 0, %s41
      %s42 = sphi 0, %s39
      %s43 = sphi 0, %s42
      %s59 = sphi 0, %s43
      %s67 = sphi 0, %s69
      %s70 = sphi 0, %s67
      %s71 = sphi 0, %s70
      %s87 = sphi 0, %s71
      %s91 = sphi 0, %s91
      %s93 = sphi 0, %s91
      %s94 = sphi 0, %s93
      %s108 = sphi 0, %s94
      %s112 = sphi 0, %s112
      %s114 = sphi 0, %s112
      %s115 = sphi 0, %s114
      %s129 = sphi 0, %s115
    $region4: #{_lambda_.5} parent=1 // loop_header_branch
      %18 = sbr.rel (%p16) target = $region8
    $region5: #{_lambda_.5} parent=1 // loop_body
      %s20 = ssub.s32 %s15, 1
      %s21 = ssub.s32 %s15, 2
      %s28 = sadd.s32 1, %s23
      %p29 = scmp.ge.s32.totalorder %s28, 1
      %s30 = scalar_select %p29, 0, %s28
      %s31 = sadd.s32 1, %s22
      %s32 = scalar_select %p29, %s31, %s22
      %p33 = scmp.ge.s32.totalorder %s32, 32
      %s34 = scalar_select %p33, 0, %s32
      %s35 = ssub.s32 %s22, %s34
      %s36 = ssub.s32 %s23, %s30
      %s37 = sor.u32 %s35, %s36
      %p38 = scmp.eq.s32.totalorder %s37, 0
      %s40 = sadd.s32 %s39, 1
      %s41 = scalar_select %p38, %s39, %s40
      %p44 = pneg %p38
      %p45 = scmp.eq.s32.totalorder %s15, 31
      %p46 = por %p44, %p45
      %p47 = scmp.ne.s32.totalorder %s39, %s42
      %p48 = scmp.eq.s32.totalorder %s15, 0
      %p49 = por %p47, %p48
      %p50 = scmp.ne.s32.totalorder %s39, %s42
      %p51 = scmp.eq.s32.totalorder %s20, 31
      %p52 = por %p50, %p51
      %p53 = scmp.ne.s32.totalorder %s42, %s43
      %p54 = scmp.eq.s32.totalorder %s20, 0
      %p55 = por %p53, %p54
      %p56 = scmp.ne.s32.totalorder %s42, %s43
      %p57 = scmp.eq.s32.totalorder %s21, 31
      %p58 = por %p56, %p57
      %p60 = scmp.ne.s32.totalorder %s43, %s59
      %p61 = scmp.eq.s32.totalorder %s21, 0
      %p62 = por %p60, %p61
      %s63 = ssub.s32 %s22, %s34
      %s64 = ssub.s32 %s23, %s30
      %s65 = sor.u32 %s63, %s64
      %p66 = scmp.eq.s32.totalorder %s65, 0
      %s68 = sadd.s32 %s67, 1
      %s69 = scalar_select %p66, %s67, %s68
      %p72 = pneg %p66
      %p73 = scmp.eq.s32.totalorder %s15, 31
      %p74 = por %p72, %p73
      %p75 = scmp.ne.s32.totalorder %s67, %s70
      %p76 = scmp.eq.s32.totalorder %s15, 0
      %p77 = por %p75, %p76
      %p78 = scmp.ne.s32.totalorder %s67, %s70
      %p79 = scmp.eq.s32.totalorder %s20, 31
      %p80 = por %p78, %p79
      %p81 = scmp.ne.s32.totalorder %s70, %s71
      %p82 = scmp.eq.s32.totalorder %s20, 0
      %p83 = por %p81, %p82
      %p84 = scmp.ne.s32.totalorder %s70, %s71
      %p85 = scmp.eq.s32.totalorder %s21, 31
      %p86 = por %p84, %p85
      %p88 = scmp.ne.s32.totalorder %s71, %s87
      %p89 = scmp.eq.s32.totalorder %s21, 0
      %p90 = por %p88, %p89
      %s92 = sadd.s32 %s91, 1
      %p95 = scmp.eq.s32.totalorder %s15, 31
      %p96 = scmp.ne.s32.totalorder %s91, %s93
      %p97 = scmp.eq.s32.totalorder %s15, 0
      %p98 = por %p96, %p97
      %p99 = scmp.ne.s32.totalorder %s91, %s93
      %p100 = scmp.eq.s32.totalorder %s20, 31
      %p101 = por %p99, %p100
      %p102 = scmp.ne.s32.totalorder %s93, %s94
      %p103 = scmp.eq.s32.totalorder %s20, 0
      %p104 = por %p102, %p103
      %p105 = scmp.ne.s32.totalorder %s93, %s94
      %p106 = scmp.eq.s32.totalorder %s21, 31
      %p107 = por %p105, %p106
      %p109 = scmp.ne.s32.totalorder %s94, %s108
      %p110 = scmp.eq.s32.totalorder %s21, 0
      %p111 = por %p109, %p110
      %s113 = sadd.s32 %s112, 1
      %p116 = scmp.eq.s32.totalorder %s15, 31
      %p117 = scmp.ne.s32.totalorder %s112, %s114
      %p118 = scmp.eq.s32.totalorder %s15, 0
      %p119 = por %p117, %p118
      %p120 = scmp.ne.s32.totalorder %s112, %s114
      %p121 = scmp.eq.s32.totalorder %s20, 31
      %p122 = por %p120, %p121
      %p123 = scmp.ne.s32.totalorder %s114, %s115
      %p124 = scmp.eq.s32.totalorder %s20, 0
      %p125 = por %p123, %p124
      %p126 = scmp.ne.s32.totalorder %s114, %s115
      %p127 = scmp.eq.s32.totalorder %s21, 31
      %p128 = por %p126, %p127
      %p130 = scmp.ne.s32.totalorder %s115, %s129
      %p131 = scmp.eq.s32.totalorder %s21, 0
      %p132 = por %p130, %p131
      %p133 = scmp.le.s32.totalorder 1, %s15
      %p134 = scmp.lt.s32.totalorder %s15, 33
      %p135 = pnand %p133, %p134
      %p136 = pneg %p135
      // Predicated region
      $region9: #{_lambda_.5} parent=5 // pred_check
        _
      $region10: #{_lambda_.5} parent=5 // pred_check_branch
        %138 = sbr.rel (%p135) target = $region12
      $region11: #{_lambda_.5} parent=5 // pred_region
        %s139 = ssub.s32 %s15, 1
      $region12: #{_lambda_.5} parent=5 // pred_fallthru
        _
      %p140 = scmp.lt.s32.totalorder %s15, 32
      // Predicated region
      $region13: #{_lambda_.5} parent=5 // pred_check
        %p141 = pneg %p140
      $region14: #{_lambda_.5} parent=5 // pred_check_branch
        %143 = sbr.rel (%p141) target = $region16
      $region15: #{_lambda_.5} parent=5 // pred_region
        // Predicated region
        $region17: #{_lambda_.5} parent=15 // pred_check
          %p144 = pneg %p49
        $region18: #{_lambda_.5} parent=15 // pred_check_branch
          %146 = sbr.rel (%p144) target = $region20
        $region19: #{_lambda_.5} parent=15 // pred_region
          %s147 = sand.u32 %s39, 1
          %s148 = scalar_lea.sflag [#allocation5], %s147
          %s149 = sand.u32 %s39, 1
          %s150 = smul.addr %s149, 1024
          %s151 = scalar_lea.vmem [#allocation4], %s150
          %s152 = smul.u32 32, %s23
          %s154 = ssub.s32 16384, 16384
          %155 = vsyncadd %s148, %s154
          %s156 = smul.addr %s152, 4
          %s157 = smul.addr %s22, 128
          %s158 = sadd.s32 %s156, %s157
          %s159 = smul.addr %s158, 128
          %s160 = scalar_lea.hbm %s0, %s159
          %s161 = sshll.u32 %s151, 4
          %s162 = int_to_ptr.vmem [resolvable:$true] %s161
          %167 = dma.hbm_to_vmem [thread:$0]  %s160, 16384, %s162, %s148, 128, 128, 8
        $region20: #{_lambda_.5} parent=15 // pred_fallthru
          _
        // Predicated region
        $region21: #{_lambda_.5} parent=15 // pred_check
          %p168 = pneg %p77
        $region22: #{_lambda_.5} parent=15 // pred_check_branch
          %170 = sbr.rel (%p168) target = $region24
        $region23: #{_lambda_.5} parent=15 // pred_region
          %s171 = smul.u32 32, %s23
          %p172 = scmp.lt.s32.totalorder %s22, 31
          %s173 = scalar_select %p172, %s22, 31
          %p174 = scmp.lt.s32.totalorder %s171, 31
          %s175 = scalar_select %p174, %s171, 31
          %s176 = smul.addr %s175, 4
          %s177 = smul.addr %s173, 128
          %s178 = sadd.s32 %s176, %s177
          %s179 = smul.addr %s178, 8
          %s180 = scalar_lea.vmem %s1, %s179
          %s181 = smul.u32 32, %s23
        $region24: #{_lambda_.5} parent=15 // pred_fallthru
          _
      $region16: #{_lambda_.5} parent=5 // pred_fallthru
        _
      %p182 = scmp.le.s32.totalorder 1, %s15
      %p183 = scmp.lt.s32.totalorder %s15, 33
      %p184 = pnand %p182, %p183
      %p185 = pneg %p184
      // Predicated region
      $region25: #{_lambda_.5} parent=5 // pred_check
        _
      $region26: #{_lambda_.5} parent=5 // pred_check_branch
        %187 = sbr.rel (%p184) target = $region28
      $region27: #{_lambda_.5} parent=5 // pred_region
        %s188 = ssub.s32 %s15, 1
        %s189 = sand.u32 %s42, 1
        %s190 = scalar_lea.sflag [#allocation5], %s189
        %s191 = sand.u32 %s42, 1
        %s192 = smul.addr %s191, 1024
        %s193 = scalar_lea.vmem [#allocation4], %s192
        // Predicated region
        $region29: #{_lambda_.5} parent=27 // pred_check
          %p194 = pneg %p55
        $region30: #{_lambda_.5} parent=27 // pred_check_branch
          %196 = sbr.rel (%p194) target = $region32
        $region31: #{_lambda_.5} parent=27 // pred_region
          %197 = dma.done %s190, 16384
        $region32: #{_lambda_.5} parent=27 // pred_fallthru
          _
        %s198 = sand.u32 %s42, 1
        %s199 = scalar_lea.sflag [#allocation5], %s198
        %s200 = sand.u32 %s42, 1
        %s201 = smul.addr %s200, 1024
        %s202 = scalar_lea.vmem [#allocation4], %s201
        %p203 = pneg %p55
        %p204 = pneg %p52
        %s205 = smul.u32 32, %s25
        %p206 = scmp.lt.s32.totalorder %s24, 31
        %s207 = scalar_select %p206, %s24, 31
        %p208 = scmp.lt.s32.totalorder %s205, 31
        %s209 = scalar_select %p208, %s205, 31
        %s210 = smul.addr %s209, 4
        %s211 = smul.addr %s207, 128
        %s212 = sadd.s32 %s210, %s211
        %s213 = smul.addr %s212, 8
        %s214 = scalar_lea.vmem %s1, %s213
        %p215 = pneg %p83
        %p216 = pneg %p80
        %p217 = pneg %p104
        %p218 = pneg %p101
        %p219 = pneg %p125
        %p220 = pneg %p122
        %s221 = smul.u32 32, %s25
        %s222 = smul.u32 32, %s25
        %p223 = scmp.lt.s32.totalorder %s24, 31
        %s224 = scalar_select %p223, %s24, 31
        %p225 = scmp.lt.s32.totalorder %s222, 31
        %s226 = scalar_select %p225, %s222, 31
        %s227 = smul.addr %s226, 4
        %s228 = smul.addr %s224, 128
        %s229 = sadd.s32 %s227, %s228
        %s230 = smul.addr %s229, 8
        %s231 = scalar_lea.vmem %s1, %s230
        %s232 = smul.u32 32, %s25
        %p233 = scmp.eq.s32.totalorder %s25, 0
        // Predicated region
        $region33: #{_lambda_.5} parent=27 // pred_check
          %p234 = pneg %p233
        $region34: #{_lambda_.5} parent=27 // pred_check_branch
          %236 = sbr.rel (%p234) target = $region36
        $region35: #{_lambda_.5} parent=27 // pred_region
          %vm237 = vcmask 261120
          %238 = vst.msk [vmem:[#allocation2] sm:$0xff] %vm237, 0.0
          %239 = vst.msk [vmem:[#allocation2 + $0x8] sm:$0xff] %vm237, 0.0
          %240 = vst.msk [vmem:[#allocation2 + $0x10] sm:$0xff] %vm237, 0.0
          %241 = vst.msk [vmem:[#allocation2 + $0x18] sm:$0xff] %vm237, 0.0
          %242 = vst.msk [vmem:[#allocation3] sm:$0xff] %vm237, 0.0
          %243 = vst.msk [vmem:[#allocation3 + $0x8] sm:$0xff] %vm237, 0.0
          %244 = vst.msk [vmem:[#allocation3 + $0x10] sm:$0xff] %vm237, 0.0
          %245 = vst.msk [vmem:[#allocation3 + $0x18] sm:$0xff] %vm237, 0.0
        $region36: #{_lambda_.5} parent=27 // pred_fallthru
          _
        %v246 = vld [vmem:[#allocation2] sm:$0xff]
        %v247 = vld [vmem:[#allocation2 + $0x8] sm:$0xff]
        %v248 = vld [vmem:[#allocation2 + $0x10] sm:$0xff]
        %v249 = vld [vmem:[#allocation2 + $0x18] sm:$0xff]
        %v250 = vld [vmem:[%s193] sm:$0xff]
        %v251 = vld [vmem:[%s193 + $0x8] sm:$0xff]
        %v252 = vld [vmem:[%s193 + $0x10] sm:$0xff]
        %v253 = vld [vmem:[%s193 + $0x18] sm:$0xff]
        %v254 = vld [vmem:[%s193 + $0x20] sm:$0xff]
        %v255 = vld [vmem:[%s193 + $0x28] sm:$0xff]
        %v256 = vld [vmem:[%s193 + $0x30] sm:$0xff]
        %v257 = vld [vmem:[%s193 + $0x38] sm:$0xff]
        %v258 = vld [vmem:[%s193 + $0x40] sm:$0xff]
        %v259 = vld [vmem:[%s193 + $0x48] sm:$0xff]
        %v260 = vld [vmem:[%s193 + $0x50] sm:$0xff]
        %v261 = vld [vmem:[%s193 + $0x58] sm:$0xff]
        %v262 = vld [vmem:[%s193 + $0x60] sm:$0xff]
        %v263 = vld [vmem:[%s193 + $0x68] sm:$0xff]
        %v264 = vld [vmem:[%s193 + $0x70] sm:$0xff]
        %v265 = vld [vmem:[%s193 + $0x78] sm:$0xff]
        %v266 = vld [vmem:[%s193 + $0x80] sm:$0xff]
        %v267 = vld [vmem:[%s193 + $0x88] sm:$0xff]
        %v268 = vld [vmem:[%s193 + $0x90] sm:$0xff]
        %v269 = vld [vmem:[%s193 + $0x98] sm:$0xff]
        %v270 = vld [vmem:[%s193 + $0xa0] sm:$0xff]
        %v271 = vld [vmem:[%s193 + $0xa8] sm:$0xff]
        %v272 = vld [vmem:[%s193 + $0xb0] sm:$0xff]
        %v273 = vld [vmem:[%s193 + $0xb8] sm:$0xff]
        %v274 = vld [vmem:[%s193 + $0xc0] sm:$0xff]
        %v275 = vld [vmem:[%s193 + $0xc8] sm:$0xff]
        %v276 = vld [vmem:[%s193 + $0xd0] sm:$0xff]
        %v277 = vld [vmem:[%s193 + $0xd8] sm:$0xff]
        %v278 = vld [vmem:[%s193 + $0xe0] sm:$0xff]
        %v279 = vld [vmem:[%s193 + $0xe8] sm:$0xff]
        %v280 = vld [vmem:[%s193 + $0xf0] sm:$0xff]
        %v281 = vld [vmem:[%s193 + $0xf8] sm:$0xff]
        %v282 = vld [vmem:[%s193 + $0x100] sm:$0xff]
        %v283 = vld [vmem:[%s193 + $0x108] sm:$0xff]
        %v284 = vld [vmem:[%s193 + $0x110] sm:$0xff]
        %v285 = vld [vmem:[%s193 + $0x118] sm:$0xff]
        %v286 = vld [vmem:[%s193 + $0x120] sm:$0xff]
        %v287 = vld [vmem:[%s193 + $0x128] sm:$0xff]
        %v288 = vld [vmem:[%s193 + $0x130] sm:$0xff]
        %v289 = vld [vmem:[%s193 + $0x138] sm:$0xff]
        %v290 = vld [vmem:[%s193 + $0x140] sm:$0xff]
        %v291 = vld [vmem:[%s193 + $0x148] sm:$0xff]
        %v292 = vld [vmem:[%s193 + $0x150] sm:$0xff]
        %v293 = vld [vmem:[%s193 + $0x158] sm:$0xff]
        %v294 = vld [vmem:[%s193 + $0x160] sm:$0xff]
        %v295 = vld [vmem:[%s193 + $0x168] sm:$0xff]
        %v296 = vld [vmem:[%s193 + $0x170] sm:$0xff]
        %v297 = vld [vmem:[%s193 + $0x178] sm:$0xff]
        %v298 = vld [vmem:[%s193 + $0x180] sm:$0xff]
        %v299 = vld [vmem:[%s193 + $0x188] sm:$0xff]
        %v300 = vld [vmem:[%s193 + $0x190] sm:$0xff]
        %v301 = vld [vmem:[%s193 + $0x198] sm:$0xff]
        %v302 = vld [vmem:[%s193 + $0x1a0] sm:$0xff]
        %v303 = vld [vmem:[%s193 + $0x1a8] sm:$0xff]
        %v304 = vld [vmem:[%s193 + $0x1b0] sm:$0xff]
        %v305 = vld [vmem:[%s193 + $0x1b8] sm:$0xff]
        %v306 = vld [vmem:[%s193 + $0x1c0] sm:$0xff]
        %v307 = vld [vmem:[%s193 + $0x1c8] sm:$0xff]
        %v308 = vld [vmem:[%s193 + $0x1d0] sm:$0xff]
        %v309 = vld [vmem:[%s193 + $0x1d8] sm:$0xff]
        %v310 = vld [vmem:[%s193 + $0x1e0] sm:$0xff]
        %v311 = vld [vmem:[%s193 + $0x1e8] sm:$0xff]
        %v312 = vld [vmem:[%s193 + $0x1f0] sm:$0xff]
        %v313 = vld [vmem:[%s193 + $0x1f8] sm:$0xff]
        %v314 = vld [vmem:[%s193 + $0x200] sm:$0xff]
        %v315 = vld [vmem:[%s193 + $0x208] sm:$0xff]
        %v316 = vld [vmem:[%s193 + $0x210] sm:$0xff]
        %v317 = vld [vmem:[%s193 + $0x218] sm:$0xff]
        %v318 = vld [vmem:[%s193 + $0x220] sm:$0xff]
        %v319 = vld [vmem:[%s193 + $0x228] sm:$0xff]
        %v320 = vld [vmem:[%s193 + $0x230] sm:$0xff]
        %v321 = vld [vmem:[%s193 + $0x238] sm:$0xff]
        %v322 = vld [vmem:[%s193 + $0x240] sm:$0xff]
        %v323 = vld [vmem:[%s193 + $0x248] sm:$0xff]
        %v324 = vld [vmem:[%s193 + $0x250] sm:$0xff]
        %v325 = vld [vmem:[%s193 + $0x258] sm:$0xff]
        %v326 = vld [vmem:[%s193 + $0x260] sm:$0xff]
        %v327 = vld [vmem:[%s193 + $0x268] sm:$0xff]
        %v328 = vld [vmem:[%s193 + $0x270] sm:$0xff]
        %v329 = vld [vmem:[%s193 + $0x278] sm:$0xff]
        %v330 = vld [vmem:[%s193 + $0x280] sm:$0xff]
        %v331 = vld [vmem:[%s193 + $0x288] sm:$0xff]
        %v332 = vld [vmem:[%s193 + $0x290] sm:$0xff]
        %v333 = vld [vmem:[%s193 + $0x298] sm:$0xff]
        %v334 = vld [vmem:[%s193 + $0x2a0] sm:$0xff]
        %v335 = vld [vmem:[%s193 + $0x2a8] sm:$0xff]
        %v336 = vld [vmem:[%s193 + $0x2b0] sm:$0xff]
        %v337 = vld [vmem:[%s193 + $0x2b8] sm:$0xff]
        %v338 = vld [vmem:[%s193 + $0x2c0] sm:$0xff]
        %v339 = vld [vmem:[%s193 + $0x2c8] sm:$0xff]
        %v340 = vld [vmem:[%s193 + $0x2d0] sm:$0xff]
        %v341 = vld [vmem:[%s193 + $0x2d8] sm:$0xff]
        %v342 = vld [vmem:[%s193 + $0x2e0] sm:$0xff]
        %v343 = vld [vmem:[%s193 + $0x2e8] sm:$0xff]
        %v344 = vld [vmem:[%s193 + $0x2f0] sm:$0xff]
        %v345 = vld [vmem:[%s193 + $0x2f8] sm:$0xff]
        %v346 = vld [vmem:[%s193 + $0x300] sm:$0xff]
        %v347 = vld [vmem:[%s193 + $0x308] sm:$0xff]
        %v348 = vld [vmem:[%s193 + $0x310] sm:$0xff]
        %v349 = vld [vmem:[%s193 + $0x318] sm:$0xff]
        %v350 = vld [vmem:[%s193 + $0x320] sm:$0xff]
        %v351 = vld [vmem:[%s193 + $0x328] sm:$0xff]
        %v352 = vld [vmem:[%s193 + $0x330] sm:$0xff]
        %v353 = vld [vmem:[%s193 + $0x338] sm:$0xff]
        %v354 = vld [vmem:[%s193 + $0x340] sm:$0xff]
        %v355 = vld [vmem:[%s193 + $0x348] sm:$0xff]
        %v356 = vld [vmem:[%s193 + $0x350] sm:$0xff]
        %v357 = vld [vmem:[%s193 + $0x358] sm:$0xff]
        %v358 = vld [vmem:[%s193 + $0x360] sm:$0xff]
        %v359 = vld [vmem:[%s193 + $0x368] sm:$0xff]
        %v360 = vld [vmem:[%s193 + $0x370] sm:$0xff]
        %v361 = vld [vmem:[%s193 + $0x378] sm:$0xff]
        %v362 = vld [vmem:[%s193 + $0x380] sm:$0xff]
        %v363 = vld [vmem:[%s193 + $0x388] sm:$0xff]
        %v364 = vld [vmem:[%s193 + $0x390] sm:$0xff]
        %v365 = vld [vmem:[%s193 + $0x398] sm:$0xff]
        %v366 = vld [vmem:[%s193 + $0x3a0] sm:$0xff]
        %v367 = vld [vmem:[%s193 + $0x3a8] sm:$0xff]
        %v368 = vld [vmem:[%s193 + $0x3b0] sm:$0xff]
        %v369 = vld [vmem:[%s193 + $0x3b8] sm:$0xff]
        %v370 = vld [vmem:[%s193 + $0x3c0] sm:$0xff]
        %v371 = vld [vmem:[%s193 + $0x3c8] sm:$0xff]
        %v372 = vld [vmem:[%s193 + $0x3d0] sm:$0xff]
        %v373 = vld [vmem:[%s193 + $0x3d8] sm:$0xff]
        %v374 = vld [vmem:[%s193 + $0x3e0] sm:$0xff]
        %v375 = vld [vmem:[%s193 + $0x3e8] sm:$0xff]
        %v376 = vld [vmem:[%s193 + $0x3f0] sm:$0xff]
        %v377 = vld [vmem:[%s193 + $0x3f8] sm:$0xff]
        %vm378 = vcmask 261120
        %v379 = vsel %vm378, %v250, 0.0
        %v380 = vsel %vm378, %v254, 0.0
        %v381 = vadd.f32 %v379, %v380
        %v382 = vsel %vm378, %v258, 0.0
        %v383 = vadd.f32 %v381, %v382
        %v384 = vsel %vm378, %v262, 0.0
        %v385 = vadd.f32 %v383, %v384
        %v386 = vsel %vm378, %v266, 0.0
        %v387 = vadd.f32 %v385, %v386
        %v388 = vsel %vm378, %v270, 0.0
        %v389 = vadd.f32 %v387, %v388
        %v390 = vsel %vm378, %v274, 0.0
        %v391 = vadd.f32 %v389, %v390
        %v392 = vsel %vm378, %v278, 0.0
        %v393 = vadd.f32 %v391, %v392
        %v394 = vsel %vm378, %v282, 0.0
        %v395 = vadd.f32 %v393, %v394
        %v396 = vsel %vm378, %v286, 0.0
        %v397 = vadd.f32 %v395, %v396
        %v398 = vsel %vm378, %v290, 0.0
        %v399 = vadd.f32 %v397, %v398
        %v400 = vsel %vm378, %v294, 0.0
        %v401 = vadd.f32 %v399, %v400
        %v402 = vsel %vm378, %v298, 0.0
        %v403 = vadd.f32 %v401, %v402
        %v404 = vsel %vm378, %v302, 0.0
        %v405 = vadd.f32 %v403, %v404
        %v406 = vsel %vm378, %v306, 0.0
        %v407 = vadd.f32 %v405, %v406
        %v408 = vsel %vm378, %v310, 0.0
        %v409 = vadd.f32 %v407, %v408
        %v410 = vsel %vm378, %v314, 0.0
        %v411 = vadd.f32 %v409, %v410
        %v412 = vsel %vm378, %v318, 0.0
        %v413 = vadd.f32 %v411, %v412
        %v414 = vsel %vm378, %v322, 0.0
        %v415 = vadd.f32 %v413, %v414
        %v416 = vsel %vm378, %v326, 0.0
        %v417 = vadd.f32 %v415, %v416
        %v418 = vsel %vm378, %v330, 0.0
        %v419 = vadd.f32 %v417, %v418
        %v420 = vsel %vm378, %v334, 0.0
        %v421 = vadd.f32 %v419, %v420
        %v422 = vsel %vm378, %v338, 0.0
        %v423 = vadd.f32 %v421, %v422
        %v424 = vsel %vm378, %v342, 0.0
        %v425 = vadd.f32 %v423, %v424
        %v426 = vsel %vm378, %v346, 0.0
        %v427 = vadd.f32 %v425, %v426
        %v428 = vsel %vm378, %v350, 0.0
        %v429 = vadd.f32 %v427, %v428
        %v430 = vsel %vm378, %v354, 0.0
        %v431 = vadd.f32 %v429, %v430
        %v432 = vsel %vm378, %v358, 0.0
        %v433 = vadd.f32 %v431, %v432
        %v434 = vsel %vm378, %v362, 0.0
        %v435 = vadd.f32 %v433, %v434
        %v436 = vsel %vm378, %v366, 0.0
        %v437 = vadd.f32 %v435, %v436
        %v438 = vsel %vm378, %v370, 0.0
        %v439 = vadd.f32 %v437, %v438
        %v440 = vsel %vm378, %v374, 0.0
        %v441 = vadd.f32 %v439, %v440
        %v442 = vsel %vm378, %v251, 0.0
        %v443 = vsel %vm378, %v255, 0.0
        %v444 = vadd.f32 %v442, %v443
        %v445 = vsel %vm378, %v259, 0.0
        %v446 = vadd.f32 %v444, %v445
        %v447 = vsel %vm378, %v263, 0.0
        %v448 = vadd.f32 %v446, %v447
        %v449 = vsel %vm378, %v267, 0.0
        %v450 = vadd.f32 %v448, %v449
        %v451 = vsel %vm378, %v271, 0.0
        %v452 = vadd.f32 %v450, %v451
        %v453 = vsel %vm378, %v275, 0.0
        %v454 = vadd.f32 %v452, %v453
        %v455 = vsel %vm378, %v279, 0.0
        %v456 = vadd.f32 %v454, %v455
        %v457 = vsel %vm378, %v283, 0.0
        %v458 = vadd.f32 %v456, %v457
        %v459 = vsel %vm378, %v287, 0.0
        %v460 = vadd.f32 %v458, %v459
        %v461 = vsel %vm378, %v291, 0.0
        %v462 = vadd.f32 %v460, %v461
        %v463 = vsel %vm378, %v295, 0.0
        %v464 = vadd.f32 %v462, %v463
        %v465 = vsel %vm378, %v299, 0.0
        %v466 = vadd.f32 %v464, %v465
        %v467 = vsel %vm378, %v303, 0.0
        %v468 = vadd.f32 %v466, %v467
        %v469 = vsel %vm378, %v307, 0.0
        %v470 = vadd.f32 %v468, %v469
        %v471 = vsel %vm378, %v311, 0.0
        %v472 = vadd.f32 %v470, %v471
        %v473 = vsel %vm378, %v315, 0.0
        %v474 = vadd.f32 %v472, %v473
        %v475 = vsel %vm378, %v319, 0.0
        %v476 = vadd.f32 %v474, %v475
        %v477 = vsel %vm378, %v323, 0.0
        %v478 = vadd.f32 %v476, %v477
        %v479 = vsel %vm378, %v327, 0.0
        %v480 = vadd.f32 %v478, %v479
        %v481 = vsel %vm378, %v331, 0.0
        %v482 = vadd.f32 %v480, %v481
        %v483 = vsel %vm378, %v335, 0.0
        %v484 = vadd.f32 %v482, %v483
        %v485 = vsel %vm378, %v339, 0.0
        %v486 = vadd.f32 %v484, %v485
        %v487 = vsel %vm378, %v343, 0.0
        %v488 = vadd.f32 %v486, %v487
        %v489 = vsel %vm378, %v347, 0.0
        %v490 = vadd.f32 %v488, %v489
        %v491 = vsel %vm378, %v351, 0.0
        %v492 = vadd.f32 %v490, %v491
        %v493 = vsel %vm378, %v355, 0.0
        %v494 = vadd.f32 %v492, %v493
        %v495 = vsel %vm378, %v359, 0.0
        %v496 = vadd.f32 %v494, %v495
        %v497 = vsel %vm378, %v363, 0.0
        %v498 = vadd.f32 %v496, %v497
        %v499 = vsel %vm378, %v367, 0.0
        %v500 = vadd.f32 %v498, %v499
        %v501 = vsel %vm378, %v371, 0.0
        %v502 = vadd.f32 %v500, %v501
        %v503 = vsel %vm378, %v375, 0.0
        %v504 = vadd.f32 %v502, %v503
        %v505 = vsel %vm378, %v252, 0.0
        %v506 = vsel %vm378, %v256, 0.0
        %v507 = vadd.f32 %v505, %v506
        %v508 = vsel %vm378, %v260, 0.0
        %v509 = vadd.f32 %v507, %v508
        %v510 = vsel %vm378, %v264, 0.0
        %v511 = vadd.f32 %v509, %v510
        %v512 = vsel %vm378, %v268, 0.0
        %v513 = vadd.f32 %v511, %v512
        %v514 = vsel %vm378, %v272, 0.0
        %v515 = vadd.f32 %v513, %v514
        %v516 = vsel %vm378, %v276, 0.0
        %v517 = vadd.f32 %v515, %v516
        %v518 = vsel %vm378, %v280, 0.0
        %v519 = vadd.f32 %v517, %v518
        %v520 = vsel %vm378, %v284, 0.0
        %v521 = vadd.f32 %v519, %v520
        %v522 = vsel %vm378, %v288, 0.0
        %v523 = vadd.f32 %v521, %v522
        %v524 = vsel %vm378, %v292, 0.0
        %v525 = vadd.f32 %v523, %v524
        %v526 = vsel %vm378, %v296, 0.0
        %v527 = vadd.f32 %v525, %v526
        %v528 = vsel %vm378, %v300, 0.0
        %v529 = vadd.f32 %v527, %v528
        %v530 = vsel %vm378, %v304, 0.0
        %v531 = vadd.f32 %v529, %v530
        %v532 = vsel %vm378, %v308, 0.0
        %v533 = vadd.f32 %v531, %v532
        %v534 = vsel %vm378, %v312, 0.0
        %v535 = vadd.f32 %v533, %v534
        %v536 = vsel %vm378, %v316, 0.0
        %v537 = vadd.f32 %v535, %v536
        %v538 = vsel %vm378, %v320, 0.0
        %v539 = vadd.f32 %v537, %v538
        %v540 = vsel %vm378, %v324, 0.0
        %v541 = vadd.f32 %v539, %v540
        %v542 = vsel %vm378, %v328, 0.0
        %v543 = vadd.f32 %v541, %v542
        %v544 = vsel %vm378, %v332, 0.0
        %v545 = vadd.f32 %v543, %v544
        %v546 = vsel %vm378, %v336, 0.0
        %v547 = vadd.f32 %v545, %v546
        %v548 = vsel %vm378, %v340, 0.0
        %v549 = vadd.f32 %v547, %v548
        %v550 = vsel %vm378, %v344, 0.0
        %v551 = vadd.f32 %v549, %v550
        %v552 = vsel %vm378, %v348, 0.0
        %v553 = vadd.f32 %v551, %v552
        %v554 = vsel %vm378, %v352, 0.0
        %v555 = vadd.f32 %v553, %v554
        %v556 = vsel %vm378, %v356, 0.0
        %v557 = vadd.f32 %v555, %v556
        %v558 = vsel %vm378, %v360, 0.0
        %v559 = vadd.f32 %v557, %v558
        %v560 = vsel %vm378, %v364, 0.0
        %v561 = vadd.f32 %v559, %v560
        %v562 = vsel %vm378, %v368, 0.0
        %v563 = vadd.f32 %v561, %v562
        %v564 = vsel %vm378, %v372, 0.0
        %v565 = vadd.f32 %v563, %v564
        %v566 = vsel %vm378, %v376, 0.0
        %v567 = vadd.f32 %v565, %v566
        %v568 = vsel %vm378, %v253, 0.0
        %v569 = vsel %vm378, %v257, 0.0
        %v570 = vadd.f32 %v568, %v569
        %v571 = vsel %vm378, %v261, 0.0
        %v572 = vadd.f32 %v570, %v571
        %v573 = vsel %vm378, %v265, 0.0
        %v574 = vadd.f32 %v572, %v573
        %v575 = vsel %vm378, %v269, 0.0
        %v576 = vadd.f32 %v574, %v575
        %v577 = vsel %vm378, %v273, 0.0
        %v578 = vadd.f32 %v576, %v577
        %v579 = vsel %vm378, %v277, 0.0
        %v580 = vadd.f32 %v578, %v579
        %v581 = vsel %vm378, %v281, 0.0
        %v582 = vadd.f32 %v580, %v581
        %v583 = vsel %vm378, %v285, 0.0
        %v584 = vadd.f32 %v582, %v583
        %v585 = vsel %vm378, %v289, 0.0
        %v586 = vadd.f32 %v584, %v585
        %v587 = vsel %vm378, %v293, 0.0
        %v588 = vadd.f32 %v586, %v587
        %v589 = vsel %vm378, %v297, 0.0
        %v590 = vadd.f32 %v588, %v589
        %v591 = vsel %vm378, %v301, 0.0
        %v592 = vadd.f32 %v590, %v591
        %v593 = vsel %vm378, %v305, 0.0
        %v594 = vadd.f32 %v592, %v593
        %v595 = vsel %vm378, %v309, 0.0
        %v596 = vadd.f32 %v594, %v595
        %v597 = vsel %vm378, %v313, 0.0
        %v598 = vadd.f32 %v596, %v597
        %v599 = vsel %vm378, %v317, 0.0
        %v600 = vadd.f32 %v598, %v599
        %v601 = vsel %vm378, %v321, 0.0
        %v602 = vadd.f32 %v600, %v601
        %v603 = vsel %vm378, %v325, 0.0
        %v604 = vadd.f32 %v602, %v603
        %v605 = vsel %vm378, %v329, 0.0
        %v606 = vadd.f32 %v604, %v605
        %v607 = vsel %vm378, %v333, 0.0
        %v608 = vadd.f32 %v606, %v607
        %v609 = vsel %vm378, %v337, 0.0
        %v610 = vadd.f32 %v608, %v609
        %v611 = vsel %vm378, %v341, 0.0
        %v612 = vadd.f32 %v610, %v611
        %v613 = vsel %vm378, %v345, 0.0
        %v614 = vadd.f32 %v612, %v613
        %v615 = vsel %vm378, %v349, 0.0
        %v616 = vadd.f32 %v614, %v615
        %v617 = vsel %vm378, %v353, 0.0
        %v618 = vadd.f32 %v616, %v617
        %v619 = vsel %vm378, %v357, 0.0
        %v620 = vadd.f32 %v618, %v619
        %v621 = vsel %vm378, %v361, 0.0
        %v622 = vadd.f32 %v620, %v621
        %v623 = vsel %vm378, %v365, 0.0
        %v624 = vadd.f32 %v622, %v623
        %v625 = vsel %vm378, %v369, 0.0
        %v626 = vadd.f32 %v624, %v625
        %v627 = vsel %vm378, %v373, 0.0
        %v628 = vadd.f32 %v626, %v627
        %v629 = vsel %vm378, %v377, 0.0
        %v630 = vadd.f32 %v628, %v629
        %v631 = vadd.f32 %v246, %v441
        %v632 = vadd.f32 %v247, %v504
        %v633 = vadd.f32 %v248, %v567
        %v634 = vadd.f32 %v249, %v630
        %635 = vst.msk [vmem:[#allocation2] sm:$0xff] %vm378, %v631
        %636 = vst.msk [vmem:[#allocation2 + $0x8] sm:$0xff] %vm378, %v632
        %637 = vst.msk [vmem:[#allocation2 + $0x10] sm:$0xff] %vm378, %v633
        %638 = vst.msk [vmem:[#allocation2 + $0x18] sm:$0xff] %vm378, %v634
        %v639 = vld [vmem:[#allocation3] sm:$0xff]
        %v640 = vld [vmem:[#allocation3 + $0x8] sm:$0xff]
        %v641 = vld [vmem:[#allocation3 + $0x10] sm:$0xff]
        %v642 = vld [vmem:[#allocation3 + $0x18] sm:$0xff]
        %v643 = vld [vmem:[%s231] sm:$0xff]
        %v644 = vld [vmem:[%s231 + $0x8] sm:$0xff]
        %v645 = vld [vmem:[%s231 + $0x10] sm:$0xff]
        %v646 = vld [vmem:[%s231 + $0x18] sm:$0xff]
        %v647 = vld [vmem:[%s231 + $0x20] sm:$0xff]
        %v648 = vld [vmem:[%s231 + $0x28] sm:$0xff]
        %v649 = vld [vmem:[%s231 + $0x30] sm:$0xff]
        %v650 = vld [vmem:[%s231 + $0x38] sm:$0xff]
        %v651 = vld [vmem:[%s231 + $0x40] sm:$0xff]
        %v652 = vld [vmem:[%s231 + $0x48] sm:$0xff]
        %v653 = vld [vmem:[%s231 + $0x50] sm:$0xff]
        %v654 = vld [vmem:[%s231 + $0x58] sm:$0xff]
        %v655 = vld [vmem:[%s231 + $0x60] sm:$0xff]
        %v656 = vld [vmem:[%s231 + $0x68] sm:$0xff]
        %v657 = vld [vmem:[%s231 + $0x70] sm:$0xff]
        %v658 = vld [vmem:[%s231 + $0x78] sm:$0xff]
        %v659 = vld [vmem:[%s231 + $0x80] sm:$0xff]
        %v660 = vld [vmem:[%s231 + $0x88] sm:$0xff]
        %v661 = vld [vmem:[%s231 + $0x90] sm:$0xff]
        %v662 = vld [vmem:[%s231 + $0x98] sm:$0xff]
        %v663 = vld [vmem:[%s231 + $0xa0] sm:$0xff]
        %v664 = vld [vmem:[%s231 + $0xa8] sm:$0xff]
        %v665 = vld [vmem:[%s231 + $0xb0] sm:$0xff]
        %v666 = vld [vmem:[%s231 + $0xb8] sm:$0xff]
        %v667 = vld [vmem:[%s231 + $0xc0] sm:$0xff]
        %v668 = vld [vmem:[%s231 + $0xc8] sm:$0xff]
        %v669 = vld [vmem:[%s231 + $0xd0] sm:$0xff]
        %v670 = vld [vmem:[%s231 + $0xd8] sm:$0xff]
        %v671 = vld [vmem:[%s231 + $0xe0] sm:$0xff]
        %v672 = vld [vmem:[%s231 + $0xe8] sm:$0xff]
        %v673 = vld [vmem:[%s231 + $0xf0] sm:$0xff]
        %v674 = vld [vmem:[%s231 + $0xf8] sm:$0xff]
        %v675 = vld [vmem:[%s231 + $0x100] sm:$0xff]
        %v676 = vld [vmem:[%s231 + $0x108] sm:$0xff]
        %v677 = vld [vmem:[%s231 + $0x110] sm:$0xff]
        %v678 = vld [vmem:[%s231 + $0x118] sm:$0xff]
        %v679 = vld [vmem:[%s231 + $0x120] sm:$0xff]
        %v680 = vld [vmem:[%s231 + $0x128] sm:$0xff]
        %v681 = vld [vmem:[%s231 + $0x130] sm:$0xff]
        %v682 = vld [vmem:[%s231 + $0x138] sm:$0xff]
        %v683 = vld [vmem:[%s231 + $0x140] sm:$0xff]
        %v684 = vld [vmem:[%s231 + $0x148] sm:$0xff]
        %v685 = vld [vmem:[%s231 + $0x150] sm:$0xff]
        %v686 = vld [vmem:[%s231 + $0x158] sm:$0xff]
        %v687 = vld [vmem:[%s231 + $0x160] sm:$0xff]
        %v688 = vld [vmem:[%s231 + $0x168] sm:$0xff]
        %v689 = vld [vmem:[%s231 + $0x170] sm:$0xff]
        %v690 = vld [vmem:[%s231 + $0x178] sm:$0xff]
        %v691 = vld [vmem:[%s231 + $0x180] sm:$0xff]
        %v692 = vld [vmem:[%s231 + $0x188] sm:$0xff]
        %v693 = vld [vmem:[%s231 + $0x190] sm:$0xff]
        %v694 = vld [vmem:[%s231 + $0x198] sm:$0xff]
        %v695 = vld [vmem:[%s231 + $0x1a0] sm:$0xff]
        %v696 = vld [vmem:[%s231 + $0x1a8] sm:$0xff]
        %v697 = vld [vmem:[%s231 + $0x1b0] sm:$0xff]
        %v698 = vld [vmem:[%s231 + $0x1b8] sm:$0xff]
        %v699 = vld [vmem:[%s231 + $0x1c0] sm:$0xff]
        %v700 = vld [vmem:[%s231 + $0x1c8] sm:$0xff]
        %v701 = vld [vmem:[%s231 + $0x1d0] sm:$0xff]
        %v702 = vld [vmem:[%s231 + $0x1d8] sm:$0xff]
        %v703 = vld [vmem:[%s231 + $0x1e0] sm:$0xff]
        %v704 = vld [vmem:[%s231 + $0x1e8] sm:$0xff]
        %v705 = vld [vmem:[%s231 + $0x1f0] sm:$0xff]
        %v706 = vld [vmem:[%s231 + $0x1f8] sm:$0xff]
        %v707 = vld [vmem:[%s231 + $0x200] sm:$0xff]
        %v708 = vld [vmem:[%s231 + $0x208] sm:$0xff]
        %v709 = vld [vmem:[%s231 + $0x210] sm:$0xff]
        %v710 = vld [vmem:[%s231 + $0x218] sm:$0xff]
        %v711 = vld [vmem:[%s231 + $0x220] sm:$0xff]
        %v712 = vld [vmem:[%s231 + $0x228] sm:$0xff]
        %v713 = vld [vmem:[%s231 + $0x230] sm:$0xff]
        %v714 = vld [vmem:[%s231 + $0x238] sm:$0xff]
        %v715 = vld [vmem:[%s231 + $0x240] sm:$0xff]
        %v716 = vld [vmem:[%s231 + $0x248] sm:$0xff]
        %v717 = vld [vmem:[%s231 + $0x250] sm:$0xff]
        %v718 = vld [vmem:[%s231 + $0x258] sm:$0xff]
        %v719 = vld [vmem:[%s231 + $0x260] sm:$0xff]
        %v720 = vld [vmem:[%s231 + $0x268] sm:$0xff]
        %v721 = vld [vmem:[%s231 + $0x270] sm:$0xff]
        %v722 = vld [vmem:[%s231 + $0x278] sm:$0xff]
        %v723 = vld [vmem:[%s231 + $0x280] sm:$0xff]
        %v724 = vld [vmem:[%s231 + $0x288] sm:$0xff]
        %v725 = vld [vmem:[%s231 + $0x290] sm:$0xff]
        %v726 = vld [vmem:[%s231 + $0x298] sm:$0xff]
        %v727 = vld [vmem:[%s231 + $0x2a0] sm:$0xff]
        %v728 = vld [vmem:[%s231 + $0x2a8] sm:$0xff]
        %v729 = vld [vmem:[%s231 + $0x2b0] sm:$0xff]
        %v730 = vld [vmem:[%s231 + $0x2b8] sm:$0xff]
        %v731 = vld [vmem:[%s231 + $0x2c0] sm:$0xff]
        %v732 = vld [vmem:[%s231 + $0x2c8] sm:$0xff]
        %v733 = vld [vmem:[%s231 + $0x2d0] sm:$0xff]
        %v734 = vld [vmem:[%s231 + $0x2d8] sm:$0xff]
        %v735 = vld [vmem:[%s231 + $0x2e0] sm:$0xff]
        %v736 = vld [vmem:[%s231 + $0x2e8] sm:$0xff]
        %v737 = vld [vmem:[%s231 + $0x2f0] sm:$0xff]
        %v738 = vld [vmem:[%s231 + $0x2f8] sm:$0xff]
        %v739 = vld [vmem:[%s231 + $0x300] sm:$0xff]
        %v740 = vld [vmem:[%s231 + $0x308] sm:$0xff]
        %v741 = vld [vmem:[%s231 + $0x310] sm:$0xff]
        %v742 = vld [vmem:[%s231 + $0x318] sm:$0xff]
        %v743 = vld [vmem:[%s231 + $0x320] sm:$0xff]
        %v744 = vld [vmem:[%s231 + $0x328] sm:$0xff]
        %v745 = vld [vmem:[%s231 + $0x330] sm:$0xff]
        %v746 = vld [vmem:[%s231 + $0x338] sm:$0xff]
        %v747 = vld [vmem:[%s231 + $0x340] sm:$0xff]
        %v748 = vld [vmem:[%s231 + $0x348] sm:$0xff]
        %v749 = vld [vmem:[%s231 + $0x350] sm:$0xff]
        %v750 = vld [vmem:[%s231 + $0x358] sm:$0xff]
        %v751 = vld [vmem:[%s231 + $0x360] sm:$0xff]
        %v752 = vld [vmem:[%s231 + $0x368] sm:$0xff]
        %v753 = vld [vmem:[%s231 + $0x370] sm:$0xff]
        %v754 = vld [vmem:[%s231 + $0x378] sm:$0xff]
        %v755 = vld [vmem:[%s231 + $0x380] sm:$0xff]
        %v756 = vld [vmem:[%s231 + $0x388] sm:$0xff]
        %v757 = vld [vmem:[%s231 + $0x390] sm:$0xff]
        %v758 = vld [vmem:[%s231 + $0x398] sm:$0xff]
        %v759 = vld [vmem:[%s231 + $0x3a0] sm:$0xff]
        %v760 = vld [vmem:[%s231 + $0x3a8] sm:$0xff]
        %v761 = vld [vmem:[%s231 + $0x3b0] sm:$0xff]
        %v762 = vld [vmem:[%s231 + $0x3b8] sm:$0xff]
        %v763 = vld [vmem:[%s231 + $0x3c0] sm:$0xff]
        %v764 = vld [vmem:[%s231 + $0x3c8] sm:$0xff]
        %v765 = vld [vmem:[%s231 + $0x3d0] sm:$0xff]
        %v766 = vld [vmem:[%s231 + $0x3d8] sm:$0xff]
        %v767 = vld [vmem:[%s231 + $0x3e0] sm:$0xff]
        %v768 = vld [vmem:[%s231 + $0x3e8] sm:$0xff]
        %v769 = vld [vmem:[%s231 + $0x3f0] sm:$0xff]
        %v770 = vld [vmem:[%s231 + $0x3f8] sm:$0xff]
        %v771 = vsel %vm378, %v643, 0.0
        %v772 = vsel %vm378, %v647, 0.0
        %v773 = vadd.f32 %v771, %v772
        %v774 = vsel %vm378, %v651, 0.0
        %v775 = vadd.f32 %v773, %v774
        %v776 = vsel %vm378, %v655, 0.0
        %v777 = vadd.f32 %v775, %v776
        %v778 = vsel %vm378, %v659, 0.0
        %v779 = vadd.f32 %v777, %v778
        %v780 = vsel %vm378, %v663, 0.0
        %v781 = vadd.f32 %v779, %v780
        %v782 = vsel %vm378, %v667, 0.0
        %v783 = vadd.f32 %v781, %v782
        %v784 = vsel %vm378, %v671, 0.0
        %v785 = vadd.f32 %v783, %v784
        %v786 = vsel %vm378, %v675, 0.0
        %v787 = vadd.f32 %v785, %v786
        %v788 = vsel %vm378, %v679, 0.0
        %v789 = vadd.f32 %v787, %v788
        %v790 = vsel %vm378, %v683, 0.0
        %v791 = vadd.f32 %v789, %v790
        %v792 = vsel %vm378, %v687, 0.0
        %v793 = vadd.f32 %v791, %v792
        %v794 = vsel %vm378, %v691, 0.0
        %v795 = vadd.f32 %v793, %v794
        %v796 = vsel %vm378, %v695, 0.0
        %v797 = vadd.f32 %v795, %v796
        %v798 = vsel %vm378, %v699, 0.0
        %v799 = vadd.f32 %v797, %v798
        %v800 = vsel %vm378, %v703, 0.0
        %v801 = vadd.f32 %v799, %v800
        %v802 = vsel %vm378, %v707, 0.0
        %v803 = vadd.f32 %v801, %v802
        %v804 = vsel %vm378, %v711, 0.0
        %v805 = vadd.f32 %v803, %v804
        %v806 = vsel %vm378, %v715, 0.0
        %v807 = vadd.f32 %v805, %v806
        %v808 = vsel %vm378, %v719, 0.0
        %v809 = vadd.f32 %v807, %v808
        %v810 = vsel %vm378, %v723, 0.0
        %v811 = vadd.f32 %v809, %v810
        %v812 = vsel %vm378, %v727, 0.0
        %v813 = vadd.f32 %v811, %v812
        %v814 = vsel %vm378, %v731, 0.0
        %v815 = vadd.f32 %v813, %v814
        %v816 = vsel %vm378, %v735, 0.0
        %v817 = vadd.f32 %v815, %v816
        %v818 = vsel %vm378, %v739, 0.0
        %v819 = vadd.f32 %v817, %v818
        %v820 = vsel %vm378, %v743, 0.0
        %v821 = vadd.f32 %v819, %v820
        %v822 = vsel %vm378, %v747, 0.0
        %v823 = vadd.f32 %v821, %v822
        %v824 = vsel %vm378, %v751, 0.0
        %v825 = vadd.f32 %v823, %v824
        %v826 = vsel %vm378, %v755, 0.0
        %v827 = vadd.f32 %v825, %v826
        %v828 = vsel %vm378, %v759, 0.0
        %v829 = vadd.f32 %v827, %v828
        %v830 = vsel %vm378, %v763, 0.0
        %v831 = vadd.f32 %v829, %v830
        %v832 = vsel %vm378, %v767, 0.0
        %v833 = vadd.f32 %v831, %v832
        %v834 = vsel %vm378, %v644, 0.0
        %v835 = vsel %vm378, %v648, 0.0
        %v836 = vadd.f32 %v834, %v835
        %v837 = vsel %vm378, %v652, 0.0
        %v838 = vadd.f32 %v836, %v837
        %v839 = vsel %vm378, %v656, 0.0
        %v840 = vadd.f32 %v838, %v839
        %v841 = vsel %vm378, %v660, 0.0
        %v842 = vadd.f32 %v840, %v841
        %v843 = vsel %vm378, %v664, 0.0
        %v844 = vadd.f32 %v842, %v843
        %v845 = vsel %vm378, %v668, 0.0
        %v846 = vadd.f32 %v844, %v845
        %v847 = vsel %vm378, %v672, 0.0
        %v848 = vadd.f32 %v846, %v847
        %v849 = vsel %vm378, %v676, 0.0
        %v850 = vadd.f32 %v848, %v849
        %v851 = vsel %vm378, %v680, 0.0
        %v852 = vadd.f32 %v850, %v851
        %v853 = vsel %vm378, %v684, 0.0
        %v854 = vadd.f32 %v852, %v853
        %v855 = vsel %vm378, %v688, 0.0
        %v856 = vadd.f32 %v854, %v855
        %v857 = vsel %vm378, %v692, 0.0
        %v858 = vadd.f32 %v856, %v857
        %v859 = vsel %vm378, %v696, 0.0
        %v860 = vadd.f32 %v858, %v859
        %v861 = vsel %vm378, %v700, 0.0
        %v862 = vadd.f32 %v860, %v861
        %v863 = vsel %vm378, %v704, 0.0
        %v864 = vadd.f32 %v862, %v863
        %v865 = vsel %vm378, %v708, 0.0
        %v866 = vadd.f32 %v864, %v865
        %v867 = vsel %vm378, %v712, 0.0
        %v868 = vadd.f32 %v866, %v867
        %v869 = vsel %vm378, %v716, 0.0
        %v870 = vadd.f32 %v868, %v869
        %v871 = vsel %vm378, %v720, 0.0
        %v872 = vadd.f32 %v870, %v871
        %v873 = vsel %vm378, %v724, 0.0
        %v874 = vadd.f32 %v872, %v873
        %v875 = vsel %vm378, %v728, 0.0
        %v876 = vadd.f32 %v874, %v875
        %v877 = vsel %vm378, %v732, 0.0
        %v878 = vadd.f32 %v876, %v877
        %v879 = vsel %vm378, %v736, 0.0
        %v880 = vadd.f32 %v878, %v879
        %v881 = vsel %vm378, %v740, 0.0
        %v882 = vadd.f32 %v880, %v881
        %v883 = vsel %vm378, %v744, 0.0
        %v884 = vadd.f32 %v882, %v883
        %v885 = vsel %vm378, %v748, 0.0
        %v886 = vadd.f32 %v884, %v885
        %v887 = vsel %vm378, %v752, 0.0
        %v888 = vadd.f32 %v886, %v887
        %v889 = vsel %vm378, %v756, 0.0
        %v890 = vadd.f32 %v888, %v889
        %v891 = vsel %vm378, %v760, 0.0
        %v892 = vadd.f32 %v890, %v891
        %v893 = vsel %vm378, %v764, 0.0
        %v894 = vadd.f32 %v892, %v893
        %v895 = vsel %vm378, %v768, 0.0
        %v896 = vadd.f32 %v894, %v895
        %v897 = vsel %vm378, %v645, 0.0
        %v898 = vsel %vm378, %v649, 0.0
        %v899 = vadd.f32 %v897, %v898
        %v900 = vsel %vm378, %v653, 0.0
        %v901 = vadd.f32 %v899, %v900
        %v902 = vsel %vm378, %v657, 0.0
        %v903 = vadd.f32 %v901, %v902
        %v904 = vsel %vm378, %v661, 0.0
        %v905 = vadd.f32 %v903, %v904
        %v906 = vsel %vm378, %v665, 0.0
        %v907 = vadd.f32 %v905, %v906
        %v908 = vsel %vm378, %v669, 0.0
        %v909 = vadd.f32 %v907, %v908
        %v910 = vsel %vm378, %v673, 0.0
        %v911 = vadd.f32 %v909, %v910
        %v912 = vsel %vm378, %v677, 0.0
        %v913 = vadd.f32 %v911, %v912
        %v914 = vsel %vm378, %v681, 0.0
        %v915 = vadd.f32 %v913, %v914
        %v916 = vsel %vm378, %v685, 0.0
        %v917 = vadd.f32 %v915, %v916
        %v918 = vsel %vm378, %v689, 0.0
        %v919 = vadd.f32 %v917, %v918
        %v920 = vsel %vm378, %v693, 0.0
        %v921 = vadd.f32 %v919, %v920
        %v922 = vsel %vm378, %v697, 0.0
        %v923 = vadd.f32 %v921, %v922
        %v924 = vsel %vm378, %v701, 0.0
        %v925 = vadd.f32 %v923, %v924
        %v926 = vsel %vm378, %v705, 0.0
        %v927 = vadd.f32 %v925, %v926
        %v928 = vsel %vm378, %v709, 0.0
        %v929 = vadd.f32 %v927, %v928
        %v930 = vsel %vm378, %v713, 0.0
        %v931 = vadd.f32 %v929, %v930
        %v932 = vsel %vm378, %v717, 0.0
        %v933 = vadd.f32 %v931, %v932
        %v934 = vsel %vm378, %v721, 0.0
        %v935 = vadd.f32 %v933, %v934
        %v936 = vsel %vm378, %v725, 0.0
        %v937 = vadd.f32 %v935, %v936
        %v938 = vsel %vm378, %v729, 0.0
        %v939 = vadd.f32 %v937, %v938
        %v940 = vsel %vm378, %v733, 0.0
        %v941 = vadd.f32 %v939, %v940
        %v942 = vsel %vm378, %v737, 0.0
        %v943 = vadd.f32 %v941, %v942
        %v944 = vsel %vm378, %v741, 0.0
        %v945 = vadd.f32 %v943, %v944
        %v946 = vsel %vm378, %v745, 0.0
        %v947 = vadd.f32 %v945, %v946
        %v948 = vsel %vm378, %v749, 0.0
        %v949 = vadd.f32 %v947, %v948
        %v950 = vsel %vm378, %v753, 0.0
        %v951 = vadd.f32 %v949, %v950
        %v952 = vsel %vm378, %v757, 0.0
        %v953 = vadd.f32 %v951, %v952
        %v954 = vsel %vm378, %v761, 0.0
        %v955 = vadd.f32 %v953, %v954
        %v956 = vsel %vm378, %v765, 0.0
        %v957 = vadd.f32 %v955, %v956
        %v958 = vsel %vm378, %v769, 0.0
        %v959 = vadd.f32 %v957, %v958
        %v960 = vsel %vm378, %v646, 0.0
        %v961 = vsel %vm378, %v650, 0.0
        %v962 = vadd.f32 %v960, %v961
        %v963 = vsel %vm378, %v654, 0.0
        %v964 = vadd.f32 %v962, %v963
        %v965 = vsel %vm378, %v658, 0.0
        %v966 = vadd.f32 %v964, %v965
        %v967 = vsel %vm378, %v662, 0.0
        %v968 = vadd.f32 %v966, %v967
        %v969 = vsel %vm378, %v666, 0.0
        %v970 = vadd.f32 %v968, %v969
        %v971 = vsel %vm378, %v670, 0.0
        %v972 = vadd.f32 %v970, %v971
        %v973 = vsel %vm378, %v674, 0.0
        %v974 = vadd.f32 %v972, %v973
        %v975 = vsel %vm378, %v678, 0.0
        %v976 = vadd.f32 %v974, %v975
        %v977 = vsel %vm378, %v682, 0.0
        %v978 = vadd.f32 %v976, %v977
        %v979 = vsel %vm378, %v686, 0.0
        %v980 = vadd.f32 %v978, %v979
        %v981 = vsel %vm378, %v690, 0.0
        %v982 = vadd.f32 %v980, %v981
        %v983 = vsel %vm378, %v694, 0.0
        %v984 = vadd.f32 %v982, %v983
        %v985 = vsel %vm378, %v698, 0.0
        %v986 = vadd.f32 %v984, %v985
        %v987 = vsel %vm378, %v702, 0.0
        %v988 = vadd.f32 %v986, %v987
        %v989 = vsel %vm378, %v706, 0.0
        %v990 = vadd.f32 %v988, %v989
        %v991 = vsel %vm378, %v710, 0.0
        %v992 = vadd.f32 %v990, %v991
        %v993 = vsel %vm378, %v714, 0.0
        %v994 = vadd.f32 %v992, %v993
        %v995 = vsel %vm378, %v718, 0.0
        %v996 = vadd.f32 %v994, %v995
        %v997 = vsel %vm378, %v722, 0.0
        %v998 = vadd.f32 %v996, %v997
        %v999 = vsel %vm378, %v726, 0.0
        %v1000 = vadd.f32 %v998, %v999
        %v1001 = vsel %vm378, %v730, 0.0
        %v1002 = vadd.f32 %v1000, %v1001
        %v1003 = vsel %vm378, %v734, 0.0
        %v1004 = vadd.f32 %v1002, %v1003
        %v1005 = vsel %vm378, %v738, 0.0
        %v1006 = vadd.f32 %v1004, %v1005
        %v1007 = vsel %vm378, %v742, 0.0
        %v1008 = vadd.f32 %v1006, %v1007
        %v1009 = vsel %vm378, %v746, 0.0
        %v1010 = vadd.f32 %v1008, %v1009
        %v1011 = vsel %vm378, %v750, 0.0
        %v1012 = vadd.f32 %v1010, %v1011
        %v1013 = vsel %vm378, %v754, 0.0
        %v1014 = vadd.f32 %v1012, %v1013
        %v1015 = vsel %vm378, %v758, 0.0
        %v1016 = vadd.f32 %v1014, %v1015
        %v1017 = vsel %vm378, %v762, 0.0
        %v1018 = vadd.f32 %v1016, %v1017
        %v1019 = vsel %vm378, %v766, 0.0
        %v1020 = vadd.f32 %v1018, %v1019
        %v1021 = vsel %vm378, %v770, 0.0
        %v1022 = vadd.f32 %v1020, %v1021
        %v1023 = vadd.f32 %v639, %v833
        %v1024 = vadd.f32 %v640, %v896
        %v1025 = vadd.f32 %v641, %v959
        %v1026 = vadd.f32 %v642, %v1022
        %1027 = vst.msk [vmem:[#allocation3] sm:$0xff] %vm378, %v1023
        %1028 = vst.msk [vmem:[#allocation3 + $0x8] sm:$0xff] %vm378, %v1024
        %1029 = vst.msk [vmem:[#allocation3 + $0x10] sm:$0xff] %vm378, %v1025
        %1030 = vst.msk [vmem:[#allocation3 + $0x18] sm:$0xff] %vm378, %v1026
        // Predicated region
        $region37: #{_lambda_.5} parent=27 // pred_check
          %p1031 = pneg %p233
        $region38: #{_lambda_.5} parent=27 // pred_check_branch
          %1033 = sbr.rel (%p1031) target = $region40
        $region39: #{_lambda_.5} parent=27 // pred_region
          %v1034 = vld [vmem:[#allocation2] sm:$0xff]
          %v1035 = vld [vmem:[#allocation2 + $0x8] sm:$0xff]
          %v1036 = vld [vmem:[#allocation2 + $0x10] sm:$0xff]
          %v1037 = vld [vmem:[#allocation2 + $0x18] sm:$0xff]
          %v1038 = vsel %vm378, %v1034, 0.0
          %v1039 = vsel %vm378, %v1035, 0.0
          %v1040 = vadd.f32 %v1038, %v1039
          %v1041 = vsel %vm378, %v1036, 0.0
          %v1042 = vadd.f32 %v1040, %v1041
          %v1043 = vsel %vm378, %v1037, 0.0
          %v1044 = vadd.f32 %v1042, %v1043
          %1045 = vadd.xlane.f32.xlu0 %v1044
          %v1046 = vpop.xlane.xlu0 %1045
          %v1047 = vrot.slane %v1046, 4
          %v1048 = vadd.f32 %v1046, %v1047
          %v1049 = vrot.slane %v1048, 2
          %v1050 = vadd.f32 %v1048, %v1049
          %v1051 = vrot.slane %v1050, 1
          %v1052 = vadd.f32 %v1050, %v1051
          %s1053 = vtos %v1052
          %s1054 = scalar_lea.smem [#allocation7], %s24
          %1055 = sst [smem:[%s1054]] %s1053
          %v1056 = vld [vmem:[#allocation3] sm:$0xff]
          %v1057 = vld [vmem:[#allocation3 + $0x8] sm:$0xff]
          %v1058 = vld [vmem:[#allocation3 + $0x10] sm:$0xff]
          %v1059 = vld [vmem:[#allocation3 + $0x18] sm:$0xff]
          %v1060 = vsel %vm378, %v1056, 0.0
          %v1061 = vsel %vm378, %v1057, 0.0
          %v1062 = vadd.f32 %v1060, %v1061
          %v1063 = vsel %vm378, %v1058, 0.0
          %v1064 = vadd.f32 %v1062, %v1063
          %v1065 = vsel %vm378, %v1059, 0.0
          %v1066 = vadd.f32 %v1064, %v1065
          %1067 = vadd.xlane.f32.xlu0 %v1066
          %v1068 = vpop.xlane.xlu0 %1067
          %v1069 = vrot.slane %v1068, 4
          %v1070 = vadd.f32 %v1068, %v1069
          %v1071 = vrot.slane %v1070, 2
          %v1072 = vadd.f32 %v1070, %v1071
          %v1073 = vrot.slane %v1072, 1
          %v1074 = vadd.f32 %v1072, %v1073
          %s1075 = vtos %v1074
          %s1076 = scalar_lea.smem [#allocation8], %s24
          %1077 = sst [smem:[%s1076]] %s1075
        $region40: #{_lambda_.5} parent=27 // pred_fallthru
          _
        // Predicated region
        $region41: #{_lambda_.5} parent=27 // pred_check
          %p1078 = pneg %p101
        $region42: #{_lambda_.5} parent=27 // pred_check_branch
          %1080 = sbr.rel (%p1078) target = $region44
        $region43: #{_lambda_.5} parent=27 // pred_region
          %s1082 = ssub.s32 16, 16
          %1083 = vsyncadd [#allocation6], %s1082
          %1086 = dma.smem_to_hbm [#allocation7], 16, %s2, [#allocation6]
        $region44: #{_lambda_.5} parent=27 // pred_fallthru
          _
        // Predicated region
        $region45: #{_lambda_.5} parent=27 // pred_check
          %p1087 = pneg %p122
        $region46: #{_lambda_.5} parent=27 // pred_check_branch
          %1089 = sbr.rel (%p1087) target = $region48
        $region47: #{_lambda_.5} parent=27 // pred_region
          %s1091 = ssub.s32 16, 16
          %1092 = vsyncadd [#allocation9], %s1091
          %1095 = dma.smem_to_hbm [#allocation8], 16, %s3, [#allocation9]
        $region48: #{_lambda_.5} parent=27 // pred_fallthru
          _
        // Predicated region
        $region49: #{_lambda_.5} parent=27 // pred_check
          %p1096 = pneg %p101
        $region50: #{_lambda_.5} parent=27 // pred_check_branch
          %1098 = sbr.rel (%p1096) target = $region52
        $region51: #{_lambda_.5} parent=27 // pred_region
          %1099 = dma.done [#allocation6], 16
        $region52: #{_lambda_.5} parent=27 // pred_fallthru
          _
        // Predicated region
        $region53: #{_lambda_.5} parent=27 // pred_check
          %p1100 = pneg %p122
        $region54: #{_lambda_.5} parent=27 // pred_check_branch
          %1102 = sbr.rel (%p1100) target = $region56
        $region55: #{_lambda_.5} parent=27 // pred_region
          %1103 = dma.done [#allocation9], 16
        $region56: #{_lambda_.5} parent=27 // pred_fallthru
          _
        %1104 = sfence
      $region28: #{_lambda_.5} parent=5 // pred_fallthru
        _
      %p1105 = scmp.le.s32.totalorder 2, %s15
      // Predicated region
      $region57: #{_lambda_.5} parent=5 // pred_check
        %p1106 = pneg %p1105
      $region58: #{_lambda_.5} parent=5 // pred_check_branch
        %1108 = sbr.rel (%p1106) target = $region60
      $region59: #{_lambda_.5} parent=5 // pred_region
        %s1109 = ssub.s32 %s15, 2
      $region60: #{_lambda_.5} parent=5 // pred_fallthru
        _
    $region6: #{_lambda_.5} parent=1 // loop_footer
      %s19 = sadd.s32 1, %s15
    $region7: #{_lambda_.5} parent=1 // loop_footer_branch
      %14 = sbr.rel target = $region3
    $region8: #{_lambda_.5} parent=1 // loop_exit
      _
    %1110 = vsyncpa [#allocation5], 1
    %s1111 = scalar_lea.sflag [#allocation5], 1
    %1112 = vsyncpa %s1111, 1
    %1113 = vsyncpa [#allocation6], 1
    %s1114 = scalar_lea.sflag [#allocation6], 1
    %1115 = vsyncpa %s1114, 1
    %1116 = vsyncpa [#allocation9], 1

// kernel: _lambda_.6
$region0: #{_lambda_.6}
  #allocation0 [shape = 'u32[]', space=smem, size = 0x4, offset = 0x4, fixed_abs, tag = 'smem constant byte address 0x4 - core index']
  #allocation1 [shape = 'u32[144,128]{1,0:T(1,128)}', space=vmem, size = 0x12000, scoped, tag = 'internal scratch']
  %s0 = inlined_call_operand.hbm [shape: f32[32], index: 0, kind: input, shape index: {}]
  %s1 = inlined_call_operand.hbm [shape: f32[32], index: 1, kind: input, shape index: {}]
  %s2 = inlined_call_operand.hbm [shape: f32[32,32,32,32], index: 2, kind: input, shape index: {}]
  %s3 = inlined_call_operand.vmem [shape: f32[32,32,32,32], index: 3, kind: input, shape index: {}]
  %s4 = inlined_call_operand.hbm [shape: f32[32,32,32], index: 4, kind: input, shape index: {}]
  %s5 = inlined_call_operand.hbm [shape: f32[32,32,32], index: 5, kind: input, shape index: {}]
  %s6 = inlined_call_operand.hbm [shape: f32[32,32,32,32], index: 6, kind: output, shape index: {0}]
  %s7 = inlined_call_operand.hbm [shape: f32[32,32,32,32], index: 7, kind: output, shape index: {1}]
  %8 = xla_tuple %s6, %s7
  %s9 = sld [smem:[#allocation0]]
  $region85: #{_lambda_.6} parent=0
    _
  %s11 = ssub.s32 1, %s9
  %s12 = scalar_select 0, %s11, %s9
  $region1: #{_lambda_.6} parent=0
    #allocation2 [shape = 'u8[512]{0}', space=smem, size = 0x200, scoped, tag = 'input window, operand 0, single buffered']
    #allocation3 [shape = 's32[2]{0}', space=sflag, size = 0x8, scoped, tag = 'scoped memory for _lambda_.6']
    #allocation4 [shape = 's32[2]{0}', space=sflag, size = 0x8, scoped, tag = 'scoped memory for _lambda_.6']
    #allocation5 [shape = 's32[2]{0}', space=sflag, size = 0x8, scoped, tag = 'scoped memory for _lambda_.6']
    #allocation6 [shape = 'u8[512]{0}', space=smem, size = 0x200, scoped, tag = 'input window, operand 1, single buffered']
    #allocation7 [shape = 's32[1]{0}', space=sflag, size = 0x4, scoped, tag = 'scoped memory for _lambda_.6']
    #allocation8 [shape = 'u8[1048576]{0}', space=vmem, size = 0x100000, scoped, tag = 'input window, operand 2']
    #allocation9 [shape = 'u8[524288]{0}', space=vmem, size = 0x80000, scoped, tag = 'input window, operand 4, single buffered']
    #allocation10 [shape = 's32[1]{0}', space=sflag, size = 0x4, scoped, tag = 'scoped memory for _lambda_.6']
    #allocation11 [shape = 'u8[524288]{0}', space=vmem, size = 0x80000, scoped, tag = 'input window, operand 5, single buffered']
    #allocation12 [shape = 'u8[1048576]{0}', space=vmem, size = 0x100000, scoped, tag = 'output window, operand 0']
    #allocation13 [shape = 'u8[1048576]{0}', space=vmem, size = 0x100000, scoped, tag = 'output window, operand 1']
    #allocation14 [shape = 's32[2]{0}', space=sflag, size = 0x8, scoped, tag = 'scoped memory for _lambda_.6']
    %13 = vsyncpa [#allocation5], 0
    %14 = vsyncpa [#allocation7], 0
    %15 = vsyncpa [#allocation3], 0
    %s16 = scalar_lea.sflag [#allocation3], 1
    %17 = vsyncpa %s16, 0
    %18 = vsyncpa [#allocation10], 0
    %19 = vsyncpa [#allocation4], 0
    %s20 = scalar_lea.sflag [#allocation4], 1
    %21 = vsyncpa %s20, 0
    %22 = vsyncpa [#allocation14], 0
    %s23 = scalar_lea.sflag [#allocation14], 1
    %24 = vsyncpa %s23, 0
    loop: start=0, step=1, limit=34
    $region2: #{_lambda_.6} parent=1 // loop_pre_header
      _
    $region3: #{_lambda_.6} parent=1 // loop_header
      %s26 = sphi 0, %s30
      %p27 = scmp.ge.s32.totalorder %s26, 34
      %s33 = sphi 0, %s45
      %s34 = sphi 0, %s41
      %s35 = sphi 0, %s33
      %s36 = sphi 0, %s34
      %s37 = sphi 0, %s35
      %s38 = sphi 0, %s36
      %s46 = sphi 0, %s46
      %s48 = sphi 0, %s46
      %s49 = sphi 0, %s48
      %s63 = sphi 0, %s49
      %s67 = sphi 0, %s67
      %s69 = sphi 0, %s67
      %s70 = sphi 0, %s69
      %s84 = sphi 0, %s70
      %s92 = sphi 0, %s94
      %s95 = sphi 0, %s92
      %s96 = sphi 0, %s95
      %s112 = sphi 0, %s96
      %s120 = sphi 0, %s122
      %s123 = sphi 0, %s120
      %s124 = sphi 0, %s123
      %s140 = sphi 0, %s124
      %s146 = sphi 0, %s148
      %s149 = sphi 0, %s146
      %s150 = sphi 0, %s149
      %s166 = sphi 0, %s150
      %s172 = sphi 0, %s174
      %s175 = sphi 0, %s172
      %s176 = sphi 0, %s175
      %s192 = sphi 0, %s176
      %s200 = sphi 0, %s202
      %s203 = sphi 0, %s200
      %s204 = sphi 0, %s203
      %s220 = sphi 0, %s204
      %s228 = sphi 0, %s230
      %s231 = sphi 0, %s228
      %s232 = sphi 0, %s231
      %s248 = sphi 0, %s232
    $region4: #{_lambda_.6} parent=1 // loop_header_branch
      %29 = sbr.rel (%p27) target = $region8
    $region5: #{_lambda_.6} parent=1 // loop_body
      %s31 = ssub.s32 %s26, 1
      %s32 = ssub.s32 %s26, 2
      %s39 = sadd.s32 1, %s34
      %p40 = scmp.ge.s32.totalorder %s39, 32
      %s41 = scalar_select %p40, 0, %s39
      %s42 = sadd.s32 1, %s33
      %s43 = scalar_select %p40, %s42, %s33
      %p44 = scmp.ge.s32.totalorder %s43, 1
      %s45 = scalar_select %p44, 0, %s43
      %s47 = sadd.s32 %s46, 1
      %p50 = scmp.eq.s32.totalorder %s26, 31
      %p51 = scmp.ne.s32.totalorder %s46, %s48
      %p52 = scmp.eq.s32.totalorder %s26, 0
      %p53 = por %p51, %p52
      %p54 = scmp.ne.s32.totalorder %s46, %s48
      %p55 = scmp.eq.s32.totalorder %s31, 31
      %p56 = por %p54, %p55
      %p57 = scmp.ne.s32.totalorder %s48, %s49
      %p58 = scmp.eq.s32.totalorder %s31, 0
      %p59 = por %p57, %p58
      %p60 = scmp.ne.s32.totalorder %s48, %s49
      %p61 = scmp.eq.s32.totalorder %s32, 31
      %p62 = por %p60, %p61
      %p64 = scmp.ne.s32.totalorder %s49, %s63
      %p65 = scmp.eq.s32.totalorder %s32, 0
      %p66 = por %p64, %p65
      %s68 = sadd.s32 %s67, 1
      %p71 = scmp.eq.s32.totalorder %s26, 31
      %p72 = scmp.ne.s32.totalorder %s67, %s69
      %p73 = scmp.eq.s32.totalorder %s26, 0
      %p74 = por %p72, %p73
      %p75 = scmp.ne.s32.totalorder %s67, %s69
      %p76 = scmp.eq.s32.totalorder %s31, 31
      %p77 = por %p75, %p76
      %p78 = scmp.ne.s32.totalorder %s69, %s70
      %p79 = scmp.eq.s32.totalorder %s31, 0
      %p80 = por %p78, %p79
      %p81 = scmp.ne.s32.totalorder %s69, %s70
      %p82 = scmp.eq.s32.totalorder %s32, 31
      %p83 = por %p81, %p82
      %p85 = scmp.ne.s32.totalorder %s70, %s84
      %p86 = scmp.eq.s32.totalorder %s32, 0
      %p87 = por %p85, %p86
      %s88 = ssub.s32 %s34, %s41
      %s89 = ssub.s32 %s33, %s45
      %s90 = sor.u32 %s88, %s89
      %p91 = scmp.eq.s32.totalorder %s90, 0
      %s93 = sadd.s32 %s92, 1
      %s94 = scalar_select %p91, %s92, %s93
      %p97 = pneg %p91
      %p98 = scmp.eq.s32.totalorder %s26, 31
      %p99 = por %p97, %p98
      %p100 = scmp.ne.s32.totalorder %s92, %s95
      %p101 = scmp.eq.s32.totalorder %s26, 0
      %p102 = por %p100, %p101
      %p103 = scmp.ne.s32.totalorder %s92, %s95
      %p104 = scmp.eq.s32.totalorder %s31, 31
      %p105 = por %p103, %p104
      %p106 = scmp.ne.s32.totalorder %s95, %s96
      %p107 = scmp.eq.s32.totalorder %s31, 0
      %p108 = por %p106, %p107
      %p109 = scmp.ne.s32.totalorder %s95, %s96
      %p110 = scmp.eq.s32.totalorder %s32, 31
      %p111 = por %p109, %p110
      %p113 = scmp.ne.s32.totalorder %s96, %s112
      %p114 = scmp.eq.s32.totalorder %s32, 0
      %p115 = por %p113, %p114
      %s116 = ssub.s32 %s34, %s41
      %s117 = ssub.s32 %s33, %s45
      %s118 = sor.u32 %s116, %s117
      %p119 = scmp.eq.s32.totalorder %s118, 0
      %s121 = sadd.s32 %s120, 1
      %s122 = scalar_select %p119, %s120, %s121
      %p125 = pneg %p119
      %p126 = scmp.eq.s32.totalorder %s26, 31
      %p127 = por %p125, %p126
      %p128 = scmp.ne.s32.totalorder %s120, %s123
      %p129 = scmp.eq.s32.totalorder %s26, 0
      %p130 = por %p128, %p129
      %p131 = scmp.ne.s32.totalorder %s120, %s123
      %p132 = scmp.eq.s32.totalorder %s31, 31
      %p133 = por %p131, %p132
      %p134 = scmp.ne.s32.totalorder %s123, %s124
      %p135 = scmp.eq.s32.totalorder %s31, 0
      %p136 = por %p134, %p135
      %p137 = scmp.ne.s32.totalorder %s123, %s124
      %p138 = scmp.eq.s32.totalorder %s32, 31
      %p139 = por %p137, %p138
      %p141 = scmp.ne.s32.totalorder %s124, %s140
      %p142 = scmp.eq.s32.totalorder %s32, 0
      %p143 = por %p141, %p142
      %s144 = ssub.s32 %s33, %s45
      %p145 = scmp.eq.s32.totalorder %s144, 0
      %s147 = sadd.s32 %s146, 1
      %s148 = scalar_select %p145, %s146, %s147
      %p151 = pneg %p145
      %p152 = scmp.eq.s32.totalorder %s26, 31
      %p153 = por %p151, %p152
      %p154 = scmp.ne.s32.totalorder %s146, %s149
      %p155 = scmp.eq.s32.totalorder %s26, 0
      %p156 = por %p154, %p155
      %p157 = scmp.ne.s32.totalorder %s146, %s149
      %p158 = scmp.eq.s32.totalorder %s31, 31
      %p159 = por %p157, %p158
      %p160 = scmp.ne.s32.totalorder %s149, %s150
      %p161 = scmp.eq.s32.totalorder %s31, 0
      %p162 = por %p160, %p161
      %p163 = scmp.ne.s32.totalorder %s149, %s150
      %p164 = scmp.eq.s32.totalorder %s32, 31
      %p165 = por %p163, %p164
      %p167 = scmp.ne.s32.totalorder %s150, %s166
      %p168 = scmp.eq.s32.totalorder %s32, 0
      %p169 = por %p167, %p168
      %s170 = ssub.s32 %s33, %s45
      %p171 = scmp.eq.s32.totalorder %s170, 0
      %s173 = sadd.s32 %s172, 1
      %s174 = scalar_select %p171, %s172, %s173
      %p177 = pneg %p171
      %p178 = scmp.eq.s32.totalorder %s26, 31
      %p179 = por %p177, %p178
      %p180 = scmp.ne.s32.totalorder %s172, %s175
      %p181 = scmp.eq.s32.totalorder %s26, 0
      %p182 = por %p180, %p181
      %p183 = scmp.ne.s32.totalorder %s172, %s175
      %p184 = scmp.eq.s32.totalorder %s31, 31
      %p185 = por %p183, %p184
      %p186 = scmp.ne.s32.totalorder %s175, %s176
      %p187 = scmp.eq.s32.totalorder %s31, 0
      %p188 = por %p186, %p187
      %p189 = scmp.ne.s32.totalorder %s175, %s176
      %p190 = scmp.eq.s32.totalorder %s32, 31
      %p191 = por %p189, %p190
      %p193 = scmp.ne.s32.totalorder %s176, %s192
      %p194 = scmp.eq.s32.totalorder %s32, 0
      %p195 = por %p193, %p194
      %s196 = ssub.s32 %s34, %s41
      %s197 = ssub.s32 %s33, %s45
      %s198 = sor.u32 %s196, %s197
      %p199 = scmp.eq.s32.totalorder %s198, 0
      %s201 = sadd.s32 %s200, 1
      %s202 = scalar_select %p199, %s200, %s201
      %p205 = pneg %p199
      %p206 = scmp.eq.s32.totalorder %s26, 31
      %p207 = por %p205, %p206
      %p208 = scmp.ne.s32.totalorder %s200, %s203
      %p209 = scmp.eq.s32.totalorder %s26, 0
      %p210 = por %p208, %p209
      %p211 = scmp.ne.s32.totalorder %s200, %s203
      %p212 = scmp.eq.s32.totalorder %s31, 31
      %p213 = por %p211, %p212
      %p214 = scmp.ne.s32.totalorder %s203, %s204
      %p215 = scmp.eq.s32.totalorder %s31, 0
      %p216 = por %p214, %p215
      %p217 = scmp.ne.s32.totalorder %s203, %s204
      %p218 = scmp.eq.s32.totalorder %s32, 31
      %p219 = por %p217, %p218
      %p221 = scmp.ne.s32.totalorder %s204, %s220
      %p222 = scmp.eq.s32.totalorder %s32, 0
      %p223 = por %p221, %p222
      %s224 = ssub.s32 %s34, %s41
      %s225 = ssub.s32 %s33, %s45
      %s226 = sor.u32 %s224, %s225
      %p227 = scmp.eq.s32.totalorder %s226, 0
      %s229 = sadd.s32 %s228, 1
      %s230 = scalar_select %p227, %s228, %s229
      %p233 = pneg %p227
      %p234 = scmp.eq.s32.totalorder %s26, 31
      %p235 = por %p233, %p234
      %p236 = scmp.ne.s32.totalorder %s228, %s231
      %p237 = scmp.eq.s32.totalorder %s26, 0
      %p238 = por %p236, %p237
      %p239 = scmp.ne.s32.totalorder %s228, %s231
      %p240 = scmp.eq.s32.totalorder %s31, 31
      %p241 = por %p239, %p240
      %p242 = scmp.ne.s32.totalorder %s231, %s232
      %p243 = scmp.eq.s32.totalorder %s31, 0
      %p244 = por %p242, %p243
      %p245 = scmp.ne.s32.totalorder %s231, %s232
      %p246 = scmp.eq.s32.totalorder %s32, 31
      %p247 = por %p245, %p246
      %p249 = scmp.ne.s32.totalorder %s232, %s248
      %p250 = scmp.eq.s32.totalorder %s32, 0
      %p251 = por %p249, %p250
      %p252 = scmp.le.s32.totalorder 1, %s26
      %p253 = scmp.lt.s32.totalorder %s26, 33
      %p254 = pnand %p252, %p253
      %p255 = pneg %p254
      // Predicated region
      $region9: #{_lambda_.6} parent=5 // pred_check
        _
      $region10: #{_lambda_.6} parent=5 // pred_check_branch
        %257 = sbr.rel (%p254) target = $region12
      $region11: #{_lambda_.6} parent=5 // pred_region
        %s258 = ssub.s32 %s26, 1
        // Predicated region
        $region13: #{_lambda_.6} parent=11 // pred_check
          %p259 = pneg %p59
        $region14: #{_lambda_.6} parent=11 // pred_check_branch
          %261 = sbr.rel (%p259) target = $region16
        $region15: #{_lambda_.6} parent=11 // pred_region
          %s263 = ssub.s32 16, 16
          %264 = vsyncadd [#allocation5], %s263
          %267 = dma.hbm_to_smem %s0, 16, [#allocation2], [#allocation5]
        $region16: #{_lambda_.6} parent=11 // pred_fallthru
          _
        // Predicated region
        $region17: #{_lambda_.6} parent=11 // pred_check
          %p268 = pneg %p80
        $region18: #{_lambda_.6} parent=11 // pred_check_branch
          %270 = sbr.rel (%p268) target = $region20
        $region19: #{_lambda_.6} parent=11 // pred_region
          %s272 = ssub.s32 16, 16
          %273 = vsyncadd [#allocation7], %s272
          %276 = dma.hbm_to_smem %s1, 16, [#allocation6], [#allocation7]
        $region20: #{_lambda_.6} parent=11 // pred_fallthru
          _
        // Predicated region
        $region21: #{_lambda_.6} parent=11 // pred_check
          %p277 = pneg %p162
        $region22: #{_lambda_.6} parent=11 // pred_check_branch
          %279 = sbr.rel (%p277) target = $region24
        $region23: #{_lambda_.6} parent=11 // pred_region
          %s280 = smul.u32 32, %s35
          %s282 = ssub.s32 16384, 16384
          %283 = vsyncadd [#allocation10], %s282
          %s284 = smul.addr %s280, 4
          %s285 = smul.addr %s284, 128
          %s286 = scalar_lea.hbm %s4, %s285
          %s287 = sshll.u32 [#allocation9], 4
          %s288 = int_to_ptr.vmem [resolvable:$true] %s287
          %293 = dma.hbm_to_vmem [thread:$0]  %s286, 16384, %s288, [#allocation10], 128, 128, 8
        $region24: #{_lambda_.6} parent=11 // pred_fallthru
          _
        // Predicated region
        $region25: #{_lambda_.6} parent=11 // pred_check
          %p294 = pneg %p188
        $region26: #{_lambda_.6} parent=11 // pred_check_branch
          %296 = sbr.rel (%p294) target = $region28
        $region27: #{_lambda_.6} parent=11 // pred_region
          %s297 = smul.u32 32, %s35
          %s299 = ssub.s32 16384, 16384
          %300 = vsyncadd [#allocation10], %s299
          %s301 = smul.addr %s297, 4
          %s302 = smul.addr %s301, 128
          %s303 = scalar_lea.hbm %s5, %s302
          %s304 = sshll.u32 [#allocation11], 4
          %s305 = int_to_ptr.vmem [resolvable:$true] %s304
          %310 = dma.hbm_to_vmem [thread:$0]  %s303, 16384, %s305, [#allocation10], 128, 128, 8
        $region28: #{_lambda_.6} parent=11 // pred_fallthru
          _
      $region12: #{_lambda_.6} parent=5 // pred_fallthru
        _
      %p311 = scmp.lt.s32.totalorder %s26, 32
      // Predicated region
      $region29: #{_lambda_.6} parent=5 // pred_check
        %p312 = pneg %p311
      $region30: #{_lambda_.6} parent=5 // pred_check_branch
        %314 = sbr.rel (%p312) target = $region32
      $region31: #{_lambda_.6} parent=5 // pred_region
        // Predicated region
        $region33: #{_lambda_.6} parent=31 // pred_check
          %p315 = pneg %p102
        $region34: #{_lambda_.6} parent=31 // pred_check_branch
          %317 = sbr.rel (%p315) target = $region36
        $region35: #{_lambda_.6} parent=31 // pred_region
          %s318 = sand.u32 %s92, 1
          %s319 = scalar_lea.sflag [#allocation3], %s318
          %s320 = sand.u32 %s92, 1
          %s321 = smul.addr %s320, 1024
          %s322 = scalar_lea.vmem [#allocation8], %s321
          %s323 = smul.u32 32, %s33
          %s325 = ssub.s32 16384, 16384
          %326 = vsyncadd %s319, %s325
          %s327 = smul.addr %s323, 4
          %s328 = smul.addr %s34, 128
          %s329 = sadd.s32 %s327, %s328
          %s330 = smul.addr %s329, 128
          %s331 = scalar_lea.hbm %s2, %s330
          %s332 = sshll.u32 %s322, 4
          %s333 = int_to_ptr.vmem [resolvable:$true] %s332
          %338 = dma.hbm_to_vmem [thread:$0]  %s331, 16384, %s333, %s319, 128, 128, 8
        $region36: #{_lambda_.6} parent=31 // pred_fallthru
          _
        // Predicated region
        $region37: #{_lambda_.6} parent=31 // pred_check
          %p339 = pneg %p130
        $region38: #{_lambda_.6} parent=31 // pred_check_branch
          %341 = sbr.rel (%p339) target = $region40
        $region39: #{_lambda_.6} parent=31 // pred_region
          %s342 = smul.u32 32, %s33
          %p343 = scmp.lt.s32.totalorder %s34, 31
          %s344 = scalar_select %p343, %s34, 31
          %p345 = scmp.lt.s32.totalorder %s342, 31
          %s346 = scalar_select %p345, %s342, 31
          %s347 = smul.addr %s346, 4
          %s348 = smul.addr %s344, 128
          %s349 = sadd.s32 %s347, %s348
          %s350 = smul.addr %s349, 8
          %s351 = scalar_lea.vmem %s3, %s350
          %s352 = smul.u32 32, %s33
        $region40: #{_lambda_.6} parent=31 // pred_fallthru
          _
      $region32: #{_lambda_.6} parent=5 // pred_fallthru
        _
      %p353 = scmp.le.s32.totalorder 1, %s26
      %p354 = scmp.lt.s32.totalorder %s26, 33
      %p355 = pnand %p353, %p354
      %p356 = pneg %p355
      // Predicated region
      $region41: #{_lambda_.6} parent=5 // pred_check
        _
      $region42: #{_lambda_.6} parent=5 // pred_check_branch
        %358 = sbr.rel (%p355) target = $region44
      $region43: #{_lambda_.6} parent=5 // pred_region
        %s359 = ssub.s32 %s26, 1
        // Predicated region
        $region45: #{_lambda_.6} parent=43 // pred_check
          %p360 = pneg %p59
        $region46: #{_lambda_.6} parent=43 // pred_check_branch
          %362 = sbr.rel (%p360) target = $region48
        $region47: #{_lambda_.6} parent=43 // pred_region
          %363 = dma.done [#allocation5], 16
        $region48: #{_lambda_.6} parent=43 // pred_fallthru
          _
        // Predicated region
        $region49: #{_lambda_.6} parent=43 // pred_check
          %p364 = pneg %p80
        $region50: #{_lambda_.6} parent=43 // pred_check_branch
          %366 = sbr.rel (%p364) target = $region52
        $region51: #{_lambda_.6} parent=43 // pred_region
          %367 = dma.done [#allocation7], 16
        $region52: #{_lambda_.6} parent=43 // pred_fallthru
          _
        %s368 = sand.u32 %s95, 1
        %s369 = scalar_lea.sflag [#allocation3], %s368
        %s370 = sand.u32 %s95, 1
        %s371 = smul.addr %s370, 1024
        %s372 = scalar_lea.vmem [#allocation8], %s371
        // Predicated region
        $region53: #{_lambda_.6} parent=43 // pred_check
          %p373 = pneg %p108
        $region54: #{_lambda_.6} parent=43 // pred_check_branch
          %375 = sbr.rel (%p373) target = $region56
        $region55: #{_lambda_.6} parent=43 // pred_region
          %376 = dma.done %s369, 16384
        $region56: #{_lambda_.6} parent=43 // pred_fallthru
          _
        // Predicated region
        $region57: #{_lambda_.6} parent=43 // pred_check
          %p377 = pneg %p162
        $region58: #{_lambda_.6} parent=43 // pred_check_branch
          %379 = sbr.rel (%p377) target = $region60
        $region59: #{_lambda_.6} parent=43 // pred_region
          %380 = dma.done [#allocation10], 16384
        $region60: #{_lambda_.6} parent=43 // pred_fallthru
          _
        // Predicated region
        $region61: #{_lambda_.6} parent=43 // pred_check
          %p381 = pneg %p188
        $region62: #{_lambda_.6} parent=43 // pred_check_branch
          %383 = sbr.rel (%p381) target = $region64
        $region63: #{_lambda_.6} parent=43 // pred_region
          %384 = dma.done [#allocation10], 16384
        $region64: #{_lambda_.6} parent=43 // pred_fallthru
          _
        %385 = sfence
        %p386 = pneg %p59
        %p387 = pneg %p56
        %p388 = pneg %p80
        %p389 = pneg %p77
        %s390 = sand.u32 %s95, 1
        %s391 = scalar_lea.sflag [#allocation3], %s390
        %s392 = sand.u32 %s95, 1
        %s393 = smul.addr %s392, 1024
        %s394 = scalar_lea.vmem [#allocation8], %s393
        %p395 = pneg %p108
        %p396 = pneg %p105
        %s397 = smul.u32 32, %s35
        %p398 = scmp.lt.s32.totalorder %s36, 31
        %s399 = scalar_select %p398, %s36, 31
        %p400 = scmp.lt.s32.totalorder %s397, 31
        %s401 = scalar_select %p400, %s397, 31
        %s402 = smul.addr %s401, 4
        %s403 = smul.addr %s399, 128
        %s404 = sadd.s32 %s402, %s403
        %s405 = smul.addr %s404, 8
        %s406 = scalar_lea.vmem %s3, %s405
        %p407 = pneg %p136
        %p408 = pneg %p133
        %p409 = pneg %p162
        %p410 = pneg %p159
        %p411 = pneg %p188
        %p412 = pneg %p185
        %p413 = pneg %p216
        %p414 = pneg %p213
        %s415 = sand.u32 %s203, 1
        %s416 = scalar_lea.sflag [#allocation4], %s415
        %s417 = sand.u32 %s203, 1
        %s418 = smul.addr %s417, 1024
        %s419 = scalar_lea.vmem [#allocation12], %s418
        %p420 = pneg %p244
        %p421 = pneg %p241
        %s422 = sand.u32 %s231, 1
        %s423 = scalar_lea.sflag [#allocation14], %s422
        %s424 = sand.u32 %s231, 1
        %s425 = smul.addr %s424, 1024
        %s426 = scalar_lea.vmem [#allocation13], %s425
        %s427 = smul.u32 32, %s35
        %s428 = smul.u32 32, %s35
        %p429 = scmp.lt.s32.totalorder %s36, 31
        %s430 = scalar_select %p429, %s36, 31
        %p431 = scmp.lt.s32.totalorder %s428, 31
        %s432 = scalar_select %p431, %s428, 31
        %s433 = smul.addr %s432, 4
        %s434 = smul.addr %s430, 128
        %s435 = sadd.s32 %s433, %s434
        %s436 = smul.addr %s435, 8
        %s437 = scalar_lea.vmem %s3, %s436
        %s438 = smul.u32 32, %s35
        %s439 = smul.u32 32, %s35
        %s440 = smul.u32 32, %s35
        %s441 = smul.u32 32, %s35
        %s442 = smul.u32 32, %s35
        %v443 = vld [vmem:[%s372] sm:$0xff]
        %v444 = vld [vmem:[%s372 + $0x8] sm:$0xff]
        %v445 = vld [vmem:[%s372 + $0x10] sm:$0xff]
        %v446 = vld [vmem:[%s372 + $0x18] sm:$0xff]
        %v447 = vld [vmem:[%s372 + $0x20] sm:$0xff]
        %v448 = vld [vmem:[%s372 + $0x28] sm:$0xff]
        %v449 = vld [vmem:[%s372 + $0x30] sm:$0xff]
        %v450 = vld [vmem:[%s372 + $0x38] sm:$0xff]
        %v451 = vld [vmem:[%s372 + $0x40] sm:$0xff]
        %v452 = vld [vmem:[%s372 + $0x48] sm:$0xff]
        %v453 = vld [vmem:[%s372 + $0x50] sm:$0xff]
        %v454 = vld [vmem:[%s372 + $0x58] sm:$0xff]
        %v455 = vld [vmem:[%s372 + $0x60] sm:$0xff]
        %v456 = vld [vmem:[%s372 + $0x68] sm:$0xff]
        %v457 = vld [vmem:[%s372 + $0x70] sm:$0xff]
        %v458 = vld [vmem:[%s372 + $0x78] sm:$0xff]
        %v459 = vld [vmem:[%s372 + $0x80] sm:$0xff]
        %v460 = vld [vmem:[%s372 + $0x88] sm:$0xff]
        %v461 = vld [vmem:[%s372 + $0x90] sm:$0xff]
        %v462 = vld [vmem:[%s372 + $0x98] sm:$0xff]
        %v463 = vld [vmem:[%s372 + $0xa0] sm:$0xff]
        %v464 = vld [vmem:[%s372 + $0xa8] sm:$0xff]
        %v465 = vld [vmem:[%s372 + $0xb0] sm:$0xff]
        %v466 = vld [vmem:[%s372 + $0xb8] sm:$0xff]
        %v467 = vld [vmem:[%s372 + $0xc0] sm:$0xff]
        %v468 = vld [vmem:[%s372 + $0xc8] sm:$0xff]
        %v469 = vld [vmem:[%s372 + $0xd0] sm:$0xff]
        %v470 = vld [vmem:[%s372 + $0xd8] sm:$0xff]
        %v471 = vld [vmem:[%s372 + $0xe0] sm:$0xff]
        %v472 = vld [vmem:[%s372 + $0xe8] sm:$0xff]
        %v473 = vld [vmem:[%s372 + $0xf0] sm:$0xff]
        %v474 = vld [vmem:[%s372 + $0xf8] sm:$0xff]
        %v475 = vld [vmem:[%s372 + $0x100] sm:$0xff]
        %v476 = vld [vmem:[%s372 + $0x108] sm:$0xff]
        %v477 = vld [vmem:[%s372 + $0x110] sm:$0xff]
        %v478 = vld [vmem:[%s372 + $0x118] sm:$0xff]
        %v479 = vld [vmem:[%s372 + $0x120] sm:$0xff]
        %v480 = vld [vmem:[%s372 + $0x128] sm:$0xff]
        %v481 = vld [vmem:[%s372 + $0x130] sm:$0xff]
        %v482 = vld [vmem:[%s372 + $0x138] sm:$0xff]
        %v483 = vld [vmem:[%s372 + $0x140] sm:$0xff]
        %v484 = vld [vmem:[%s372 + $0x148] sm:$0xff]
        %v485 = vld [vmem:[%s372 + $0x150] sm:$0xff]
        %v486 = vld [vmem:[%s372 + $0x158] sm:$0xff]
        %v487 = vld [vmem:[%s372 + $0x160] sm:$0xff]
        %v488 = vld [vmem:[%s372 + $0x168] sm:$0xff]
        %v489 = vld [vmem:[%s372 + $0x170] sm:$0xff]
        %v490 = vld [vmem:[%s372 + $0x178] sm:$0xff]
        %v491 = vld [vmem:[%s372 + $0x180] sm:$0xff]
        %v492 = vld [vmem:[%s372 + $0x188] sm:$0xff]
        %v493 = vld [vmem:[%s372 + $0x190] sm:$0xff]
        %v494 = vld [vmem:[%s372 + $0x198] sm:$0xff]
        %v495 = vld [vmem:[%s372 + $0x1a0] sm:$0xff]
        %v496 = vld [vmem:[%s372 + $0x1a8] sm:$0xff]
        %v497 = vld [vmem:[%s372 + $0x1b0] sm:$0xff]
        %v498 = vld [vmem:[%s372 + $0x1b8] sm:$0xff]
        %v499 = vld [vmem:[%s372 + $0x1c0] sm:$0xff]
        %v500 = vld [vmem:[%s372 + $0x1c8] sm:$0xff]
        %v501 = vld [vmem:[%s372 + $0x1d0] sm:$0xff]
        %v502 = vld [vmem:[%s372 + $0x1d8] sm:$0xff]
        %v503 = vld [vmem:[%s372 + $0x1e0] sm:$0xff]
        %v504 = vld [vmem:[%s372 + $0x1e8] sm:$0xff]
        %v505 = vld [vmem:[%s372 + $0x1f0] sm:$0xff]
        %v506 = vld [vmem:[%s372 + $0x1f8] sm:$0xff]
        %v507 = vld [vmem:[%s372 + $0x200] sm:$0xff]
        %v508 = vld [vmem:[%s372 + $0x208] sm:$0xff]
        %v509 = vld [vmem:[%s372 + $0x210] sm:$0xff]
        %v510 = vld [vmem:[%s372 + $0x218] sm:$0xff]
        %v511 = vld [vmem:[%s372 + $0x220] sm:$0xff]
        %v512 = vld [vmem:[%s372 + $0x228] sm:$0xff]
        %v513 = vld [vmem:[%s372 + $0x230] sm:$0xff]
        %v514 = vld [vmem:[%s372 + $0x238] sm:$0xff]
        %v515 = vld [vmem:[%s372 + $0x240] sm:$0xff]
        %v516 = vld [vmem:[%s372 + $0x248] sm:$0xff]
        %v517 = vld [vmem:[%s372 + $0x250] sm:$0xff]
        %v518 = vld [vmem:[%s372 + $0x258] sm:$0xff]
        %v519 = vld [vmem:[%s372 + $0x260] sm:$0xff]
        %v520 = vld [vmem:[%s372 + $0x268] sm:$0xff]
        %v521 = vld [vmem:[%s372 + $0x270] sm:$0xff]
        %v522 = vld [vmem:[%s372 + $0x278] sm:$0xff]
        %v523 = vld [vmem:[%s372 + $0x280] sm:$0xff]
        %v524 = vld [vmem:[%s372 + $0x288] sm:$0xff]
        %v525 = vld [vmem:[%s372 + $0x290] sm:$0xff]
        %v526 = vld [vmem:[%s372 + $0x298] sm:$0xff]
        %v527 = vld [vmem:[%s372 + $0x2a0] sm:$0xff]
        %v528 = vld [vmem:[%s372 + $0x2a8] sm:$0xff]
        %v529 = vld [vmem:[%s372 + $0x2b0] sm:$0xff]
        %v530 = vld [vmem:[%s372 + $0x2b8] sm:$0xff]
        %v531 = vld [vmem:[%s372 + $0x2c0] sm:$0xff]
        %v532 = vld [vmem:[%s372 + $0x2c8] sm:$0xff]
        %v533 = vld [vmem:[%s372 + $0x2d0] sm:$0xff]
        %v534 = vld [vmem:[%s372 + $0x2d8] sm:$0xff]
        %v535 = vld [vmem:[%s372 + $0x2e0] sm:$0xff]
        %v536 = vld [vmem:[%s372 + $0x2e8] sm:$0xff]
        %v537 = vld [vmem:[%s372 + $0x2f0] sm:$0xff]
        %v538 = vld [vmem:[%s372 + $0x2f8] sm:$0xff]
        %v539 = vld [vmem:[%s372 + $0x300] sm:$0xff]
        %v540 = vld [vmem:[%s372 + $0x308] sm:$0xff]
        %v541 = vld [vmem:[%s372 + $0x310] sm:$0xff]
        %v542 = vld [vmem:[%s372 + $0x318] sm:$0xff]
        %v543 = vld [vmem:[%s372 + $0x320] sm:$0xff]
        %v544 = vld [vmem:[%s372 + $0x328] sm:$0xff]
        %v545 = vld [vmem:[%s372 + $0x330] sm:$0xff]
        %v546 = vld [vmem:[%s372 + $0x338] sm:$0xff]
        %v547 = vld [vmem:[%s372 + $0x340] sm:$0xff]
        %v548 = vld [vmem:[%s372 + $0x348] sm:$0xff]
        %v549 = vld [vmem:[%s372 + $0x350] sm:$0xff]
        %v550 = vld [vmem:[%s372 + $0x358] sm:$0xff]
        %v551 = vld [vmem:[%s372 + $0x360] sm:$0xff]
        %v552 = vld [vmem:[%s372 + $0x368] sm:$0xff]
        %v553 = vld [vmem:[%s372 + $0x370] sm:$0xff]
        %v554 = vld [vmem:[%s372 + $0x378] sm:$0xff]
        %v555 = vld [vmem:[%s372 + $0x380] sm:$0xff]
        %v556 = vld [vmem:[%s372 + $0x388] sm:$0xff]
        %v557 = vld [vmem:[%s372 + $0x390] sm:$0xff]
        %v558 = vld [vmem:[%s372 + $0x398] sm:$0xff]
        %v559 = vld [vmem:[%s372 + $0x3a0] sm:$0xff]
        %v560 = vld [vmem:[%s372 + $0x3a8] sm:$0xff]
        %v561 = vld [vmem:[%s372 + $0x3b0] sm:$0xff]
        %v562 = vld [vmem:[%s372 + $0x3b8] sm:$0xff]
        %v563 = vld [vmem:[%s372 + $0x3c0] sm:$0xff]
        %v564 = vld [vmem:[%s372 + $0x3c8] sm:$0xff]
        %v565 = vld [vmem:[%s372 + $0x3d0] sm:$0xff]
        %v566 = vld [vmem:[%s372 + $0x3d8] sm:$0xff]
        %v567 = vld [vmem:[%s372 + $0x3e0] sm:$0xff]
        %v568 = vld [vmem:[%s372 + $0x3e8] sm:$0xff]
        %v569 = vld [vmem:[%s372 + $0x3f0] sm:$0xff]
        %v570 = vld [vmem:[%s372 + $0x3f8] sm:$0xff]
        %s571 = sld [smem:[#allocation2 + %s36]]
        %v572 = vstv %s571
        %v573 = vmul.f32 %v443, %v572
        %v574 = vmul.f32 %v444, %v572
        %v575 = vmul.f32 %v445, %v572
        %v576 = vmul.f32 %v446, %v572
        %v577 = vmul.f32 %v447, %v572
        %v578 = vmul.f32 %v448, %v572
        %v579 = vmul.f32 %v449, %v572
        %v580 = vmul.f32 %v450, %v572
        %v581 = vmul.f32 %v451, %v572
        %v582 = vmul.f32 %v452, %v572
        %v583 = vmul.f32 %v453, %v572
        %v584 = vmul.f32 %v454, %v572
        %v585 = vmul.f32 %v455, %v572
        %v586 = vmul.f32 %v456, %v572
        %v587 = vmul.f32 %v457, %v572
        %v588 = vmul.f32 %v458, %v572
        %v589 = vmul.f32 %v459, %v572
        %v590 = vmul.f32 %v460, %v572
        %v591 = vmul.f32 %v461, %v572
        %v592 = vmul.f32 %v462, %v572
        %v593 = vmul.f32 %v463, %v572
        %v594 = vmul.f32 %v464, %v572
        %v595 = vmul.f32 %v465, %v572
        %v596 = vmul.f32 %v466, %v572
        %v597 = vmul.f32 %v467, %v572
        %v598 = vmul.f32 %v468, %v572
        %v599 = vmul.f32 %v469, %v572
        %v600 = vmul.f32 %v470, %v572
        %v601 = vmul.f32 %v471, %v572
        %v602 = vmul.f32 %v472, %v572
        %v603 = vmul.f32 %v473, %v572
        %v604 = vmul.f32 %v474, %v572
        %v605 = vmul.f32 %v475, %v572
        %v606 = vmul.f32 %v476, %v572
        %v607 = vmul.f32 %v477, %v572
        %v608 = vmul.f32 %v478, %v572
        %v609 = vmul.f32 %v479, %v572
        %v610 = vmul.f32 %v480, %v572
        %v611 = vmul.f32 %v481, %v572
        %v612 = vmul.f32 %v482, %v572
        %v613 = vmul.f32 %v483, %v572
        %v614 = vmul.f32 %v484, %v572
        %v615 = vmul.f32 %v485, %v572
        %v616 = vmul.f32 %v486, %v572
        %v617 = vmul.f32 %v487, %v572
        %v618 = vmul.f32 %v488, %v572
        %v619 = vmul.f32 %v489, %v572
        %v620 = vmul.f32 %v490, %v572
        %v621 = vmul.f32 %v491, %v572
        %v622 = vmul.f32 %v492, %v572
        %v623 = vmul.f32 %v493, %v572
        %v624 = vmul.f32 %v494, %v572
        %v625 = vmul.f32 %v495, %v572
        %v626 = vmul.f32 %v496, %v572
        %v627 = vmul.f32 %v497, %v572
        %v628 = vmul.f32 %v498, %v572
        %v629 = vmul.f32 %v499, %v572
        %v630 = vmul.f32 %v500, %v572
        %v631 = vmul.f32 %v501, %v572
        %v632 = vmul.f32 %v502, %v572
        %v633 = vmul.f32 %v503, %v572
        %v634 = vmul.f32 %v504, %v572
        %v635 = vmul.f32 %v505, %v572
        %v636 = vmul.f32 %v506, %v572
        %v637 = vmul.f32 %v507, %v572
        %v638 = vmul.f32 %v508, %v572
        %v639 = vmul.f32 %v509, %v572
        %v640 = vmul.f32 %v510, %v572
        %v641 = vmul.f32 %v511, %v572
        %v642 = vmul.f32 %v512, %v572
        %v643 = vmul.f32 %v513, %v572
        %v644 = vmul.f32 %v514, %v572
        %v645 = vmul.f32 %v515, %v572
        %v646 = vmul.f32 %v516, %v572
        %v647 = vmul.f32 %v517, %v572
        %v648 = vmul.f32 %v518, %v572
        %v649 = vmul.f32 %v519, %v572
        %v650 = vmul.f32 %v520, %v572
        %v651 = vmul.f32 %v521, %v572
        %v652 = vmul.f32 %v522, %v572
        %v653 = vmul.f32 %v523, %v572
        %v654 = vmul.f32 %v524, %v572
        %v655 = vmul.f32 %v525, %v572
        %v656 = vmul.f32 %v526, %v572
        %v657 = vmul.f32 %v527, %v572
        %v658 = vmul.f32 %v528, %v572
        %v659 = vmul.f32 %v529, %v572
        %v660 = vmul.f32 %v530, %v572
        %v661 = vmul.f32 %v531, %v572
        %v662 = vmul.f32 %v532, %v572
        %v663 = vmul.f32 %v533, %v572
        %v664 = vmul.f32 %v534, %v572
        %v665 = vmul.f32 %v535, %v572
        %v666 = vmul.f32 %v536, %v572
        %v667 = vmul.f32 %v537, %v572
        %v668 = vmul.f32 %v538, %v572
        %v669 = vmul.f32 %v539, %v572
        %v670 = vmul.f32 %v540, %v572
        %v671 = vmul.f32 %v541, %v572
        %v672 = vmul.f32 %v542, %v572
        %v673 = vmul.f32 %v543, %v572
        %v674 = vmul.f32 %v544, %v572
        %v675 = vmul.f32 %v545, %v572
        %v676 = vmul.f32 %v546, %v572
        %v677 = vmul.f32 %v547, %v572
        %v678 = vmul.f32 %v548, %v572
        %v679 = vmul.f32 %v549, %v572
        %v680 = vmul.f32 %v550, %v572
        %v681 = vmul.f32 %v551, %v572
        %v682 = vmul.f32 %v552, %v572
        %v683 = vmul.f32 %v553, %v572
        %v684 = vmul.f32 %v554, %v572
        %v685 = vmul.f32 %v555, %v572
        %v686 = vmul.f32 %v556, %v572
        %v687 = vmul.f32 %v557, %v572
        %v688 = vmul.f32 %v558, %v572
        %v689 = vmul.f32 %v559, %v572
        %v690 = vmul.f32 %v560, %v572
        %v691 = vmul.f32 %v561, %v572
        %v692 = vmul.f32 %v562, %v572
        %v693 = vmul.f32 %v563, %v572
        %v694 = vmul.f32 %v564, %v572
        %v695 = vmul.f32 %v565, %v572
        %v696 = vmul.f32 %v566, %v572
        %v697 = vmul.f32 %v567, %v572
        %v698 = vmul.f32 %v568, %v572
        %v699 = vmul.f32 %v569, %v572
        %v700 = vmul.f32 %v570, %v572
        %v701 = vld [vmem:[%s437] sm:$0xff]
        %v702 = vld [vmem:[%s437 + $0x8] sm:$0xff]
        %v703 = vld [vmem:[%s437 + $0x10] sm:$0xff]
        %v704 = vld [vmem:[%s437 + $0x18] sm:$0xff]
        %v705 = vld [vmem:[%s437 + $0x20] sm:$0xff]
        %v706 = vld [vmem:[%s437 + $0x28] sm:$0xff]
        %v707 = vld [vmem:[%s437 + $0x30] sm:$0xff]
        %v708 = vld [vmem:[%s437 + $0x38] sm:$0xff]
        %v709 = vld [vmem:[%s437 + $0x40] sm:$0xff]
        %v710 = vld [vmem:[%s437 + $0x48] sm:$0xff]
        %v711 = vld [vmem:[%s437 + $0x50] sm:$0xff]
        %v712 = vld [vmem:[%s437 + $0x58] sm:$0xff]
        %v713 = vld [vmem:[%s437 + $0x60] sm:$0xff]
        %v714 = vld [vmem:[%s437 + $0x68] sm:$0xff]
        %v715 = vld [vmem:[%s437 + $0x70] sm:$0xff]
        %v716 = vld [vmem:[%s437 + $0x78] sm:$0xff]
        %v717 = vld [vmem:[%s437 + $0x80] sm:$0xff]
        %v718 = vld [vmem:[%s437 + $0x88] sm:$0xff]
        %v719 = vld [vmem:[%s437 + $0x90] sm:$0xff]
        %v720 = vld [vmem:[%s437 + $0x98] sm:$0xff]
        %v721 = vld [vmem:[%s437 + $0xa0] sm:$0xff]
        %v722 = vld [vmem:[%s437 + $0xa8] sm:$0xff]
        %v723 = vld [vmem:[%s437 + $0xb0] sm:$0xff]
        %v724 = vld [vmem:[%s437 + $0xb8] sm:$0xff]
        %v725 = vld [vmem:[%s437 + $0xc0] sm:$0xff]
        %v726 = vld [vmem:[%s437 + $0xc8] sm:$0xff]
        %v727 = vld [vmem:[%s437 + $0xd0] sm:$0xff]
        %v728 = vld [vmem:[%s437 + $0xd8] sm:$0xff]
        %v729 = vld [vmem:[%s437 + $0xe0] sm:$0xff]
        %v730 = vld [vmem:[%s437 + $0xe8] sm:$0xff]
        %v731 = vld [vmem:[%s437 + $0xf0] sm:$0xff]
        %v732 = vld [vmem:[%s437 + $0xf8] sm:$0xff]
        %v733 = vld [vmem:[%s437 + $0x100] sm:$0xff]
        %v734 = vld [vmem:[%s437 + $0x108] sm:$0xff]
        %v735 = vld [vmem:[%s437 + $0x110] sm:$0xff]
        %v736 = vld [vmem:[%s437 + $0x118] sm:$0xff]
        %v737 = vld [vmem:[%s437 + $0x120] sm:$0xff]
        %v738 = vld [vmem:[%s437 + $0x128] sm:$0xff]
        %v739 = vld [vmem:[%s437 + $0x130] sm:$0xff]
        %v740 = vld [vmem:[%s437 + $0x138] sm:$0xff]
        %v741 = vld [vmem:[%s437 + $0x140] sm:$0xff]
        %v742 = vld [vmem:[%s437 + $0x148] sm:$0xff]
        %v743 = vld [vmem:[%s437 + $0x150] sm:$0xff]
        %v744 = vld [vmem:[%s437 + $0x158] sm:$0xff]
        %v745 = vld [vmem:[%s437 + $0x160] sm:$0xff]
        %v746 = vld [vmem:[%s437 + $0x168] sm:$0xff]
        %v747 = vld [vmem:[%s437 + $0x170] sm:$0xff]
        %v748 = vld [vmem:[%s437 + $0x178] sm:$0xff]
        %v749 = vld [vmem:[%s437 + $0x180] sm:$0xff]
        %v750 = vld [vmem:[%s437 + $0x188] sm:$0xff]
        %v751 = vld [vmem:[%s437 + $0x190] sm:$0xff]
        %v752 = vld [vmem:[%s437 + $0x198] sm:$0xff]
        %v753 = vld [vmem:[%s437 + $0x1a0] sm:$0xff]
        %v754 = vld [vmem:[%s437 + $0x1a8] sm:$0xff]
        %v755 = vld [vmem:[%s437 + $0x1b0] sm:$0xff]
        %v756 = vld [vmem:[%s437 + $0x1b8] sm:$0xff]
        %v757 = vld [vmem:[%s437 + $0x1c0] sm:$0xff]
        %v758 = vld [vmem:[%s437 + $0x1c8] sm:$0xff]
        %v759 = vld [vmem:[%s437 + $0x1d0] sm:$0xff]
        %v760 = vld [vmem:[%s437 + $0x1d8] sm:$0xff]
        %v761 = vld [vmem:[%s437 + $0x1e0] sm:$0xff]
        %v762 = vld [vmem:[%s437 + $0x1e8] sm:$0xff]
        %v763 = vld [vmem:[%s437 + $0x1f0] sm:$0xff]
        %v764 = vld [vmem:[%s437 + $0x1f8] sm:$0xff]
        %v765 = vld [vmem:[%s437 + $0x200] sm:$0xff]
        %v766 = vld [vmem:[%s437 + $0x208] sm:$0xff]
        %v767 = vld [vmem:[%s437 + $0x210] sm:$0xff]
        %v768 = vld [vmem:[%s437 + $0x218] sm:$0xff]
        %v769 = vld [vmem:[%s437 + $0x220] sm:$0xff]
        %v770 = vld [vmem:[%s437 + $0x228] sm:$0xff]
        %v771 = vld [vmem:[%s437 + $0x230] sm:$0xff]
        %v772 = vld [vmem:[%s437 + $0x238] sm:$0xff]
        %v773 = vld [vmem:[%s437 + $0x240] sm:$0xff]
        %v774 = vld [vmem:[%s437 + $0x248] sm:$0xff]
        %v775 = vld [vmem:[%s437 + $0x250] sm:$0xff]
        %v776 = vld [vmem:[%s437 + $0x258] sm:$0xff]
        %v777 = vld [vmem:[%s437 + $0x260] sm:$0xff]
        %v778 = vld [vmem:[%s437 + $0x268] sm:$0xff]
        %v779 = vld [vmem:[%s437 + $0x270] sm:$0xff]
        %v780 = vld [vmem:[%s437 + $0x278] sm:$0xff]
        %v781 = vld [vmem:[%s437 + $0x280] sm:$0xff]
        %v782 = vld [vmem:[%s437 + $0x288] sm:$0xff]
        %v783 = vld [vmem:[%s437 + $0x290] sm:$0xff]
        %v784 = vld [vmem:[%s437 + $0x298] sm:$0xff]
        %v785 = vld [vmem:[%s437 + $0x2a0] sm:$0xff]
        %v786 = vld [vmem:[%s437 + $0x2a8] sm:$0xff]
        %v787 = vld [vmem:[%s437 + $0x2b0] sm:$0xff]
        %v788 = vld [vmem:[%s437 + $0x2b8] sm:$0xff]
        %v789 = vld [vmem:[%s437 + $0x2c0] sm:$0xff]
        %v790 = vld [vmem:[%s437 + $0x2c8] sm:$0xff]
        %v791 = vld [vmem:[%s437 + $0x2d0] sm:$0xff]
        %v792 = vld [vmem:[%s437 + $0x2d8] sm:$0xff]
        %v793 = vld [vmem:[%s437 + $0x2e0] sm:$0xff]
        %v794 = vld [vmem:[%s437 + $0x2e8] sm:$0xff]
        %v795 = vld [vmem:[%s437 + $0x2f0] sm:$0xff]
        %v796 = vld [vmem:[%s437 + $0x2f8] sm:$0xff]
        %v797 = vld [vmem:[%s437 + $0x300] sm:$0xff]
        %v798 = vld [vmem:[%s437 + $0x308] sm:$0xff]
        %v799 = vld [vmem:[%s437 + $0x310] sm:$0xff]
        %v800 = vld [vmem:[%s437 + $0x318] sm:$0xff]
        %v801 = vld [vmem:[%s437 + $0x320] sm:$0xff]
        %v802 = vld [vmem:[%s437 + $0x328] sm:$0xff]
        %v803 = vld [vmem:[%s437 + $0x330] sm:$0xff]
        %v804 = vld [vmem:[%s437 + $0x338] sm:$0xff]
        %v805 = vld [vmem:[%s437 + $0x340] sm:$0xff]
        %v806 = vld [vmem:[%s437 + $0x348] sm:$0xff]
        %v807 = vld [vmem:[%s437 + $0x350] sm:$0xff]
        %v808 = vld [vmem:[%s437 + $0x358] sm:$0xff]
        %v809 = vld [vmem:[%s437 + $0x360] sm:$0xff]
        %v810 = vld [vmem:[%s437 + $0x368] sm:$0xff]
        %v811 = vld [vmem:[%s437 + $0x370] sm:$0xff]
        %v812 = vld [vmem:[%s437 + $0x378] sm:$0xff]
        %v813 = vld [vmem:[%s437 + $0x380] sm:$0xff]
        %v814 = vld [vmem:[%s437 + $0x388] sm:$0xff]
        %v815 = vld [vmem:[%s437 + $0x390] sm:$0xff]
        %v816 = vld [vmem:[%s437 + $0x398] sm:$0xff]
        %v817 = vld [vmem:[%s437 + $0x3a0] sm:$0xff]
        %v818 = vld [vmem:[%s437 + $0x3a8] sm:$0xff]
        %v819 = vld [vmem:[%s437 + $0x3b0] sm:$0xff]
        %v820 = vld [vmem:[%s437 + $0x3b8] sm:$0xff]
        %v821 = vld [vmem:[%s437 + $0x3c0] sm:$0xff]
        %v822 = vld [vmem:[%s437 + $0x3c8] sm:$0xff]
        %v823 = vld [vmem:[%s437 + $0x3d0] sm:$0xff]
        %v824 = vld [vmem:[%s437 + $0x3d8] sm:$0xff]
        %v825 = vld [vmem:[%s437 + $0x3e0] sm:$0xff]
        %v826 = vld [vmem:[%s437 + $0x3e8] sm:$0xff]
        %v827 = vld [vmem:[%s437 + $0x3f0] sm:$0xff]
        %v828 = vld [vmem:[%s437 + $0x3f8] sm:$0xff]
        %s829 = sld [smem:[#allocation6 + %s36]]
        %v830 = vstv %s829
        %v831 = vmul.f32 %v701, %v830
        %v832 = vmul.f32 %v702, %v830
        %v833 = vmul.f32 %v703, %v830
        %v834 = vmul.f32 %v704, %v830
        %v835 = vmul.f32 %v705, %v830
        %v836 = vmul.f32 %v706, %v830
        %v837 = vmul.f32 %v707, %v830
        %v838 = vmul.f32 %v708, %v830
        %v839 = vmul.f32 %v709, %v830
        %v840 = vmul.f32 %v710, %v830
        %v841 = vmul.f32 %v711, %v830
        %v842 = vmul.f32 %v712, %v830
        %v843 = vmul.f32 %v713, %v830
        %v844 = vmul.f32 %v714, %v830
        %v845 = vmul.f32 %v715, %v830
        %v846 = vmul.f32 %v716, %v830
        %v847 = vmul.f32 %v717, %v830
        %v848 = vmul.f32 %v718, %v830
        %v849 = vmul.f32 %v719, %v830
        %v850 = vmul.f32 %v720, %v830
        %v851 = vmul.f32 %v721, %v830
        %v852 = vmul.f32 %v722, %v830
        %v853 = vmul.f32 %v723, %v830
        %v854 = vmul.f32 %v724, %v830
        %v855 = vmul.f32 %v725, %v830
        %v856 = vmul.f32 %v726, %v830
        %v857 = vmul.f32 %v727, %v830
        %v858 = vmul.f32 %v728, %v830
        %v859 = vmul.f32 %v729, %v830
        %v860 = vmul.f32 %v730, %v830
        %v861 = vmul.f32 %v731, %v830
        %v862 = vmul.f32 %v732, %v830
        %v863 = vmul.f32 %v733, %v830
        %v864 = vmul.f32 %v734, %v830
        %v865 = vmul.f32 %v735, %v830
        %v866 = vmul.f32 %v736, %v830
        %v867 = vmul.f32 %v737, %v830
        %v868 = vmul.f32 %v738, %v830
        %v869 = vmul.f32 %v739, %v830
        %v870 = vmul.f32 %v740, %v830
        %v871 = vmul.f32 %v741, %v830
        %v872 = vmul.f32 %v742, %v830
        %v873 = vmul.f32 %v743, %v830
        %v874 = vmul.f32 %v744, %v830
        %v875 = vmul.f32 %v745, %v830
        %v876 = vmul.f32 %v746, %v830
        %v877 = vmul.f32 %v747, %v830
        %v878 = vmul.f32 %v748, %v830
        %v879 = vmul.f32 %v749, %v830
        %v880 = vmul.f32 %v750, %v830
        %v881 = vmul.f32 %v751, %v830
        %v882 = vmul.f32 %v752, %v830
        %v883 = vmul.f32 %v753, %v830
        %v884 = vmul.f32 %v754, %v830
        %v885 = vmul.f32 %v755, %v830
        %v886 = vmul.f32 %v756, %v830
        %v887 = vmul.f32 %v757, %v830
        %v888 = vmul.f32 %v758, %v830
        %v889 = vmul.f32 %v759, %v830
        %v890 = vmul.f32 %v760, %v830
        %v891 = vmul.f32 %v761, %v830
        %v892 = vmul.f32 %v762, %v830
        %v893 = vmul.f32 %v763, %v830
        %v894 = vmul.f32 %v764, %v830
        %v895 = vmul.f32 %v765, %v830
        %v896 = vmul.f32 %v766, %v830
        %v897 = vmul.f32 %v767, %v830
        %v898 = vmul.f32 %v768, %v830
        %v899 = vmul.f32 %v769, %v830
        %v900 = vmul.f32 %v770, %v830
        %v901 = vmul.f32 %v771, %v830
        %v902 = vmul.f32 %v772, %v830
        %v903 = vmul.f32 %v773, %v830
        %v904 = vmul.f32 %v774, %v830
        %v905 = vmul.f32 %v775, %v830
        %v906 = vmul.f32 %v776, %v830
        %v907 = vmul.f32 %v777, %v830
        %v908 = vmul.f32 %v778, %v830
        %v909 = vmul.f32 %v779, %v830
        %v910 = vmul.f32 %v780, %v830
        %v911 = vmul.f32 %v781, %v830
        %v912 = vmul.f32 %v782, %v830
        %v913 = vmul.f32 %v783, %v830
        %v914 = vmul.f32 %v784, %v830
        %v915 = vmul.f32 %v785, %v830
        %v916 = vmul.f32 %v786, %v830
        %v917 = vmul.f32 %v787, %v830
        %v918 = vmul.f32 %v788, %v830
        %v919 = vmul.f32 %v789, %v830
        %v920 = vmul.f32 %v790, %v830
        %v921 = vmul.f32 %v791, %v830
        %v922 = vmul.f32 %v792, %v830
        %v923 = vmul.f32 %v793, %v830
        %v924 = vmul.f32 %v794, %v830
        %v925 = vmul.f32 %v795, %v830
        %v926 = vmul.f32 %v796, %v830
        %v927 = vmul.f32 %v797, %v830
        %v928 = vmul.f32 %v798, %v830
        %v929 = vmul.f32 %v799, %v830
        %v930 = vmul.f32 %v800, %v830
        %v931 = vmul.f32 %v801, %v830
        %v932 = vmul.f32 %v802, %v830
        %v933 = vmul.f32 %v803, %v830
        %v934 = vmul.f32 %v804, %v830
        %v935 = vmul.f32 %v805, %v830
        %v936 = vmul.f32 %v806, %v830
        %v937 = vmul.f32 %v807, %v830
        %v938 = vmul.f32 %v808, %v830
        %v939 = vmul.f32 %v809, %v830
        %v940 = vmul.f32 %v810, %v830
        %v941 = vmul.f32 %v811, %v830
        %v942 = vmul.f32 %v812, %v830
        %v943 = vmul.f32 %v813, %v830
        %v944 = vmul.f32 %v814, %v830
        %v945 = vmul.f32 %v815, %v830
        %v946 = vmul.f32 %v816, %v830
        %v947 = vmul.f32 %v817, %v830
        %v948 = vmul.f32 %v818, %v830
        %v949 = vmul.f32 %v819, %v830
        %v950 = vmul.f32 %v820, %v830
        %v951 = vmul.f32 %v821, %v830
        %v952 = vmul.f32 %v822, %v830
        %v953 = vmul.f32 %v823, %v830
        %v954 = vmul.f32 %v824, %v830
        %v955 = vmul.f32 %v825, %v830
        %v956 = vmul.f32 %v826, %v830
        %v957 = vmul.f32 %v827, %v830
        %v958 = vmul.f32 %v828, %v830
        %v959 = vld [vmem:[#allocation9] sm:$0xff]
        %v960 = vld [vmem:[#allocation9 + $0x8] sm:$0xff]
        %v961 = vld [vmem:[#allocation9 + $0x10] sm:$0xff]
        %v962 = vld [vmem:[#allocation9 + $0x18] sm:$0xff]
        %v963 = vld [vmem:[#allocation9 + $0x20] sm:$0xff]
        %v964 = vld [vmem:[#allocation9 + $0x28] sm:$0xff]
        %v965 = vld [vmem:[#allocation9 + $0x30] sm:$0xff]
        %v966 = vld [vmem:[#allocation9 + $0x38] sm:$0xff]
        %v967 = vld [vmem:[#allocation9 + $0x40] sm:$0xff]
        %v968 = vld [vmem:[#allocation9 + $0x48] sm:$0xff]
        %v969 = vld [vmem:[#allocation9 + $0x50] sm:$0xff]
        %v970 = vld [vmem:[#allocation9 + $0x58] sm:$0xff]
        %v971 = vld [vmem:[#allocation9 + $0x60] sm:$0xff]
        %v972 = vld [vmem:[#allocation9 + $0x68] sm:$0xff]
        %v973 = vld [vmem:[#allocation9 + $0x70] sm:$0xff]
        %v974 = vld [vmem:[#allocation9 + $0x78] sm:$0xff]
        %v975 = vld [vmem:[#allocation9 + $0x80] sm:$0xff]
        %v976 = vld [vmem:[#allocation9 + $0x88] sm:$0xff]
        %v977 = vld [vmem:[#allocation9 + $0x90] sm:$0xff]
        %v978 = vld [vmem:[#allocation9 + $0x98] sm:$0xff]
        %v979 = vld [vmem:[#allocation9 + $0xa0] sm:$0xff]
        %v980 = vld [vmem:[#allocation9 + $0xa8] sm:$0xff]
        %v981 = vld [vmem:[#allocation9 + $0xb0] sm:$0xff]
        %v982 = vld [vmem:[#allocation9 + $0xb8] sm:$0xff]
        %v983 = vld [vmem:[#allocation9 + $0xc0] sm:$0xff]
        %v984 = vld [vmem:[#allocation9 + $0xc8] sm:$0xff]
        %v985 = vld [vmem:[#allocation9 + $0xd0] sm:$0xff]
        %v986 = vld [vmem:[#allocation9 + $0xd8] sm:$0xff]
        %v987 = vld [vmem:[#allocation9 + $0xe0] sm:$0xff]
        %v988 = vld [vmem:[#allocation9 + $0xe8] sm:$0xff]
        %v989 = vld [vmem:[#allocation9 + $0xf0] sm:$0xff]
        %v990 = vld [vmem:[#allocation9 + $0xf8] sm:$0xff]
        %v991 = vld [vmem:[#allocation9 + $0x100] sm:$0xff]
        %v992 = vld [vmem:[#allocation9 + $0x108] sm:$0xff]
        %v993 = vld [vmem:[#allocation9 + $0x110] sm:$0xff]
        %v994 = vld [vmem:[#allocation9 + $0x118] sm:$0xff]
        %v995 = vld [vmem:[#allocation9 + $0x120] sm:$0xff]
        %v996 = vld [vmem:[#allocation9 + $0x128] sm:$0xff]
        %v997 = vld [vmem:[#allocation9 + $0x130] sm:$0xff]
        %v998 = vld [vmem:[#allocation9 + $0x138] sm:$0xff]
        %v999 = vld [vmem:[#allocation9 + $0x140] sm:$0xff]
        %v1000 = vld [vmem:[#allocation9 + $0x148] sm:$0xff]
        %v1001 = vld [vmem:[#allocation9 + $0x150] sm:$0xff]
        %v1002 = vld [vmem:[#allocation9 + $0x158] sm:$0xff]
        %v1003 = vld [vmem:[#allocation9 + $0x160] sm:$0xff]
        %v1004 = vld [vmem:[#allocation9 + $0x168] sm:$0xff]
        %v1005 = vld [vmem:[#allocation9 + $0x170] sm:$0xff]
        %v1006 = vld [vmem:[#allocation9 + $0x178] sm:$0xff]
        %v1007 = vld [vmem:[#allocation9 + $0x180] sm:$0xff]
        %v1008 = vld [vmem:[#allocation9 + $0x188] sm:$0xff]
        %v1009 = vld [vmem:[#allocation9 + $0x190] sm:$0xff]
        %v1010 = vld [vmem:[#allocation9 + $0x198] sm:$0xff]
        %v1011 = vld [vmem:[#allocation9 + $0x1a0] sm:$0xff]
        %v1012 = vld [vmem:[#allocation9 + $0x1a8] sm:$0xff]
        %v1013 = vld [vmem:[#allocation9 + $0x1b0] sm:$0xff]
        %v1014 = vld [vmem:[#allocation9 + $0x1b8] sm:$0xff]
        %v1015 = vld [vmem:[#allocation9 + $0x1c0] sm:$0xff]
        %v1016 = vld [vmem:[#allocation9 + $0x1c8] sm:$0xff]
        %v1017 = vld [vmem:[#allocation9 + $0x1d0] sm:$0xff]
        %v1018 = vld [vmem:[#allocation9 + $0x1d8] sm:$0xff]
        %v1019 = vld [vmem:[#allocation9 + $0x1e0] sm:$0xff]
        %v1020 = vld [vmem:[#allocation9 + $0x1e8] sm:$0xff]
        %v1021 = vld [vmem:[#allocation9 + $0x1f0] sm:$0xff]
        %v1022 = vld [vmem:[#allocation9 + $0x1f8] sm:$0xff]
        %v1023 = vld [vmem:[#allocation9 + $0x200] sm:$0xff]
        %v1024 = vld [vmem:[#allocation9 + $0x208] sm:$0xff]
        %v1025 = vld [vmem:[#allocation9 + $0x210] sm:$0xff]
        %v1026 = vld [vmem:[#allocation9 + $0x218] sm:$0xff]
        %v1027 = vld [vmem:[#allocation9 + $0x220] sm:$0xff]
        %v1028 = vld [vmem:[#allocation9 + $0x228] sm:$0xff]
        %v1029 = vld [vmem:[#allocation9 + $0x230] sm:$0xff]
        %v1030 = vld [vmem:[#allocation9 + $0x238] sm:$0xff]
        %v1031 = vld [vmem:[#allocation9 + $0x240] sm:$0xff]
        %v1032 = vld [vmem:[#allocation9 + $0x248] sm:$0xff]
        %v1033 = vld [vmem:[#allocation9 + $0x250] sm:$0xff]
        %v1034 = vld [vmem:[#allocation9 + $0x258] sm:$0xff]
        %v1035 = vld [vmem:[#allocation9 + $0x260] sm:$0xff]
        %v1036 = vld [vmem:[#allocation9 + $0x268] sm:$0xff]
        %v1037 = vld [vmem:[#allocation9 + $0x270] sm:$0xff]
        %v1038 = vld [vmem:[#allocation9 + $0x278] sm:$0xff]
        %v1039 = vld [vmem:[#allocation9 + $0x280] sm:$0xff]
        %v1040 = vld [vmem:[#allocation9 + $0x288] sm:$0xff]
        %v1041 = vld [vmem:[#allocation9 + $0x290] sm:$0xff]
        %v1042 = vld [vmem:[#allocation9 + $0x298] sm:$0xff]
        %v1043 = vld [vmem:[#allocation9 + $0x2a0] sm:$0xff]
        %v1044 = vld [vmem:[#allocation9 + $0x2a8] sm:$0xff]
        %v1045 = vld [vmem:[#allocation9 + $0x2b0] sm:$0xff]
        %v1046 = vld [vmem:[#allocation9 + $0x2b8] sm:$0xff]
        %v1047 = vld [vmem:[#allocation9 + $0x2c0] sm:$0xff]
        %v1048 = vld [vmem:[#allocation9 + $0x2c8] sm:$0xff]
        %v1049 = vld [vmem:[#allocation9 + $0x2d0] sm:$0xff]
        %v1050 = vld [vmem:[#allocation9 + $0x2d8] sm:$0xff]
        %v1051 = vld [vmem:[#allocation9 + $0x2e0] sm:$0xff]
        %v1052 = vld [vmem:[#allocation9 + $0x2e8] sm:$0xff]
        %v1053 = vld [vmem:[#allocation9 + $0x2f0] sm:$0xff]
        %v1054 = vld [vmem:[#allocation9 + $0x2f8] sm:$0xff]
        %v1055 = vld [vmem:[#allocation9 + $0x300] sm:$0xff]
        %v1056 = vld [vmem:[#allocation9 + $0x308] sm:$0xff]
        %v1057 = vld [vmem:[#allocation9 + $0x310] sm:$0xff]
        %v1058 = vld [vmem:[#allocation9 + $0x318] sm:$0xff]
        %v1059 = vld [vmem:[#allocation9 + $0x320] sm:$0xff]
        %v1060 = vld [vmem:[#allocation9 + $0x328] sm:$0xff]
        %v1061 = vld [vmem:[#allocation9 + $0x330] sm:$0xff]
        %v1062 = vld [vmem:[#allocation9 + $0x338] sm:$0xff]
        %v1063 = vld [vmem:[#allocation9 + $0x340] sm:$0xff]
        %v1064 = vld [vmem:[#allocation9 + $0x348] sm:$0xff]
        %v1065 = vld [vmem:[#allocation9 + $0x350] sm:$0xff]
        %v1066 = vld [vmem:[#allocation9 + $0x358] sm:$0xff]
        %v1067 = vld [vmem:[#allocation9 + $0x360] sm:$0xff]
        %v1068 = vld [vmem:[#allocation9 + $0x368] sm:$0xff]
        %v1069 = vld [vmem:[#allocation9 + $0x370] sm:$0xff]
        %v1070 = vld [vmem:[#allocation9 + $0x378] sm:$0xff]
        %v1071 = vld [vmem:[#allocation9 + $0x380] sm:$0xff]
        %v1072 = vld [vmem:[#allocation9 + $0x388] sm:$0xff]
        %v1073 = vld [vmem:[#allocation9 + $0x390] sm:$0xff]
        %v1074 = vld [vmem:[#allocation9 + $0x398] sm:$0xff]
        %v1075 = vld [vmem:[#allocation9 + $0x3a0] sm:$0xff]
        %v1076 = vld [vmem:[#allocation9 + $0x3a8] sm:$0xff]
        %v1077 = vld [vmem:[#allocation9 + $0x3b0] sm:$0xff]
        %v1078 = vld [vmem:[#allocation9 + $0x3b8] sm:$0xff]
        %v1079 = vld [vmem:[#allocation9 + $0x3c0] sm:$0xff]
        %v1080 = vld [vmem:[#allocation9 + $0x3c8] sm:$0xff]
        %v1081 = vld [vmem:[#allocation9 + $0x3d0] sm:$0xff]
        %v1082 = vld [vmem:[#allocation9 + $0x3d8] sm:$0xff]
        %v1083 = vld [vmem:[#allocation9 + $0x3e0] sm:$0xff]
        %v1084 = vld [vmem:[#allocation9 + $0x3e8] sm:$0xff]
        %v1085 = vld [vmem:[#allocation9 + $0x3f0] sm:$0xff]
        %v1086 = vld [vmem:[#allocation9 + $0x3f8] sm:$0xff]
        %v1087 = vld [vmem:[#allocation11] sm:$0xff]
        %v1088 = vld [vmem:[#allocation11 + $0x8] sm:$0xff]
        %v1089 = vld [vmem:[#allocation11 + $0x10] sm:$0xff]
        %v1090 = vld [vmem:[#allocation11 + $0x18] sm:$0xff]
        %v1091 = vld [vmem:[#allocation11 + $0x20] sm:$0xff]
        %v1092 = vld [vmem:[#allocation11 + $0x28] sm:$0xff]
        %v1093 = vld [vmem:[#allocation11 + $0x30] sm:$0xff]
        %v1094 = vld [vmem:[#allocation11 + $0x38] sm:$0xff]
        %v1095 = vld [vmem:[#allocation11 + $0x40] sm:$0xff]
        %v1096 = vld [vmem:[#allocation11 + $0x48] sm:$0xff]
        %v1097 = vld [vmem:[#allocation11 + $0x50] sm:$0xff]
        %v1098 = vld [vmem:[#allocation11 + $0x58] sm:$0xff]
        %v1099 = vld [vmem:[#allocation11 + $0x60] sm:$0xff]
        %v1100 = vld [vmem:[#allocation11 + $0x68] sm:$0xff]
        %v1101 = vld [vmem:[#allocation11 + $0x70] sm:$0xff]
        %v1102 = vld [vmem:[#allocation11 + $0x78] sm:$0xff]
        %v1103 = vld [vmem:[#allocation11 + $0x80] sm:$0xff]
        %v1104 = vld [vmem:[#allocation11 + $0x88] sm:$0xff]
        %v1105 = vld [vmem:[#allocation11 + $0x90] sm:$0xff]
        %v1106 = vld [vmem:[#allocation11 + $0x98] sm:$0xff]
        %v1107 = vld [vmem:[#allocation11 + $0xa0] sm:$0xff]
        %v1108 = vld [vmem:[#allocation11 + $0xa8] sm:$0xff]
        %v1109 = vld [vmem:[#allocation11 + $0xb0] sm:$0xff]
        %v1110 = vld [vmem:[#allocation11 + $0xb8] sm:$0xff]
        %v1111 = vld [vmem:[#allocation11 + $0xc0] sm:$0xff]
        %v1112 = vld [vmem:[#allocation11 + $0xc8] sm:$0xff]
        %v1113 = vld [vmem:[#allocation11 + $0xd0] sm:$0xff]
        %v1114 = vld [vmem:[#allocation11 + $0xd8] sm:$0xff]
        %v1115 = vld [vmem:[#allocation11 + $0xe0] sm:$0xff]
        %v1116 = vld [vmem:[#allocation11 + $0xe8] sm:$0xff]
        %v1117 = vld [vmem:[#allocation11 + $0xf0] sm:$0xff]
        %v1118 = vld [vmem:[#allocation11 + $0xf8] sm:$0xff]
        %v1119 = vld [vmem:[#allocation11 + $0x100] sm:$0xff]
        %v1120 = vld [vmem:[#allocation11 + $0x108] sm:$0xff]
        %v1121 = vld [vmem:[#allocation11 + $0x110] sm:$0xff]
        %v1122 = vld [vmem:[#allocation11 + $0x118] sm:$0xff]
        %v1123 = vld [vmem:[#allocation11 + $0x120] sm:$0xff]
        %v1124 = vld [vmem:[#allocation11 + $0x128] sm:$0xff]
        %v1125 = vld [vmem:[#allocation11 + $0x130] sm:$0xff]
        %v1126 = vld [vmem:[#allocation11 + $0x138] sm:$0xff]
        %v1127 = vld [vmem:[#allocation11 + $0x140] sm:$0xff]
        %v1128 = vld [vmem:[#allocation11 + $0x148] sm:$0xff]
        %v1129 = vld [vmem:[#allocation11 + $0x150] sm:$0xff]
        %v1130 = vld [vmem:[#allocation11 + $0x158] sm:$0xff]
        %v1131 = vld [vmem:[#allocation11 + $0x160] sm:$0xff]
        %v1132 = vld [vmem:[#allocation11 + $0x168] sm:$0xff]
        %v1133 = vld [vmem:[#allocation11 + $0x170] sm:$0xff]
        %v1134 = vld [vmem:[#allocation11 + $0x178] sm:$0xff]
        %v1135 = vld [vmem:[#allocation11 + $0x180] sm:$0xff]
        %v1136 = vld [vmem:[#allocation11 + $0x188] sm:$0xff]
        %v1137 = vld [vmem:[#allocation11 + $0x190] sm:$0xff]
        %v1138 = vld [vmem:[#allocation11 + $0x198] sm:$0xff]
        %v1139 = vld [vmem:[#allocation11 + $0x1a0] sm:$0xff]
        %v1140 = vld [vmem:[#allocation11 + $0x1a8] sm:$0xff]
        %v1141 = vld [vmem:[#allocation11 + $0x1b0] sm:$0xff]
        %v1142 = vld [vmem:[#allocation11 + $0x1b8] sm:$0xff]
        %v1143 = vld [vmem:[#allocation11 + $0x1c0] sm:$0xff]
        %v1144 = vld [vmem:[#allocation11 + $0x1c8] sm:$0xff]
        %v1145 = vld [vmem:[#allocation11 + $0x1d0] sm:$0xff]
        %v1146 = vld [vmem:[#allocation11 + $0x1d8] sm:$0xff]
        %v1147 = vld [vmem:[#allocation11 + $0x1e0] sm:$0xff]
        %v1148 = vld [vmem:[#allocation11 + $0x1e8] sm:$0xff]
        %v1149 = vld [vmem:[#allocation11 + $0x1f0] sm:$0xff]
        %v1150 = vld [vmem:[#allocation11 + $0x1f8] sm:$0xff]
        %v1151 = vld [vmem:[#allocation11 + $0x200] sm:$0xff]
        %v1152 = vld [vmem:[#allocation11 + $0x208] sm:$0xff]
        %v1153 = vld [vmem:[#allocation11 + $0x210] sm:$0xff]
        %v1154 = vld [vmem:[#allocation11 + $0x218] sm:$0xff]
        %v1155 = vld [vmem:[#allocation11 + $0x220] sm:$0xff]
        %v1156 = vld [vmem:[#allocation11 + $0x228] sm:$0xff]
        %v1157 = vld [vmem:[#allocation11 + $0x230] sm:$0xff]
        %v1158 = vld [vmem:[#allocation11 + $0x238] sm:$0xff]
        %v1159 = vld [vmem:[#allocation11 + $0x240] sm:$0xff]
        %v1160 = vld [vmem:[#allocation11 + $0x248] sm:$0xff]
        %v1161 = vld [vmem:[#allocation11 + $0x250] sm:$0xff]
        %v1162 = vld [vmem:[#allocation11 + $0x258] sm:$0xff]
        %v1163 = vld [vmem:[#allocation11 + $0x260] sm:$0xff]
        %v1164 = vld [vmem:[#allocation11 + $0x268] sm:$0xff]
        %v1165 = vld [vmem:[#allocation11 + $0x270] sm:$0xff]
        %v1166 = vld [vmem:[#allocation11 + $0x278] sm:$0xff]
        %v1167 = vld [vmem:[#allocation11 + $0x280] sm:$0xff]
        %v1168 = vld [vmem:[#allocation11 + $0x288] sm:$0xff]
        %v1169 = vld [vmem:[#allocation11 + $0x290] sm:$0xff]
        %v1170 = vld [vmem:[#allocation11 + $0x298] sm:$0xff]
        %v1171 = vld [vmem:[#allocation11 + $0x2a0] sm:$0xff]
        %v1172 = vld [vmem:[#allocation11 + $0x2a8] sm:$0xff]
        %v1173 = vld [vmem:[#allocation11 + $0x2b0] sm:$0xff]
        %v1174 = vld [vmem:[#allocation11 + $0x2b8] sm:$0xff]
        %v1175 = vld [vmem:[#allocation11 + $0x2c0] sm:$0xff]
        %v1176 = vld [vmem:[#allocation11 + $0x2c8] sm:$0xff]
        %v1177 = vld [vmem:[#allocation11 + $0x2d0] sm:$0xff]
        %v1178 = vld [vmem:[#allocation11 + $0x2d8] sm:$0xff]
        %v1179 = vld [vmem:[#allocation11 + $0x2e0] sm:$0xff]
        %v1180 = vld [vmem:[#allocation11 + $0x2e8] sm:$0xff]
        %v1181 = vld [vmem:[#allocation11 + $0x2f0] sm:$0xff]
        %v1182 = vld [vmem:[#allocation11 + $0x2f8] sm:$0xff]
        %v1183 = vld [vmem:[#allocation11 + $0x300] sm:$0xff]
        %v1184 = vld [vmem:[#allocation11 + $0x308] sm:$0xff]
        %v1185 = vld [vmem:[#allocation11 + $0x310] sm:$0xff]
        %v1186 = vld [vmem:[#allocation11 + $0x318] sm:$0xff]
        %v1187 = vld [vmem:[#allocation11 + $0x320] sm:$0xff]
        %v1188 = vld [vmem:[#allocation11 + $0x328] sm:$0xff]
        %v1189 = vld [vmem:[#allocation11 + $0x330] sm:$0xff]
        %v1190 = vld [vmem:[#allocation11 + $0x338] sm:$0xff]
        %v1191 = vld [vmem:[#allocation11 + $0x340] sm:$0xff]
        %v1192 = vld [vmem:[#allocation11 + $0x348] sm:$0xff]
        %v1193 = vld [vmem:[#allocation11 + $0x350] sm:$0xff]
        %v1194 = vld [vmem:[#allocation11 + $0x358] sm:$0xff]
        %v1195 = vld [vmem:[#allocation11 + $0x360] sm:$0xff]
        %v1196 = vld [vmem:[#allocation11 + $0x368] sm:$0xff]
        %v1197 = vld [vmem:[#allocation11 + $0x370] sm:$0xff]
        %v1198 = vld [vmem:[#allocation11 + $0x378] sm:$0xff]
        %v1199 = vld [vmem:[#allocation11 + $0x380] sm:$0xff]
        %v1200 = vld [vmem:[#allocation11 + $0x388] sm:$0xff]
        %v1201 = vld [vmem:[#allocation11 + $0x390] sm:$0xff]
        %v1202 = vld [vmem:[#allocation11 + $0x398] sm:$0xff]
        %v1203 = vld [vmem:[#allocation11 + $0x3a0] sm:$0xff]
        %v1204 = vld [vmem:[#allocation11 + $0x3a8] sm:$0xff]
        %v1205 = vld [vmem:[#allocation11 + $0x3b0] sm:$0xff]
        %v1206 = vld [vmem:[#allocation11 + $0x3b8] sm:$0xff]
        %v1207 = vld [vmem:[#allocation11 + $0x3c0] sm:$0xff]
        %v1208 = vld [vmem:[#allocation11 + $0x3c8] sm:$0xff]
        %v1209 = vld [vmem:[#allocation11 + $0x3d0] sm:$0xff]
        %v1210 = vld [vmem:[#allocation11 + $0x3d8] sm:$0xff]
        %v1211 = vld [vmem:[#allocation11 + $0x3e0] sm:$0xff]
        %v1212 = vld [vmem:[#allocation11 + $0x3e8] sm:$0xff]
        %v1213 = vld [vmem:[#allocation11 + $0x3f0] sm:$0xff]
        %v1214 = vld [vmem:[#allocation11 + $0x3f8] sm:$0xff]
        %v1215 = vmul.f32 %v573, %v959
        %v1216 = vmul.f32 %v574, %v960
        %v1217 = vmul.f32 %v575, %v961
        %v1218 = vmul.f32 %v576, %v962
        %v1219 = vmul.f32 %v577, %v963
        %v1220 = vmul.f32 %v578, %v964
        %v1221 = vmul.f32 %v579, %v965
        %v1222 = vmul.f32 %v580, %v966
        %v1223 = vmul.f32 %v581, %v967
        %v1224 = vmul.f32 %v582, %v968
        %v1225 = vmul.f32 %v583, %v969
        %v1226 = vmul.f32 %v584, %v970
        %v1227 = vmul.f32 %v585, %v971
        %v1228 = vmul.f32 %v586, %v972
        %v1229 = vmul.f32 %v587, %v973
        %v1230 = vmul.f32 %v588, %v974
        %v1231 = vmul.f32 %v589, %v975
        %v1232 = vmul.f32 %v590, %v976
        %v1233 = vmul.f32 %v591, %v977
        %v1234 = vmul.f32 %v592, %v978
        %v1235 = vmul.f32 %v593, %v979
        %v1236 = vmul.f32 %v594, %v980
        %v1237 = vmul.f32 %v595, %v981
        %v1238 = vmul.f32 %v596, %v982
        %v1239 = vmul.f32 %v597, %v983
        %v1240 = vmul.f32 %v598, %v984
        %v1241 = vmul.f32 %v599, %v985
        %v1242 = vmul.f32 %v600, %v986
        %v1243 = vmul.f32 %v601, %v987
        %v1244 = vmul.f32 %v602, %v988
        %v1245 = vmul.f32 %v603, %v989
        %v1246 = vmul.f32 %v604, %v990
        %v1247 = vmul.f32 %v605, %v991
        %v1248 = vmul.f32 %v606, %v992
        %v1249 = vmul.f32 %v607, %v993
        %v1250 = vmul.f32 %v608, %v994
        %v1251 = vmul.f32 %v609, %v995
        %v1252 = vmul.f32 %v610, %v996
        %v1253 = vmul.f32 %v611, %v997
        %v1254 = vmul.f32 %v612, %v998
        %v1255 = vmul.f32 %v613, %v999
        %v1256 = vmul.f32 %v614, %v1000
        %v1257 = vmul.f32 %v615, %v1001
        %v1258 = vmul.f32 %v616, %v1002
        %v1259 = vmul.f32 %v617, %v1003
        %v1260 = vmul.f32 %v618, %v1004
        %v1261 = vmul.f32 %v619, %v1005
        %v1262 = vmul.f32 %v620, %v1006
        %v1263 = vmul.f32 %v621, %v1007
        %v1264 = vmul.f32 %v622, %v1008
        %v1265 = vmul.f32 %v623, %v1009
        %v1266 = vmul.f32 %v624, %v1010
        %v1267 = vmul.f32 %v625, %v1011
        %v1268 = vmul.f32 %v626, %v1012
        %v1269 = vmul.f32 %v627, %v1013
        %v1270 = vmul.f32 %v628, %v1014
        %v1271 = vmul.f32 %v629, %v1015
        %v1272 = vmul.f32 %v630, %v1016
        %v1273 = vmul.f32 %v631, %v1017
        %v1274 = vmul.f32 %v632, %v1018
        %v1275 = vmul.f32 %v633, %v1019
        %v1276 = vmul.f32 %v634, %v1020
        %v1277 = vmul.f32 %v635, %v1021
        %v1278 = vmul.f32 %v636, %v1022
        %v1279 = vmul.f32 %v637, %v1023
        %v1280 = vmul.f32 %v638, %v1024
        %v1281 = vmul.f32 %v639, %v1025
        %v1282 = vmul.f32 %v640, %v1026
        %v1283 = vmul.f32 %v641, %v1027
        %v1284 = vmul.f32 %v642, %v1028
        %v1285 = vmul.f32 %v643, %v1029
        %v1286 = vmul.f32 %v644, %v1030
        %v1287 = vmul.f32 %v645, %v1031
        %v1288 = vmul.f32 %v646, %v1032
        %v1289 = vmul.f32 %v647, %v1033
        %v1290 = vmul.f32 %v648, %v1034
        %v1291 = vmul.f32 %v649, %v1035
        %v1292 = vmul.f32 %v650, %v1036
        %v1293 = vmul.f32 %v651, %v1037
        %v1294 = vmul.f32 %v652, %v1038
        %v1295 = vmul.f32 %v653, %v1039
        %v1296 = vmul.f32 %v654, %v1040
        %v1297 = vmul.f32 %v655, %v1041
        %v1298 = vmul.f32 %v656, %v1042
        %v1299 = vmul.f32 %v657, %v1043
        %v1300 = vmul.f32 %v658, %v1044
        %v1301 = vmul.f32 %v659, %v1045
        %v1302 = vmul.f32 %v660, %v1046
        %v1303 = vmul.f32 %v661, %v1047
        %v1304 = vmul.f32 %v662, %v1048
        %v1305 = vmul.f32 %v663, %v1049
        %v1306 = vmul.f32 %v664, %v1050
        %v1307 = vmul.f32 %v665, %v1051
        %v1308 = vmul.f32 %v666, %v1052
        %v1309 = vmul.f32 %v667, %v1053
        %v1310 = vmul.f32 %v668, %v1054
        %v1311 = vmul.f32 %v669, %v1055
        %v1312 = vmul.f32 %v670, %v1056
        %v1313 = vmul.f32 %v671, %v1057
        %v1314 = vmul.f32 %v672, %v1058
        %v1315 = vmul.f32 %v673, %v1059
        %v1316 = vmul.f32 %v674, %v1060
        %v1317 = vmul.f32 %v675, %v1061
        %v1318 = vmul.f32 %v676, %v1062
        %v1319 = vmul.f32 %v677, %v1063
        %v1320 = vmul.f32 %v678, %v1064
        %v1321 = vmul.f32 %v679, %v1065
        %v1322 = vmul.f32 %v680, %v1066
        %v1323 = vmul.f32 %v681, %v1067
        %v1324 = vmul.f32 %v682, %v1068
        %v1325 = vmul.f32 %v683, %v1069
        %v1326 = vmul.f32 %v684, %v1070
        %v1327 = vmul.f32 %v685, %v1071
        %v1328 = vmul.f32 %v686, %v1072
        %v1329 = vmul.f32 %v687, %v1073
        %v1330 = vmul.f32 %v688, %v1074
        %v1331 = vmul.f32 %v689, %v1075
        %v1332 = vmul.f32 %v690, %v1076
        %v1333 = vmul.f32 %v691, %v1077
        %v1334 = vmul.f32 %v692, %v1078
        %v1335 = vmul.f32 %v693, %v1079
        %v1336 = vmul.f32 %v694, %v1080
        %v1337 = vmul.f32 %v695, %v1081
        %v1338 = vmul.f32 %v696, %v1082
        %v1339 = vmul.f32 %v697, %v1083
        %v1340 = vmul.f32 %v698, %v1084
        %v1341 = vmul.f32 %v699, %v1085
        %v1342 = vmul.f32 %v700, %v1086
        %v1343 = vmul.f32 %v831, %v1087
        %v1344 = vmul.f32 %v832, %v1088
        %v1345 = vmul.f32 %v833, %v1089
        %v1346 = vmul.f32 %v834, %v1090
        %v1347 = vmul.f32 %v835, %v1091
        %v1348 = vmul.f32 %v836, %v1092
        %v1349 = vmul.f32 %v837, %v1093
        %v1350 = vmul.f32 %v838, %v1094
        %v1351 = vmul.f32 %v839, %v1095
        %v1352 = vmul.f32 %v840, %v1096
        %v1353 = vmul.f32 %v841, %v1097
        %v1354 = vmul.f32 %v842, %v1098
        %v1355 = vmul.f32 %v843, %v1099
        %v1356 = vmul.f32 %v844, %v1100
        %v1357 = vmul.f32 %v845, %v1101
        %v1358 = vmul.f32 %v846, %v1102
        %v1359 = vmul.f32 %v847, %v1103
        %v1360 = vmul.f32 %v848, %v1104
        %v1361 = vmul.f32 %v849, %v1105
        %v1362 = vmul.f32 %v850, %v1106
        %v1363 = vmul.f32 %v851, %v1107
        %v1364 = vmul.f32 %v852, %v1108
        %v1365 = vmul.f32 %v853, %v1109
        %v1366 = vmul.f32 %v854, %v1110
        %v1367 = vmul.f32 %v855, %v1111
        %v1368 = vmul.f32 %v856, %v1112
        %v1369 = vmul.f32 %v857, %v1113
        %v1370 = vmul.f32 %v858, %v1114
        %v1371 = vmul.f32 %v859, %v1115
        %v1372 = vmul.f32 %v860, %v1116
        %v1373 = vmul.f32 %v861, %v1117
        %v1374 = vmul.f32 %v862, %v1118
        %v1375 = vmul.f32 %v863, %v1119
        %v1376 = vmul.f32 %v864, %v1120
        %v1377 = vmul.f32 %v865, %v1121
        %v1378 = vmul.f32 %v866, %v1122
        %v1379 = vmul.f32 %v867, %v1123
        %v1380 = vmul.f32 %v868, %v1124
        %v1381 = vmul.f32 %v869, %v1125
        %v1382 = vmul.f32 %v870, %v1126
        %v1383 = vmul.f32 %v871, %v1127
        %v1384 = vmul.f32 %v872, %v1128
        %v1385 = vmul.f32 %v873, %v1129
        %v1386 = vmul.f32 %v874, %v1130
        %v1387 = vmul.f32 %v875, %v1131
        %v1388 = vmul.f32 %v876, %v1132
        %v1389 = vmul.f32 %v877, %v1133
        %v1390 = vmul.f32 %v878, %v1134
        %v1391 = vmul.f32 %v879, %v1135
        %v1392 = vmul.f32 %v880, %v1136
        %v1393 = vmul.f32 %v881, %v1137
        %v1394 = vmul.f32 %v882, %v1138
        %v1395 = vmul.f32 %v883, %v1139
        %v1396 = vmul.f32 %v884, %v1140
        %v1397 = vmul.f32 %v885, %v1141
        %v1398 = vmul.f32 %v886, %v1142
        %v1399 = vmul.f32 %v887, %v1143
        %v1400 = vmul.f32 %v888, %v1144
        %v1401 = vmul.f32 %v889, %v1145
        %v1402 = vmul.f32 %v890, %v1146
        %v1403 = vmul.f32 %v891, %v1147
        %v1404 = vmul.f32 %v892, %v1148
        %v1405 = vmul.f32 %v893, %v1149
        %v1406 = vmul.f32 %v894, %v1150
        %v1407 = vmul.f32 %v895, %v1151
        %v1408 = vmul.f32 %v896, %v1152
        %v1409 = vmul.f32 %v897, %v1153
        %v1410 = vmul.f32 %v898, %v1154
        %v1411 = vmul.f32 %v899, %v1155
        %v1412 = vmul.f32 %v900, %v1156
        %v1413 = vmul.f32 %v901, %v1157
        %v1414 = vmul.f32 %v902, %v1158
        %v1415 = vmul.f32 %v903, %v1159
        %v1416 = vmul.f32 %v904, %v1160
        %v1417 = vmul.f32 %v905, %v1161
        %v1418 = vmul.f32 %v906, %v1162
        %v1419 = vmul.f32 %v907, %v1163
        %v1420 = vmul.f32 %v908, %v1164
        %v1421 = vmul.f32 %v909, %v1165
        %v1422 = vmul.f32 %v910, %v1166
        %v1423 = vmul.f32 %v911, %v1167
        %v1424 = vmul.f32 %v912, %v1168
        %v1425 = vmul.f32 %v913, %v1169
        %v1426 = vmul.f32 %v914, %v1170
        %v1427 = vmul.f32 %v915, %v1171
        %v1428 = vmul.f32 %v916, %v1172
        %v1429 = vmul.f32 %v917, %v1173
        %v1430 = vmul.f32 %v918, %v1174
        %v1431 = vmul.f32 %v919, %v1175
        %v1432 = vmul.f32 %v920, %v1176
        %v1433 = vmul.f32 %v921, %v1177
        %v1434 = vmul.f32 %v922, %v1178
        %v1435 = vmul.f32 %v923, %v1179
        %v1436 = vmul.f32 %v924, %v1180
        %v1437 = vmul.f32 %v925, %v1181
        %v1438 = vmul.f32 %v926, %v1182
        %v1439 = vmul.f32 %v927, %v1183
        %v1440 = vmul.f32 %v928, %v1184
        %v1441 = vmul.f32 %v929, %v1185
        %v1442 = vmul.f32 %v930, %v1186
        %v1443 = vmul.f32 %v931, %v1187
        %v1444 = vmul.f32 %v932, %v1188
        %v1445 = vmul.f32 %v933, %v1189
        %v1446 = vmul.f32 %v934, %v1190
        %v1447 = vmul.f32 %v935, %v1191
        %v1448 = vmul.f32 %v936, %v1192
        %v1449 = vmul.f32 %v937, %v1193
        %v1450 = vmul.f32 %v938, %v1194
        %v1451 = vmul.f32 %v939, %v1195
        %v1452 = vmul.f32 %v940, %v1196
        %v1453 = vmul.f32 %v941, %v1197
        %v1454 = vmul.f32 %v942, %v1198
        %v1455 = vmul.f32 %v943, %v1199
        %v1456 = vmul.f32 %v944, %v1200
        %v1457 = vmul.f32 %v945, %v1201
        %v1458 = vmul.f32 %v946, %v1202
        %v1459 = vmul.f32 %v947, %v1203
        %v1460 = vmul.f32 %v948, %v1204
        %v1461 = vmul.f32 %v949, %v1205
        %v1462 = vmul.f32 %v950, %v1206
        %v1463 = vmul.f32 %v951, %v1207
        %v1464 = vmul.f32 %v952, %v1208
        %v1465 = vmul.f32 %v953, %v1209
        %v1466 = vmul.f32 %v954, %v1210
        %v1467 = vmul.f32 %v955, %v1211
        %v1468 = vmul.f32 %v956, %v1212
        %v1469 = vmul.f32 %v957, %v1213
        %v1470 = vmul.f32 %v958, %v1214
        %v1471 = vsub.f32 %v1215, %v1343
        %v1472 = vsub.f32 %v1216, %v1344
        %v1473 = vsub.f32 %v1217, %v1345
        %v1474 = vsub.f32 %v1218, %v1346
        %v1475 = vsub.f32 %v1219, %v1347
        %v1476 = vsub.f32 %v1220, %v1348
        %v1477 = vsub.f32 %v1221, %v1349
        %v1478 = vsub.f32 %v1222, %v1350
        %v1479 = vsub.f32 %v1223, %v1351
        %v1480 = vsub.f32 %v1224, %v1352
        %v1481 = vsub.f32 %v1225, %v1353
        %v1482 = vsub.f32 %v1226, %v1354
        %v1483 = vsub.f32 %v1227, %v1355
        %v1484 = vsub.f32 %v1228, %v1356
        %v1485 = vsub.f32 %v1229, %v1357
        %v1486 = vsub.f32 %v1230, %v1358
        %v1487 = vsub.f32 %v1231, %v1359
        %v1488 = vsub.f32 %v1232, %v1360
        %v1489 = vsub.f32 %v1233, %v1361
        %v1490 = vsub.f32 %v1234, %v1362
        %v1491 = vsub.f32 %v1235, %v1363
        %v1492 = vsub.f32 %v1236, %v1364
        %v1493 = vsub.f32 %v1237, %v1365
        %v1494 = vsub.f32 %v1238, %v1366
        %v1495 = vsub.f32 %v1239, %v1367
        %v1496 = vsub.f32 %v1240, %v1368
        %v1497 = vsub.f32 %v1241, %v1369
        %v1498 = vsub.f32 %v1242, %v1370
        %v1499 = vsub.f32 %v1243, %v1371
        %v1500 = vsub.f32 %v1244, %v1372
        %v1501 = vsub.f32 %v1245, %v1373
        %v1502 = vsub.f32 %v1246, %v1374
        %v1503 = vsub.f32 %v1247, %v1375
        %v1504 = vsub.f32 %v1248, %v1376
        %v1505 = vsub.f32 %v1249, %v1377
        %v1506 = vsub.f32 %v1250, %v1378
        %v1507 = vsub.f32 %v1251, %v1379
        %v1508 = vsub.f32 %v1252, %v1380
        %v1509 = vsub.f32 %v1253, %v1381
        %v1510 = vsub.f32 %v1254, %v1382
        %v1511 = vsub.f32 %v1255, %v1383
        %v1512 = vsub.f32 %v1256, %v1384
        %v1513 = vsub.f32 %v1257, %v1385
        %v1514 = vsub.f32 %v1258, %v1386
        %v1515 = vsub.f32 %v1259, %v1387
        %v1516 = vsub.f32 %v1260, %v1388
        %v1517 = vsub.f32 %v1261, %v1389
        %v1518 = vsub.f32 %v1262, %v1390
        %v1519 = vsub.f32 %v1263, %v1391
        %v1520 = vsub.f32 %v1264, %v1392
        %v1521 = vsub.f32 %v1265, %v1393
        %v1522 = vsub.f32 %v1266, %v1394
        %v1523 = vsub.f32 %v1267, %v1395
        %v1524 = vsub.f32 %v1268, %v1396
        %v1525 = vsub.f32 %v1269, %v1397
        %v1526 = vsub.f32 %v1270, %v1398
        %v1527 = vsub.f32 %v1271, %v1399
        %v1528 = vsub.f32 %v1272, %v1400
        %v1529 = vsub.f32 %v1273, %v1401
        %v1530 = vsub.f32 %v1274, %v1402
        %v1531 = vsub.f32 %v1275, %v1403
        %v1532 = vsub.f32 %v1276, %v1404
        %v1533 = vsub.f32 %v1277, %v1405
        %v1534 = vsub.f32 %v1278, %v1406
        %v1535 = vsub.f32 %v1279, %v1407
        %v1536 = vsub.f32 %v1280, %v1408
        %v1537 = vsub.f32 %v1281, %v1409
        %v1538 = vsub.f32 %v1282, %v1410
        %v1539 = vsub.f32 %v1283, %v1411
        %v1540 = vsub.f32 %v1284, %v1412
        %v1541 = vsub.f32 %v1285, %v1413
        %v1542 = vsub.f32 %v1286, %v1414
        %v1543 = vsub.f32 %v1287, %v1415
        %v1544 = vsub.f32 %v1288, %v1416
        %v1545 = vsub.f32 %v1289, %v1417
        %v1546 = vsub.f32 %v1290, %v1418
        %v1547 = vsub.f32 %v1291, %v1419
        %v1548 = vsub.f32 %v1292, %v1420
        %v1549 = vsub.f32 %v1293, %v1421
        %v1550 = vsub.f32 %v1294, %v1422
        %v1551 = vsub.f32 %v1295, %v1423
        %v1552 = vsub.f32 %v1296, %v1424
        %v1553 = vsub.f32 %v1297, %v1425
        %v1554 = vsub.f32 %v1298, %v1426
        %v1555 = vsub.f32 %v1299, %v1427
        %v1556 = vsub.f32 %v1300, %v1428
        %v1557 = vsub.f32 %v1301, %v1429
        %v1558 = vsub.f32 %v1302, %v1430
        %v1559 = vsub.f32 %v1303, %v1431
        %v1560 = vsub.f32 %v1304, %v1432
        %v1561 = vsub.f32 %v1305, %v1433
        %v1562 = vsub.f32 %v1306, %v1434
        %v1563 = vsub.f32 %v1307, %v1435
        %v1564 = vsub.f32 %v1308, %v1436
        %v1565 = vsub.f32 %v1309, %v1437
        %v1566 = vsub.f32 %v1310, %v1438
        %v1567 = vsub.f32 %v1311, %v1439
        %v1568 = vsub.f32 %v1312, %v1440
        %v1569 = vsub.f32 %v1313, %v1441
        %v1570 = vsub.f32 %v1314, %v1442
        %v1571 = vsub.f32 %v1315, %v1443
        %v1572 = vsub.f32 %v1316, %v1444
        %v1573 = vsub.f32 %v1317, %v1445
        %v1574 = vsub.f32 %v1318, %v1446
        %v1575 = vsub.f32 %v1319, %v1447
        %v1576 = vsub.f32 %v1320, %v1448
        %v1577 = vsub.f32 %v1321, %v1449
        %v1578 = vsub.f32 %v1322, %v1450
        %v1579 = vsub.f32 %v1323, %v1451
        %v1580 = vsub.f32 %v1324, %v1452
        %v1581 = vsub.f32 %v1325, %v1453
        %v1582 = vsub.f32 %v1326, %v1454
        %v1583 = vsub.f32 %v1327, %v1455
        %v1584 = vsub.f32 %v1328, %v1456
        %v1585 = vsub.f32 %v1329, %v1457
        %v1586 = vsub.f32 %v1330, %v1458
        %v1587 = vsub.f32 %v1331, %v1459
        %v1588 = vsub.f32 %v1332, %v1460
        %v1589 = vsub.f32 %v1333, %v1461
        %v1590 = vsub.f32 %v1334, %v1462
        %v1591 = vsub.f32 %v1335, %v1463
        %v1592 = vsub.f32 %v1336, %v1464
        %v1593 = vsub.f32 %v1337, %v1465
        %v1594 = vsub.f32 %v1338, %v1466
        %v1595 = vsub.f32 %v1339, %v1467
        %v1596 = vsub.f32 %v1340, %v1468
        %v1597 = vsub.f32 %v1341, %v1469
        %v1598 = vsub.f32 %v1342, %v1470
        %vm1599 = vcmask 261120
        %1600 = vst.msk [vmem:[%s419] sm:$0xff] %vm1599, %v1471
        %1601 = vst.msk [vmem:[%s419 + $0x8] sm:$0xff] %vm1599, %v1472
        %1602 = vst.msk [vmem:[%s419 + $0x10] sm:$0xff] %vm1599, %v1473
        %1603 = vst.msk [vmem:[%s419 + $0x18] sm:$0xff] %vm1599, %v1474
        %1604 = vst.msk [vmem:[%s419 + $0x20] sm:$0xff] %vm1599, %v1475
        %1605 = vst.msk [vmem:[%s419 + $0x28] sm:$0xff] %vm1599, %v1476
        %1606 = vst.msk [vmem:[%s419 + $0x30] sm:$0xff] %vm1599, %v1477
        %1607 = vst.msk [vmem:[%s419 + $0x38] sm:$0xff] %vm1599, %v1478
        %1608 = vst.msk [vmem:[%s419 + $0x40] sm:$0xff] %vm1599, %v1479
        %1609 = vst.msk [vmem:[%s419 + $0x48] sm:$0xff] %vm1599, %v1480
        %1610 = vst.msk [vmem:[%s419 + $0x50] sm:$0xff] %vm1599, %v1481
        %1611 = vst.msk [vmem:[%s419 + $0x58] sm:$0xff] %vm1599, %v1482
        %1612 = vst.msk [vmem:[%s419 + $0x60] sm:$0xff] %vm1599, %v1483
        %1613 = vst.msk [vmem:[%s419 + $0x68] sm:$0xff] %vm1599, %v1484
        %1614 = vst.msk [vmem:[%s419 + $0x70] sm:$0xff] %vm1599, %v1485
        %1615 = vst.msk [vmem:[%s419 + $0x78] sm:$0xff] %vm1599, %v1486
        %1616 = vst.msk [vmem:[%s419 + $0x80] sm:$0xff] %vm1599, %v1487
        %1617 = vst.msk [vmem:[%s419 + $0x88] sm:$0xff] %vm1599, %v1488
        %1618 = vst.msk [vmem:[%s419 + $0x90] sm:$0xff] %vm1599, %v1489
        %1619 = vst.msk [vmem:[%s419 + $0x98] sm:$0xff] %vm1599, %v1490
        %1620 = vst.msk [vmem:[%s419 + $0xa0] sm:$0xff] %vm1599, %v1491
        %1621 = vst.msk [vmem:[%s419 + $0xa8] sm:$0xff] %vm1599, %v1492
        %1622 = vst.msk [vmem:[%s419 + $0xb0] sm:$0xff] %vm1599, %v1493
        %1623 = vst.msk [vmem:[%s419 + $0xb8] sm:$0xff] %vm1599, %v1494
        %1624 = vst.msk [vmem:[%s419 + $0xc0] sm:$0xff] %vm1599, %v1495
        %1625 = vst.msk [vmem:[%s419 + $0xc8] sm:$0xff] %vm1599, %v1496
        %1626 = vst.msk [vmem:[%s419 + $0xd0] sm:$0xff] %vm1599, %v1497
        %1627 = vst.msk [vmem:[%s419 + $0xd8] sm:$0xff] %vm1599, %v1498
        %1628 = vst.msk [vmem:[%s419 + $0xe0] sm:$0xff] %vm1599, %v1499
        %1629 = vst.msk [vmem:[%s419 + $0xe8] sm:$0xff] %vm1599, %v1500
        %1630 = vst.msk [vmem:[%s419 + $0xf0] sm:$0xff] %vm1599, %v1501
        %1631 = vst.msk [vmem:[%s419 + $0xf8] sm:$0xff] %vm1599, %v1502
        %1632 = vst.msk [vmem:[%s419 + $0x100] sm:$0xff] %vm1599, %v1503
        %1633 = vst.msk [vmem:[%s419 + $0x108] sm:$0xff] %vm1599, %v1504
        %1634 = vst.msk [vmem:[%s419 + $0x110] sm:$0xff] %vm1599, %v1505
        %1635 = vst.msk [vmem:[%s419 + $0x118] sm:$0xff] %vm1599, %v1506
        %1636 = vst.msk [vmem:[%s419 + $0x120] sm:$0xff] %vm1599, %v1507
        %1637 = vst.msk [vmem:[%s419 + $0x128] sm:$0xff] %vm1599, %v1508
        %1638 = vst.msk [vmem:[%s419 + $0x130] sm:$0xff] %vm1599, %v1509
        %1639 = vst.msk [vmem:[%s419 + $0x138] sm:$0xff] %vm1599, %v1510
        %1640 = vst.msk [vmem:[%s419 + $0x140] sm:$0xff] %vm1599, %v1511
        %1641 = vst.msk [vmem:[%s419 + $0x148] sm:$0xff] %vm1599, %v1512
        %1642 = vst.msk [vmem:[%s419 + $0x150] sm:$0xff] %vm1599, %v1513
        %1643 = vst.msk [vmem:[%s419 + $0x158] sm:$0xff] %vm1599, %v1514
        %1644 = vst.msk [vmem:[%s419 + $0x160] sm:$0xff] %vm1599, %v1515
        %1645 = vst.msk [vmem:[%s419 + $0x168] sm:$0xff] %vm1599, %v1516
        %1646 = vst.msk [vmem:[%s419 + $0x170] sm:$0xff] %vm1599, %v1517
        %1647 = vst.msk [vmem:[%s419 + $0x178] sm:$0xff] %vm1599, %v1518
        %1648 = vst.msk [vmem:[%s419 + $0x180] sm:$0xff] %vm1599, %v1519
        %1649 = vst.msk [vmem:[%s419 + $0x188] sm:$0xff] %vm1599, %v1520
        %1650 = vst.msk [vmem:[%s419 + $0x190] sm:$0xff] %vm1599, %v1521
        %1651 = vst.msk [vmem:[%s419 + $0x198] sm:$0xff] %vm1599, %v1522
        %1652 = vst.msk [vmem:[%s419 + $0x1a0] sm:$0xff] %vm1599, %v1523
        %1653 = vst.msk [vmem:[%s419 + $0x1a8] sm:$0xff] %vm1599, %v1524
        %1654 = vst.msk [vmem:[%s419 + $0x1b0] sm:$0xff] %vm1599, %v1525
        %1655 = vst.msk [vmem:[%s419 + $0x1b8] sm:$0xff] %vm1599, %v1526
        %1656 = vst.msk [vmem:[%s419 + $0x1c0] sm:$0xff] %vm1599, %v1527
        %1657 = vst.msk [vmem:[%s419 + $0x1c8] sm:$0xff] %vm1599, %v1528
        %1658 = vst.msk [vmem:[%s419 + $0x1d0] sm:$0xff] %vm1599, %v1529
        %1659 = vst.msk [vmem:[%s419 + $0x1d8] sm:$0xff] %vm1599, %v1530
        %1660 = vst.msk [vmem:[%s419 + $0x1e0] sm:$0xff] %vm1599, %v1531
        %1661 = vst.msk [vmem:[%s419 + $0x1e8] sm:$0xff] %vm1599, %v1532
        %1662 = vst.msk [vmem:[%s419 + $0x1f0] sm:$0xff] %vm1599, %v1533
        %1663 = vst.msk [vmem:[%s419 + $0x1f8] sm:$0xff] %vm1599, %v1534
        %1664 = vst.msk [vmem:[%s419 + $0x200] sm:$0xff] %vm1599, %v1535
        %1665 = vst.msk [vmem:[%s419 + $0x208] sm:$0xff] %vm1599, %v1536
        %1666 = vst.msk [vmem:[%s419 + $0x210] sm:$0xff] %vm1599, %v1537
        %1667 = vst.msk [vmem:[%s419 + $0x218] sm:$0xff] %vm1599, %v1538
        %1668 = vst.msk [vmem:[%s419 + $0x220] sm:$0xff] %vm1599, %v1539
        %1669 = vst.msk [vmem:[%s419 + $0x228] sm:$0xff] %vm1599, %v1540
        %1670 = vst.msk [vmem:[%s419 + $0x230] sm:$0xff] %vm1599, %v1541
        %1671 = vst.msk [vmem:[%s419 + $0x238] sm:$0xff] %vm1599, %v1542
        %1672 = vst.msk [vmem:[%s419 + $0x240] sm:$0xff] %vm1599, %v1543
        %1673 = vst.msk [vmem:[%s419 + $0x248] sm:$0xff] %vm1599, %v1544
        %1674 = vst.msk [vmem:[%s419 + $0x250] sm:$0xff] %vm1599, %v1545
        %1675 = vst.msk [vmem:[%s419 + $0x258] sm:$0xff] %vm1599, %v1546
        %1676 = vst.msk [vmem:[%s419 + $0x260] sm:$0xff] %vm1599, %v1547
        %1677 = vst.msk [vmem:[%s419 + $0x268] sm:$0xff] %vm1599, %v1548
        %1678 = vst.msk [vmem:[%s419 + $0x270] sm:$0xff] %vm1599, %v1549
        %1679 = vst.msk [vmem:[%s419 + $0x278] sm:$0xff] %vm1599, %v1550
        %1680 = vst.msk [vmem:[%s419 + $0x280] sm:$0xff] %vm1599, %v1551
        %1681 = vst.msk [vmem:[%s419 + $0x288] sm:$0xff] %vm1599, %v1552
        %1682 = vst.msk [vmem:[%s419 + $0x290] sm:$0xff] %vm1599, %v1553
        %1683 = vst.msk [vmem:[%s419 + $0x298] sm:$0xff] %vm1599, %v1554
        %1684 = vst.msk [vmem:[%s419 + $0x2a0] sm:$0xff] %vm1599, %v1555
        %1685 = vst.msk [vmem:[%s419 + $0x2a8] sm:$0xff] %vm1599, %v1556
        %1686 = vst.msk [vmem:[%s419 + $0x2b0] sm:$0xff] %vm1599, %v1557
        %1687 = vst.msk [vmem:[%s419 + $0x2b8] sm:$0xff] %vm1599, %v1558
        %1688 = vst.msk [vmem:[%s419 + $0x2c0] sm:$0xff] %vm1599, %v1559
        %1689 = vst.msk [vmem:[%s419 + $0x2c8] sm:$0xff] %vm1599, %v1560
        %1690 = vst.msk [vmem:[%s419 + $0x2d0] sm:$0xff] %vm1599, %v1561
        %1691 = vst.msk [vmem:[%s419 + $0x2d8] sm:$0xff] %vm1599, %v1562
        %1692 = vst.msk [vmem:[%s419 + $0x2e0] sm:$0xff] %vm1599, %v1563
        %1693 = vst.msk [vmem:[%s419 + $0x2e8] sm:$0xff] %vm1599, %v1564
        %1694 = vst.msk [vmem:[%s419 + $0x2f0] sm:$0xff] %vm1599, %v1565
        %1695 = vst.msk [vmem:[%s419 + $0x2f8] sm:$0xff] %vm1599, %v1566
        %1696 = vst.msk [vmem:[%s419 + $0x300] sm:$0xff] %vm1599, %v1567
        %1697 = vst.msk [vmem:[%s419 + $0x308] sm:$0xff] %vm1599, %v1568
        %1698 = vst.msk [vmem:[%s419 + $0x310] sm:$0xff] %vm1599, %v1569
        %1699 = vst.msk [vmem:[%s419 + $0x318] sm:$0xff] %vm1599, %v1570
        %1700 = vst.msk [vmem:[%s419 + $0x320] sm:$0xff] %vm1599, %v1571
        %1701 = vst.msk [vmem:[%s419 + $0x328] sm:$0xff] %vm1599, %v1572
        %1702 = vst.msk [vmem:[%s419 + $0x330] sm:$0xff] %vm1599, %v1573
        %1703 = vst.msk [vmem:[%s419 + $0x338] sm:$0xff] %vm1599, %v1574
        %1704 = vst.msk [vmem:[%s419 + $0x340] sm:$0xff] %vm1599, %v1575
        %1705 = vst.msk [vmem:[%s419 + $0x348] sm:$0xff] %vm1599, %v1576
        %1706 = vst.msk [vmem:[%s419 + $0x350] sm:$0xff] %vm1599, %v1577
        %1707 = vst.msk [vmem:[%s419 + $0x358] sm:$0xff] %vm1599, %v1578
        %1708 = vst.msk [vmem:[%s419 + $0x360] sm:$0xff] %vm1599, %v1579
        %1709 = vst.msk [vmem:[%s419 + $0x368] sm:$0xff] %vm1599, %v1580
        %1710 = vst.msk [vmem:[%s419 + $0x370] sm:$0xff] %vm1599, %v1581
        %1711 = vst.msk [vmem:[%s419 + $0x378] sm:$0xff] %vm1599, %v1582
        %1712 = vst.msk [vmem:[%s419 + $0x380] sm:$0xff] %vm1599, %v1583
        %1713 = vst.msk [vmem:[%s419 + $0x388] sm:$0xff] %vm1599, %v1584
        %1714 = vst.msk [vmem:[%s419 + $0x390] sm:$0xff] %vm1599, %v1585
        %1715 = vst.msk [vmem:[%s419 + $0x398] sm:$0xff] %vm1599, %v1586
        %1716 = vst.msk [vmem:[%s419 + $0x3a0] sm:$0xff] %vm1599, %v1587
        %1717 = vst.msk [vmem:[%s419 + $0x3a8] sm:$0xff] %vm1599, %v1588
        %1718 = vst.msk [vmem:[%s419 + $0x3b0] sm:$0xff] %vm1599, %v1589
        %1719 = vst.msk [vmem:[%s419 + $0x3b8] sm:$0xff] %vm1599, %v1590
        %1720 = vst.msk [vmem:[%s419 + $0x3c0] sm:$0xff] %vm1599, %v1591
        %1721 = vst.msk [vmem:[%s419 + $0x3c8] sm:$0xff] %vm1599, %v1592
        %1722 = vst.msk [vmem:[%s419 + $0x3d0] sm:$0xff] %vm1599, %v1593
        %1723 = vst.msk [vmem:[%s419 + $0x3d8] sm:$0xff] %vm1599, %v1594
        %1724 = vst.msk [vmem:[%s419 + $0x3e0] sm:$0xff] %vm1599, %v1595
        %1725 = vst.msk [vmem:[%s419 + $0x3e8] sm:$0xff] %vm1599, %v1596
        %1726 = vst.msk [vmem:[%s419 + $0x3f0] sm:$0xff] %vm1599, %v1597
        %1727 = vst.msk [vmem:[%s419 + $0x3f8] sm:$0xff] %vm1599, %v1598
        %v1728 = vmul.f32 %v573, %v1087
        %v1729 = vmul.f32 %v574, %v1088
        %v1730 = vmul.f32 %v575, %v1089
        %v1731 = vmul.f32 %v576, %v1090
        %v1732 = vmul.f32 %v577, %v1091
        %v1733 = vmul.f32 %v578, %v1092
        %v1734 = vmul.f32 %v579, %v1093
        %v1735 = vmul.f32 %v580, %v1094
        %v1736 = vmul.f32 %v581, %v1095
        %v1737 = vmul.f32 %v582, %v1096
        %v1738 = vmul.f32 %v583, %v1097
        %v1739 = vmul.f32 %v584, %v1098
        %v1740 = vmul.f32 %v585, %v1099
        %v1741 = vmul.f32 %v586, %v1100
        %v1742 = vmul.f32 %v587, %v1101
        %v1743 = vmul.f32 %v588, %v1102
        %v1744 = vmul.f32 %v589, %v1103
        %v1745 = vmul.f32 %v590, %v1104
        %v1746 = vmul.f32 %v591, %v1105
        %v1747 = vmul.f32 %v592, %v1106
        %v1748 = vmul.f32 %v593, %v1107
        %v1749 = vmul.f32 %v594, %v1108
        %v1750 = vmul.f32 %v595, %v1109
        %v1751 = vmul.f32 %v596, %v1110
        %v1752 = vmul.f32 %v597, %v1111
        %v1753 = vmul.f32 %v598, %v1112
        %v1754 = vmul.f32 %v599, %v1113
        %v1755 = vmul.f32 %v600, %v1114
        %v1756 = vmul.f32 %v601, %v1115
        %v1757 = vmul.f32 %v602, %v1116
        %v1758 = vmul.f32 %v603, %v1117
        %v1759 = vmul.f32 %v604, %v1118
        %v1760 = vmul.f32 %v605, %v1119
        %v1761 = vmul.f32 %v606, %v1120
        %v1762 = vmul.f32 %v607, %v1121
        %v1763 = vmul.f32 %v608, %v1122
        %v1764 = vmul.f32 %v609, %v1123
        %v1765 = vmul.f32 %v610, %v1124
        %v1766 = vmul.f32 %v611, %v1125
        %v1767 = vmul.f32 %v612, %v1126
        %v1768 = vmul.f32 %v613, %v1127
        %v1769 = vmul.f32 %v614, %v1128
        %v1770 = vmul.f32 %v615, %v1129
        %v1771 = vmul.f32 %v616, %v1130
        %v1772 = vmul.f32 %v617, %v1131
        %v1773 = vmul.f32 %v618, %v1132
        %v1774 = vmul.f32 %v619, %v1133
        %v1775 = vmul.f32 %v620, %v1134
        %v1776 = vmul.f32 %v621, %v1135
        %v1777 = vmul.f32 %v622, %v1136
        %v1778 = vmul.f32 %v623, %v1137
        %v1779 = vmul.f32 %v624, %v1138
        %v1780 = vmul.f32 %v625, %v1139
        %v1781 = vmul.f32 %v626, %v1140
        %v1782 = vmul.f32 %v627, %v1141
        %v1783 = vmul.f32 %v628, %v1142
        %v1784 = vmul.f32 %v629, %v1143
        %v1785 = vmul.f32 %v630, %v1144
        %v1786 = vmul.f32 %v631, %v1145
        %v1787 = vmul.f32 %v632, %v1146
        %v1788 = vmul.f32 %v633, %v1147
        %v1789 = vmul.f32 %v634, %v1148
        %v1790 = vmul.f32 %v635, %v1149
        %v1791 = vmul.f32 %v636, %v1150
        %v1792 = vmul.f32 %v637, %v1151
        %v1793 = vmul.f32 %v638, %v1152
        %v1794 = vmul.f32 %v639, %v1153
        %v1795 = vmul.f32 %v640, %v1154
        %v1796 = vmul.f32 %v641, %v1155
        %v1797 = vmul.f32 %v642, %v1156
        %v1798 = vmul.f32 %v643, %v1157
        %v1799 = vmul.f32 %v644, %v1158
        %v1800 = vmul.f32 %v645, %v1159
        %v1801 = vmul.f32 %v646, %v1160
        %v1802 = vmul.f32 %v647, %v1161
        %v1803 = vmul.f32 %v648, %v1162
        %v1804 = vmul.f32 %v649, %v1163
        %v1805 = vmul.f32 %v650, %v1164
        %v1806 = vmul.f32 %v651, %v1165
        %v1807 = vmul.f32 %v652, %v1166
        %v1808 = vmul.f32 %v653, %v1167
        %v1809 = vmul.f32 %v654, %v1168
        %v1810 = vmul.f32 %v655, %v1169
        %v1811 = vmul.f32 %v656, %v1170
        %v1812 = vmul.f32 %v657, %v1171
        %v1813 = vmul.f32 %v658, %v1172
        %v1814 = vmul.f32 %v659, %v1173
        %v1815 = vmul.f32 %v660, %v1174
        %v1816 = vmul.f32 %v661, %v1175
        %v1817 = vmul.f32 %v662, %v1176
        %v1818 = vmul.f32 %v663, %v1177
        %v1819 = vmul.f32 %v664, %v1178
        %v1820 = vmul.f32 %v665, %v1179
        %v1821 = vmul.f32 %v666, %v1180
        %v1822 = vmul.f32 %v667, %v1181
        %v1823 = vmul.f32 %v668, %v1182
        %v1824 = vmul.f32 %v669, %v1183
        %v1825 = vmul.f32 %v670, %v1184
        %v1826 = vmul.f32 %v671, %v1185
        %v1827 = vmul.f32 %v672, %v1186
        %v1828 = vmul.f32 %v673, %v1187
        %v1829 = vmul.f32 %v674, %v1188
        %v1830 = vmul.f32 %v675, %v1189
        %v1831 = vmul.f32 %v676, %v1190
        %v1832 = vmul.f32 %v677, %v1191
        %v1833 = vmul.f32 %v678, %v1192
        %v1834 = vmul.f32 %v679, %v1193
        %v1835 = vmul.f32 %v680, %v1194
        %v1836 = vmul.f32 %v681, %v1195
        %v1837 = vmul.f32 %v682, %v1196
        %v1838 = vmul.f32 %v683, %v1197
        %v1839 = vmul.f32 %v684, %v1198
        %v1840 = vmul.f32 %v685, %v1199
        %v1841 = vmul.f32 %v686, %v1200
        %v1842 = vmul.f32 %v687, %v1201
        %v1843 = vmul.f32 %v688, %v1202
        %v1844 = vmul.f32 %v689, %v1203
        %v1845 = vmul.f32 %v690, %v1204
        %v1846 = vmul.f32 %v691, %v1205
        %v1847 = vmul.f32 %v692, %v1206
        %v1848 = vmul.f32 %v693, %v1207
        %v1849 = vmul.f32 %v694, %v1208
        %v1850 = vmul.f32 %v695, %v1209
        %v1851 = vmul.f32 %v696, %v1210
        %v1852 = vmul.f32 %v697, %v1211
        %v1853 = vmul.f32 %v698, %v1212
        %v1854 = vmul.f32 %v699, %v1213
        %v1855 = vmul.f32 %v700, %v1214
        %v1856 = vmul.f32 %v831, %v959
        %v1857 = vmul.f32 %v832, %v960
        %v1858 = vmul.f32 %v833, %v961
        %v1859 = vmul.f32 %v834, %v962
        %v1860 = vmul.f32 %v835, %v963
        %v1861 = vmul.f32 %v836, %v964
        %v1862 = vmul.f32 %v837, %v965
        %v1863 = vmul.f32 %v838, %v966
        %v1864 = vmul.f32 %v839, %v967
        %v1865 = vmul.f32 %v840, %v968
        %v1866 = vmul.f32 %v841, %v969
        %v1867 = vmul.f32 %v842, %v970
        %v1868 = vmul.f32 %v843, %v971
        %v1869 = vmul.f32 %v844, %v972
        %v1870 = vmul.f32 %v845, %v973
        %v1871 = vmul.f32 %v846, %v974
        %v1872 = vmul.f32 %v847, %v975
        %v1873 = vmul.f32 %v848, %v976
        %v1874 = vmul.f32 %v849, %v977
        %v1875 = vmul.f32 %v850, %v978
        %v1876 = vmul.f32 %v851, %v979
        %v1877 = vmul.f32 %v852, %v980
        %v1878 = vmul.f32 %v853, %v981
        %v1879 = vmul.f32 %v854, %v982
        %v1880 = vmul.f32 %v855, %v983
        %v1881 = vmul.f32 %v856, %v984
        %v1882 = vmul.f32 %v857, %v985
        %v1883 = vmul.f32 %v858, %v986
        %v1884 = vmul.f32 %v859, %v987
        %v1885 = vmul.f32 %v860, %v988
        %v1886 = vmul.f32 %v861, %v989
        %v1887 = vmul.f32 %v862, %v990
        %v1888 = vmul.f32 %v863, %v991
        %v1889 = vmul.f32 %v864, %v992
        %v1890 = vmul.f32 %v865, %v993
        %v1891 = vmul.f32 %v866, %v994
        %v1892 = vmul.f32 %v867, %v995
        %v1893 = vmul.f32 %v868, %v996
        %v1894 = vmul.f32 %v869, %v997
        %v1895 = vmul.f32 %v870, %v998
        %v1896 = vmul.f32 %v871, %v999
        %v1897 = vmul.f32 %v872, %v1000
        %v1898 = vmul.f32 %v873, %v1001
        %v1899 = vmul.f32 %v874, %v1002
        %v1900 = vmul.f32 %v875, %v1003
        %v1901 = vmul.f32 %v876, %v1004
        %v1902 = vmul.f32 %v877, %v1005
        %v1903 = vmul.f32 %v878, %v1006
        %v1904 = vmul.f32 %v879, %v1007
        %v1905 = vmul.f32 %v880, %v1008
        %v1906 = vmul.f32 %v881, %v1009
        %v1907 = vmul.f32 %v882, %v1010
        %v1908 = vmul.f32 %v883, %v1011
        %v1909 = vmul.f32 %v884, %v1012
        %v1910 = vmul.f32 %v885, %v1013
        %v1911 = vmul.f32 %v886, %v1014
        %v1912 = vmul.f32 %v887, %v1015
        %v1913 = vmul.f32 %v888, %v1016
        %v1914 = vmul.f32 %v889, %v1017
        %v1915 = vmul.f32 %v890, %v1018
        %v1916 = vmul.f32 %v891, %v1019
        %v1917 = vmul.f32 %v892, %v1020
        %v1918 = vmul.f32 %v893, %v1021
        %v1919 = vmul.f32 %v894, %v1022
        %v1920 = vmul.f32 %v895, %v1023
        %v1921 = vmul.f32 %v896, %v1024
        %v1922 = vmul.f32 %v897, %v1025
        %v1923 = vmul.f32 %v898, %v1026
        %v1924 = vmul.f32 %v899, %v1027
        %v1925 = vmul.f32 %v900, %v1028
        %v1926 = vmul.f32 %v901, %v1029
        %v1927 = vmul.f32 %v902, %v1030
        %v1928 = vmul.f32 %v903, %v1031
        %v1929 = vmul.f32 %v904, %v1032
        %v1930 = vmul.f32 %v905, %v1033
        %v1931 = vmul.f32 %v906, %v1034
        %v1932 = vmul.f32 %v907, %v1035
        %v1933 = vmul.f32 %v908, %v1036
        %v1934 = vmul.f32 %v909, %v1037
        %v1935 = vmul.f32 %v910, %v1038
        %v1936 = vmul.f32 %v911, %v1039
        %v1937 = vmul.f32 %v912, %v1040
        %v1938 = vmul.f32 %v913, %v1041
        %v1939 = vmul.f32 %v914, %v1042
        %v1940 = vmul.f32 %v915, %v1043
        %v1941 = vmul.f32 %v916, %v1044
        %v1942 = vmul.f32 %v917, %v1045
        %v1943 = vmul.f32 %v918, %v1046
        %v1944 = vmul.f32 %v919, %v1047
        %v1945 = vmul.f32 %v920, %v1048
        %v1946 = vmul.f32 %v921, %v1049
        %v1947 = vmul.f32 %v922, %v1050
        %v1948 = vmul.f32 %v923, %v1051
        %v1949 = vmul.f32 %v924, %v1052
        %v1950 = vmul.f32 %v925, %v1053
        %v1951 = vmul.f32 %v926, %v1054
        %v1952 = vmul.f32 %v927, %v1055
        %v1953 = vmul.f32 %v928, %v1056
        %v1954 = vmul.f32 %v929, %v1057
        %v1955 = vmul.f32 %v930, %v1058
        %v1956 = vmul.f32 %v931, %v1059
        %v1957 = vmul.f32 %v932, %v1060
        %v1958 = vmul.f32 %v933, %v1061
        %v1959 = vmul.f32 %v934, %v1062
        %v1960 = vmul.f32 %v935, %v1063
        %v1961 = vmul.f32 %v936, %v1064
        %v1962 = vmul.f32 %v937, %v1065
        %v1963 = vmul.f32 %v938, %v1066
        %v1964 = vmul.f32 %v939, %v1067
        %v1965 = vmul.f32 %v940, %v1068
        %v1966 = vmul.f32 %v941, %v1069
        %v1967 = vmul.f32 %v942, %v1070
        %v1968 = vmul.f32 %v943, %v1071
        %v1969 = vmul.f32 %v944, %v1072
        %v1970 = vmul.f32 %v945, %v1073
        %v1971 = vmul.f32 %v946, %v1074
        %v1972 = vmul.f32 %v947, %v1075
        %v1973 = vmul.f32 %v948, %v1076
        %v1974 = vmul.f32 %v949, %v1077
        %v1975 = vmul.f32 %v950, %v1078
        %v1976 = vmul.f32 %v951, %v1079
        %v1977 = vmul.f32 %v952, %v1080
        %v1978 = vmul.f32 %v953, %v1081
        %v1979 = vmul.f32 %v954, %v1082
        %v1980 = vmul.f32 %v955, %v1083
        %v1981 = vmul.f32 %v956, %v1084
        %v1982 = vmul.f32 %v957, %v1085
        %v1983 = vmul.f32 %v958, %v1086
        %v1984 = vadd.f32 %v1728, %v1856
        %v1985 = vadd.f32 %v1729, %v1857
        %v1986 = vadd.f32 %v1730, %v1858
        %v1987 = vadd.f32 %v1731, %v1859
        %v1988 = vadd.f32 %v1732, %v1860
        %v1989 = vadd.f32 %v1733, %v1861
        %v1990 = vadd.f32 %v1734, %v1862
        %v1991 = vadd.f32 %v1735, %v1863
        %v1992 = vadd.f32 %v1736, %v1864
        %v1993 = vadd.f32 %v1737, %v1865
        %v1994 = vadd.f32 %v1738, %v1866
        %v1995 = vadd.f32 %v1739, %v1867
        %v1996 = vadd.f32 %v1740, %v1868
        %v1997 = vadd.f32 %v1741, %v1869
        %v1998 = vadd.f32 %v1742, %v1870
        %v1999 = vadd.f32 %v1743, %v1871
        %v2000 = vadd.f32 %v1744, %v1872
        %v2001 = vadd.f32 %v1745, %v1873
        %v2002 = vadd.f32 %v1746, %v1874
        %v2003 = vadd.f32 %v1747, %v1875
        %v2004 = vadd.f32 %v1748, %v1876
        %v2005 = vadd.f32 %v1749, %v1877
        %v2006 = vadd.f32 %v1750, %v1878
        %v2007 = vadd.f32 %v1751, %v1879
        %v2008 = vadd.f32 %v1752, %v1880
        %v2009 = vadd.f32 %v1753, %v1881
        %v2010 = vadd.f32 %v1754, %v1882
        %v2011 = vadd.f32 %v1755, %v1883
        %v2012 = vadd.f32 %v1756, %v1884
        %v2013 = vadd.f32 %v1757, %v1885
        %v2014 = vadd.f32 %v1758, %v1886
        %v2015 = vadd.f32 %v1759, %v1887
        %v2016 = vadd.f32 %v1760, %v1888
        %v2017 = vadd.f32 %v1761, %v1889
        %v2018 = vadd.f32 %v1762, %v1890
        %v2019 = vadd.f32 %v1763, %v1891
        %v2020 = vadd.f32 %v1764, %v1892
        %v2021 = vadd.f32 %v1765, %v1893
        %v2022 = vadd.f32 %v1766, %v1894
        %v2023 = vadd.f32 %v1767, %v1895
        %v2024 = vadd.f32 %v1768, %v1896
        %v2025 = vadd.f32 %v1769, %v1897
        %v2026 = vadd.f32 %v1770, %v1898
        %v2027 = vadd.f32 %v1771, %v1899
        %v2028 = vadd.f32 %v1772, %v1900
        %v2029 = vadd.f32 %v1773, %v1901
        %v2030 = vadd.f32 %v1774, %v1902
        %v2031 = vadd.f32 %v1775, %v1903
        %v2032 = vadd.f32 %v1776, %v1904
        %v2033 = vadd.f32 %v1777, %v1905
        %v2034 = vadd.f32 %v1778, %v1906
        %v2035 = vadd.f32 %v1779, %v1907
        %v2036 = vadd.f32 %v1780, %v1908
        %v2037 = vadd.f32 %v1781, %v1909
        %v2038 = vadd.f32 %v1782, %v1910
        %v2039 = vadd.f32 %v1783, %v1911
        %v2040 = vadd.f32 %v1784, %v1912
        %v2041 = vadd.f32 %v1785, %v1913
        %v2042 = vadd.f32 %v1786, %v1914
        %v2043 = vadd.f32 %v1787, %v1915
        %v2044 = vadd.f32 %v1788, %v1916
        %v2045 = vadd.f32 %v1789, %v1917
        %v2046 = vadd.f32 %v1790, %v1918
        %v2047 = vadd.f32 %v1791, %v1919
        %v2048 = vadd.f32 %v1792, %v1920
        %v2049 = vadd.f32 %v1793, %v1921
        %v2050 = vadd.f32 %v1794, %v1922
        %v2051 = vadd.f32 %v1795, %v1923
        %v2052 = vadd.f32 %v1796, %v1924
        %v2053 = vadd.f32 %v1797, %v1925
        %v2054 = vadd.f32 %v1798, %v1926
        %v2055 = vadd.f32 %v1799, %v1927
        %v2056 = vadd.f32 %v1800, %v1928
        %v2057 = vadd.f32 %v1801, %v1929
        %v2058 = vadd.f32 %v1802, %v1930
        %v2059 = vadd.f32 %v1803, %v1931
        %v2060 = vadd.f32 %v1804, %v1932
        %v2061 = vadd.f32 %v1805, %v1933
        %v2062 = vadd.f32 %v1806, %v1934
        %v2063 = vadd.f32 %v1807, %v1935
        %v2064 = vadd.f32 %v1808, %v1936
        %v2065 = vadd.f32 %v1809, %v1937
        %v2066 = vadd.f32 %v1810, %v1938
        %v2067 = vadd.f32 %v1811, %v1939
        %v2068 = vadd.f32 %v1812, %v1940
        %v2069 = vadd.f32 %v1813, %v1941
        %v2070 = vadd.f32 %v1814, %v1942
        %v2071 = vadd.f32 %v1815, %v1943
        %v2072 = vadd.f32 %v1816, %v1944
        %v2073 = vadd.f32 %v1817, %v1945
        %v2074 = vadd.f32 %v1818, %v1946
        %v2075 = vadd.f32 %v1819, %v1947
        %v2076 = vadd.f32 %v1820, %v1948
        %v2077 = vadd.f32 %v1821, %v1949
        %v2078 = vadd.f32 %v1822, %v1950
        %v2079 = vadd.f32 %v1823, %v1951
        %v2080 = vadd.f32 %v1824, %v1952
        %v2081 = vadd.f32 %v1825, %v1953
        %v2082 = vadd.f32 %v1826, %v1954
        %v2083 = vadd.f32 %v1827, %v1955
        %v2084 = vadd.f32 %v1828, %v1956
        %v2085 = vadd.f32 %v1829, %v1957
        %v2086 = vadd.f32 %v1830, %v1958
        %v2087 = vadd.f32 %v1831, %v1959
        %v2088 = vadd.f32 %v1832, %v1960
        %v2089 = vadd.f32 %v1833, %v1961
        %v2090 = vadd.f32 %v1834, %v1962
        %v2091 = vadd.f32 %v1835, %v1963
        %v2092 = vadd.f32 %v1836, %v1964
        %v2093 = vadd.f32 %v1837, %v1965
        %v2094 = vadd.f32 %v1838, %v1966
        %v2095 = vadd.f32 %v1839, %v1967
        %v2096 = vadd.f32 %v1840, %v1968
        %v2097 = vadd.f32 %v1841, %v1969
        %v2098 = vadd.f32 %v1842, %v1970
        %v2099 = vadd.f32 %v1843, %v1971
        %v2100 = vadd.f32 %v1844, %v1972
        %v2101 = vadd.f32 %v1845, %v1973
        %v2102 = vadd.f32 %v1846, %v1974
        %v2103 = vadd.f32 %v1847, %v1975
        %v2104 = vadd.f32 %v1848, %v1976
        %v2105 = vadd.f32 %v1849, %v1977
        %v2106 = vadd.f32 %v1850, %v1978
        %v2107 = vadd.f32 %v1851, %v1979
        %v2108 = vadd.f32 %v1852, %v1980
        %v2109 = vadd.f32 %v1853, %v1981
        %v2110 = vadd.f32 %v1854, %v1982
        %v2111 = vadd.f32 %v1855, %v1983
        %2112 = vst.msk [vmem:[%s426] sm:$0xff] %vm1599, %v1984
        %2113 = vst.msk [vmem:[%s426 + $0x8] sm:$0xff] %vm1599, %v1985
        %2114 = vst.msk [vmem:[%s426 + $0x10] sm:$0xff] %vm1599, %v1986
        %2115 = vst.msk [vmem:[%s426 + $0x18] sm:$0xff] %vm1599, %v1987
        %2116 = vst.msk [vmem:[%s426 + $0x20] sm:$0xff] %vm1599, %v1988
        %2117 = vst.msk [vmem:[%s426 + $0x28] sm:$0xff] %vm1599, %v1989
        %2118 = vst.msk [vmem:[%s426 + $0x30] sm:$0xff] %vm1599, %v1990
        %2119 = vst.msk [vmem:[%s426 + $0x38] sm:$0xff] %vm1599, %v1991
        %2120 = vst.msk [vmem:[%s426 + $0x40] sm:$0xff] %vm1599, %v1992
        %2121 = vst.msk [vmem:[%s426 + $0x48] sm:$0xff] %vm1599, %v1993
        %2122 = vst.msk [vmem:[%s426 + $0x50] sm:$0xff] %vm1599, %v1994
        %2123 = vst.msk [vmem:[%s426 + $0x58] sm:$0xff] %vm1599, %v1995
        %2124 = vst.msk [vmem:[%s426 + $0x60] sm:$0xff] %vm1599, %v1996
        %2125 = vst.msk [vmem:[%s426 + $0x68] sm:$0xff] %vm1599, %v1997
        %2126 = vst.msk [vmem:[%s426 + $0x70] sm:$0xff] %vm1599, %v1998
        %2127 = vst.msk [vmem:[%s426 + $0x78] sm:$0xff] %vm1599, %v1999
        %2128 = vst.msk [vmem:[%s426 + $0x80] sm:$0xff] %vm1599, %v2000
        %2129 = vst.msk [vmem:[%s426 + $0x88] sm:$0xff] %vm1599, %v2001
        %2130 = vst.msk [vmem:[%s426 + $0x90] sm:$0xff] %vm1599, %v2002
        %2131 = vst.msk [vmem:[%s426 + $0x98] sm:$0xff] %vm1599, %v2003
        %2132 = vst.msk [vmem:[%s426 + $0xa0] sm:$0xff] %vm1599, %v2004
        %2133 = vst.msk [vmem:[%s426 + $0xa8] sm:$0xff] %vm1599, %v2005
        %2134 = vst.msk [vmem:[%s426 + $0xb0] sm:$0xff] %vm1599, %v2006
        %2135 = vst.msk [vmem:[%s426 + $0xb8] sm:$0xff] %vm1599, %v2007
        %2136 = vst.msk [vmem:[%s426 + $0xc0] sm:$0xff] %vm1599, %v2008
        %2137 = vst.msk [vmem:[%s426 + $0xc8] sm:$0xff] %vm1599, %v2009
        %2138 = vst.msk [vmem:[%s426 + $0xd0] sm:$0xff] %vm1599, %v2010
        %2139 = vst.msk [vmem:[%s426 + $0xd8] sm:$0xff] %vm1599, %v2011
        %2140 = vst.msk [vmem:[%s426 + $0xe0] sm:$0xff] %vm1599, %v2012
        %2141 = vst.msk [vmem:[%s426 + $0xe8] sm:$0xff] %vm1599, %v2013
        %2142 = vst.msk [vmem:[%s426 + $0xf0] sm:$0xff] %vm1599, %v2014
        %2143 = vst.msk [vmem:[%s426 + $0xf8] sm:$0xff] %vm1599, %v2015
        %2144 = vst.msk [vmem:[%s426 + $0x100] sm:$0xff] %vm1599, %v2016
        %2145 = vst.msk [vmem:[%s426 + $0x108] sm:$0xff] %vm1599, %v2017
        %2146 = vst.msk [vmem:[%s426 + $0x110] sm:$0xff] %vm1599, %v2018
        %2147 = vst.msk [vmem:[%s426 + $0x118] sm:$0xff] %vm1599, %v2019
        %2148 = vst.msk [vmem:[%s426 + $0x120] sm:$0xff] %vm1599, %v2020
        %2149 = vst.msk [vmem:[%s426 + $0x128] sm:$0xff] %vm1599, %v2021
        %2150 = vst.msk [vmem:[%s426 + $0x130] sm:$0xff] %vm1599, %v2022
        %2151 = vst.msk [vmem:[%s426 + $0x138] sm:$0xff] %vm1599, %v2023
        %2152 = vst.msk [vmem:[%s426 + $0x140] sm:$0xff] %vm1599, %v2024
        %2153 = vst.msk [vmem:[%s426 + $0x148] sm:$0xff] %vm1599, %v2025
        %2154 = vst.msk [vmem:[%s426 + $0x150] sm:$0xff] %vm1599, %v2026
        %2155 = vst.msk [vmem:[%s426 + $0x158] sm:$0xff] %vm1599, %v2027
        %2156 = vst.msk [vmem:[%s426 + $0x160] sm:$0xff] %vm1599, %v2028
        %2157 = vst.msk [vmem:[%s426 + $0x168] sm:$0xff] %vm1599, %v2029
        %2158 = vst.msk [vmem:[%s426 + $0x170] sm:$0xff] %vm1599, %v2030
        %2159 = vst.msk [vmem:[%s426 + $0x178] sm:$0xff] %vm1599, %v2031
        %2160 = vst.msk [vmem:[%s426 + $0x180] sm:$0xff] %vm1599, %v2032
        %2161 = vst.msk [vmem:[%s426 + $0x188] sm:$0xff] %vm1599, %v2033
        %2162 = vst.msk [vmem:[%s426 + $0x190] sm:$0xff] %vm1599, %v2034
        %2163 = vst.msk [vmem:[%s426 + $0x198] sm:$0xff] %vm1599, %v2035
        %2164 = vst.msk [vmem:[%s426 + $0x1a0] sm:$0xff] %vm1599, %v2036
        %2165 = vst.msk [vmem:[%s426 + $0x1a8] sm:$0xff] %vm1599, %v2037
        %2166 = vst.msk [vmem:[%s426 + $0x1b0] sm:$0xff] %vm1599, %v2038
        %2167 = vst.msk [vmem:[%s426 + $0x1b8] sm:$0xff] %vm1599, %v2039
        %2168 = vst.msk [vmem:[%s426 + $0x1c0] sm:$0xff] %vm1599, %v2040
        %2169 = vst.msk [vmem:[%s426 + $0x1c8] sm:$0xff] %vm1599, %v2041
        %2170 = vst.msk [vmem:[%s426 + $0x1d0] sm:$0xff] %vm1599, %v2042
        %2171 = vst.msk [vmem:[%s426 + $0x1d8] sm:$0xff] %vm1599, %v2043
        %2172 = vst.msk [vmem:[%s426 + $0x1e0] sm:$0xff] %vm1599, %v2044
        %2173 = vst.msk [vmem:[%s426 + $0x1e8] sm:$0xff] %vm1599, %v2045
        %2174 = vst.msk [vmem:[%s426 + $0x1f0] sm:$0xff] %vm1599, %v2046
        %2175 = vst.msk [vmem:[%s426 + $0x1f8] sm:$0xff] %vm1599, %v2047
        %2176 = vst.msk [vmem:[%s426 + $0x200] sm:$0xff] %vm1599, %v2048
        %2177 = vst.msk [vmem:[%s426 + $0x208] sm:$0xff] %vm1599, %v2049
        %2178 = vst.msk [vmem:[%s426 + $0x210] sm:$0xff] %vm1599, %v2050
        %2179 = vst.msk [vmem:[%s426 + $0x218] sm:$0xff] %vm1599, %v2051
        %2180 = vst.msk [vmem:[%s426 + $0x220] sm:$0xff] %vm1599, %v2052
        %2181 = vst.msk [vmem:[%s426 + $0x228] sm:$0xff] %vm1599, %v2053
        %2182 = vst.msk [vmem:[%s426 + $0x230] sm:$0xff] %vm1599, %v2054
        %2183 = vst.msk [vmem:[%s426 + $0x238] sm:$0xff] %vm1599, %v2055
        %2184 = vst.msk [vmem:[%s426 + $0x240] sm:$0xff] %vm1599, %v2056
        %2185 = vst.msk [vmem:[%s426 + $0x248] sm:$0xff] %vm1599, %v2057
        %2186 = vst.msk [vmem:[%s426 + $0x250] sm:$0xff] %vm1599, %v2058
        %2187 = vst.msk [vmem:[%s426 + $0x258] sm:$0xff] %vm1599, %v2059
        %2188 = vst.msk [vmem:[%s426 + $0x260] sm:$0xff] %vm1599, %v2060
        %2189 = vst.msk [vmem:[%s426 + $0x268] sm:$0xff] %vm1599, %v2061
        %2190 = vst.msk [vmem:[%s426 + $0x270] sm:$0xff] %vm1599, %v2062
        %2191 = vst.msk [vmem:[%s426 + $0x278] sm:$0xff] %vm1599, %v2063
        %2192 = vst.msk [vmem:[%s426 + $0x280] sm:$0xff] %vm1599, %v2064
        %2193 = vst.msk [vmem:[%s426 + $0x288] sm:$0xff] %vm1599, %v2065
        %2194 = vst.msk [vmem:[%s426 + $0x290] sm:$0xff] %vm1599, %v2066
        %2195 = vst.msk [vmem:[%s426 + $0x298] sm:$0xff] %vm1599, %v2067
        %2196 = vst.msk [vmem:[%s426 + $0x2a0] sm:$0xff] %vm1599, %v2068
        %2197 = vst.msk [vmem:[%s426 + $0x2a8] sm:$0xff] %vm1599, %v2069
        %2198 = vst.msk [vmem:[%s426 + $0x2b0] sm:$0xff] %vm1599, %v2070
        %2199 = vst.msk [vmem:[%s426 + $0x2b8] sm:$0xff] %vm1599, %v2071
        %2200 = vst.msk [vmem:[%s426 + $0x2c0] sm:$0xff] %vm1599, %v2072
        %2201 = vst.msk [vmem:[%s426 + $0x2c8] sm:$0xff] %vm1599, %v2073
        %2202 = vst.msk [vmem:[%s426 + $0x2d0] sm:$0xff] %vm1599, %v2074
        %2203 = vst.msk [vmem:[%s426 + $0x2d8] sm:$0xff] %vm1599, %v2075
        %2204 = vst.msk [vmem:[%s426 + $0x2e0] sm:$0xff] %vm1599, %v2076
        %2205 = vst.msk [vmem:[%s426 + $0x2e8] sm:$0xff] %vm1599, %v2077
        %2206 = vst.msk [vmem:[%s426 + $0x2f0] sm:$0xff] %vm1599, %v2078
        %2207 = vst.msk [vmem:[%s426 + $0x2f8] sm:$0xff] %vm1599, %v2079
        %2208 = vst.msk [vmem:[%s426 + $0x300] sm:$0xff] %vm1599, %v2080
        %2209 = vst.msk [vmem:[%s426 + $0x308] sm:$0xff] %vm1599, %v2081
        %2210 = vst.msk [vmem:[%s426 + $0x310] sm:$0xff] %vm1599, %v2082
        %2211 = vst.msk [vmem:[%s426 + $0x318] sm:$0xff] %vm1599, %v2083
        %2212 = vst.msk [vmem:[%s426 + $0x320] sm:$0xff] %vm1599, %v2084
        %2213 = vst.msk [vmem:[%s426 + $0x328] sm:$0xff] %vm1599, %v2085
        %2214 = vst.msk [vmem:[%s426 + $0x330] sm:$0xff] %vm1599, %v2086
        %2215 = vst.msk [vmem:[%s426 + $0x338] sm:$0xff] %vm1599, %v2087
        %2216 = vst.msk [vmem:[%s426 + $0x340] sm:$0xff] %vm1599, %v2088
        %2217 = vst.msk [vmem:[%s426 + $0x348] sm:$0xff] %vm1599, %v2089
        %2218 = vst.msk [vmem:[%s426 + $0x350] sm:$0xff] %vm1599, %v2090
        %2219 = vst.msk [vmem:[%s426 + $0x358] sm:$0xff] %vm1599, %v2091
        %2220 = vst.msk [vmem:[%s426 + $0x360] sm:$0xff] %vm1599, %v2092
        %2221 = vst.msk [vmem:[%s426 + $0x368] sm:$0xff] %vm1599, %v2093
        %2222 = vst.msk [vmem:[%s426 + $0x370] sm:$0xff] %vm1599, %v2094
        %2223 = vst.msk [vmem:[%s426 + $0x378] sm:$0xff] %vm1599, %v2095
        %2224 = vst.msk [vmem:[%s426 + $0x380] sm:$0xff] %vm1599, %v2096
        %2225 = vst.msk [vmem:[%s426 + $0x388] sm:$0xff] %vm1599, %v2097
        %2226 = vst.msk [vmem:[%s426 + $0x390] sm:$0xff] %vm1599, %v2098
        %2227 = vst.msk [vmem:[%s426 + $0x398] sm:$0xff] %vm1599, %v2099
        %2228 = vst.msk [vmem:[%s426 + $0x3a0] sm:$0xff] %vm1599, %v2100
        %2229 = vst.msk [vmem:[%s426 + $0x3a8] sm:$0xff] %vm1599, %v2101
        %2230 = vst.msk [vmem:[%s426 + $0x3b0] sm:$0xff] %vm1599, %v2102
        %2231 = vst.msk [vmem:[%s426 + $0x3b8] sm:$0xff] %vm1599, %v2103
        %2232 = vst.msk [vmem:[%s426 + $0x3c0] sm:$0xff] %vm1599, %v2104
        %2233 = vst.msk [vmem:[%s426 + $0x3c8] sm:$0xff] %vm1599, %v2105
        %2234 = vst.msk [vmem:[%s426 + $0x3d0] sm:$0xff] %vm1599, %v2106
        %2235 = vst.msk [vmem:[%s426 + $0x3d8] sm:$0xff] %vm1599, %v2107
        %2236 = vst.msk [vmem:[%s426 + $0x3e0] sm:$0xff] %vm1599, %v2108
        %2237 = vst.msk [vmem:[%s426 + $0x3e8] sm:$0xff] %vm1599, %v2109
        %2238 = vst.msk [vmem:[%s426 + $0x3f0] sm:$0xff] %vm1599, %v2110
        %2239 = vst.msk [vmem:[%s426 + $0x3f8] sm:$0xff] %vm1599, %v2111
        %s2240 = sand.u32 %s203, 1
        %s2241 = scalar_lea.sflag [#allocation4], %s2240
        %s2242 = sand.u32 %s203, 1
        %s2243 = smul.addr %s2242, 1024
        %s2244 = scalar_lea.vmem [#allocation12], %s2243
        %s2245 = sand.u32 %s231, 1
        %s2246 = scalar_lea.sflag [#allocation14], %s2245
        %s2247 = sand.u32 %s231, 1
        %s2248 = smul.addr %s2247, 1024
        %s2249 = scalar_lea.vmem [#allocation13], %s2248
        // Predicated region
        $region65: #{_lambda_.6} parent=43 // pred_check
          %p2250 = pneg %p213
        $region66: #{_lambda_.6} parent=43 // pred_check_branch
          %2252 = sbr.rel (%p2250) target = $region68
        $region67: #{_lambda_.6} parent=43 // pred_region
          %s2253 = smul.u32 32, %s35
          %s2255 = ssub.s32 16384, 16384
          %2256 = vsyncadd %s2241, %s2255
          %s2257 = smul.addr %s2253, 4
          %s2258 = smul.addr %s36, 128
          %s2259 = sadd.s32 %s2257, %s2258
          %s2260 = smul.addr %s2259, 128
          %s2261 = scalar_lea.hbm %s6, %s2260
          %s2262 = sshll.u32 %s2244, 4
          %s2263 = int_to_ptr.vmem [resolvable:$true] %s2262
          %2268 = dma.vmem_to_hbm [thread:$0]  %s2263, 16384, %s2261, %s2241, 128, 128, 8
        $region68: #{_lambda_.6} parent=43 // pred_fallthru
          _
        // Predicated region
        $region69: #{_lambda_.6} parent=43 // pred_check
          %p2269 = pneg %p241
        $region70: #{_lambda_.6} parent=43 // pred_check_branch
          %2271 = sbr.rel (%p2269) target = $region72
        $region71: #{_lambda_.6} parent=43 // pred_region
          %s2272 = smul.u32 32, %s35
          %s2274 = ssub.s32 16384, 16384
          %2275 = vsyncadd %s2246, %s2274
          %s2276 = smul.addr %s2272, 4
          %s2277 = smul.addr %s36, 128
          %s2278 = sadd.s32 %s2276, %s2277
          %s2279 = smul.addr %s2278, 128
          %s2280 = scalar_lea.hbm %s7, %s2279
          %s2281 = sshll.u32 %s2249, 4
          %s2282 = int_to_ptr.vmem [resolvable:$true] %s2281
          %2287 = dma.vmem_to_hbm [thread:$0]  %s2282, 16384, %s2280, %s2246, 128, 128, 8
        $region72: #{_lambda_.6} parent=43 // pred_fallthru
          _
      $region44: #{_lambda_.6} parent=5 // pred_fallthru
        _
      %p2288 = scmp.le.s32.totalorder 2, %s26
      // Predicated region
      $region73: #{_lambda_.6} parent=5 // pred_check
        %p2289 = pneg %p2288
      $region74: #{_lambda_.6} parent=5 // pred_check_branch
        %2291 = sbr.rel (%p2289) target = $region76
      $region75: #{_lambda_.6} parent=5 // pred_region
        %s2292 = ssub.s32 %s26, 2
        // Predicated region
        $region77: #{_lambda_.6} parent=75 // pred_check
          %p2293 = pneg %p219
        $region78: #{_lambda_.6} parent=75 // pred_check_branch
          %2295 = sbr.rel (%p2293) target = $region80
        $region79: #{_lambda_.6} parent=75 // pred_region
          %s2296 = sand.u32 %s204, 1
          %s2297 = scalar_lea.sflag [#allocation4], %s2296
          %s2298 = sand.u32 %s204, 1
          %s2299 = smul.addr %s2298, 1024
          %s2300 = scalar_lea.vmem [#allocation12], %s2299
          %2301 = dma.done %s2297, 16384
        $region80: #{_lambda_.6} parent=75 // pred_fallthru
          _
        // Predicated region
        $region81: #{_lambda_.6} parent=75 // pred_check
          %p2302 = pneg %p247
        $region82: #{_lambda_.6} parent=75 // pred_check_branch
          %2304 = sbr.rel (%p2302) target = $region84
        $region83: #{_lambda_.6} parent=75 // pred_region
          %s2305 = sand.u32 %s232, 1
          %s2306 = scalar_lea.sflag [#allocation14], %s2305
          %s2307 = sand.u32 %s232, 1
          %s2308 = smul.addr %s2307, 1024
          %s2309 = scalar_lea.vmem [#allocation13], %s2308
          %2310 = dma.done %s2306, 16384
        $region84: #{_lambda_.6} parent=75 // pred_fallthru
          _
      $region76: #{_lambda_.6} parent=5 // pred_fallthru
        _
    $region6: #{_lambda_.6} parent=1 // loop_footer
      %s30 = sadd.s32 1, %s26
    $region7: #{_lambda_.6} parent=1 // loop_footer_branch
      %25 = sbr.rel target = $region3
    $region8: #{_lambda_.6} parent=1 // loop_exit
      _
    %2311 = vsyncpa [#allocation3], 1
    %s2312 = scalar_lea.sflag [#allocation3], 1
    %2313 = vsyncpa %s2312, 1
    %2314 = vsyncpa [#allocation10], 1
    %2315 = vsyncpa [#allocation4], 1
    %s2316 = scalar_lea.sflag [#allocation4], 1
    %2317 = vsyncpa %s2316, 1
    %2318 = vsyncpa [#allocation14], 1
    %s2319 = scalar_lea.sflag [#allocation14], 1
    %2320 = vsyncpa %s2319, 1
    %2321 = vsyncpa [#allocation5], 1
    %s2322 = scalar_lea.sflag [#allocation5], 1
    %2323 = vsyncpa %s2322, 1
    %2324 = vsyncpa [#allocation7], 1

// kernel: _lambda_.7
$region0: #{_lambda_.7}
  #allocation0 [shape = 'u32[]', space=smem, size = 0x4, offset = 0x4, fixed_abs, tag = 'smem constant byte address 0x4 - core index']
  #allocation1 [shape = 'u32[144,128]{1,0:T(1,128)}', space=vmem, size = 0x12000, scoped, tag = 'internal scratch']
  %s0 = inlined_call_operand.vmem [shape: f32[16,16], index: 0, kind: input, shape index: {}]
  %s1 = inlined_call_operand.vmem [shape: f32[32,16,256], index: 1, kind: input, shape index: {}, may-alias: {1,3}]
  %s2 = inlined_call_operand.vmem [shape: f32[32,16,256], index: 2, kind: input, shape index: {}, may-alias: {2,4}]
  %s3 = inlined_call_operand.vmem [shape: f32[32,16,256], index: 3, kind: input, shape index: {}, may-alias: {1,3}]
  %s4 = inlined_call_operand.vmem [shape: f32[32,16,256], index: 4, kind: input, shape index: {}, may-alias: {2,4}]
  %s5 = inlined_call_operand.vmem [shape: f32[16,16,256], index: 5, kind: output, shape index: {}]
  %s6 = sld [smem:[#allocation0]]
  $region53: #{_lambda_.7} parent=0
    _
  %s8 = ssub.s32 1, %s6
  %s9 = scalar_select 0, %s8, %s6
  loop: start=0, step=1, limit=18
  $region2: #{_lambda_.7} parent=0 // loop_pre_header
    _
  $region3: #{_lambda_.7} parent=0 // loop_header
    %s11 = sphi 0, %s15
    %p12 = scmp.ge.s32.totalorder %s11, 18
    %s18 = sphi 0, %s30
    %s19 = sphi 0, %s26
    %s20 = sphi 0, %s18
    %s21 = sphi 0, %s19
    %s22 = sphi 0, %s20
    %s23 = sphi 0, %s21
    %s31 = sphi 0, %s31
    %s33 = sphi 0, %s31
    %s34 = sphi 0, %s33
    %s48 = sphi 0, %s34
    %s56 = sphi 0, %s58
    %s59 = sphi 0, %s56
    %s60 = sphi 0, %s59
    %s76 = sphi 0, %s60
    %s84 = sphi 0, %s86
    %s87 = sphi 0, %s84
    %s88 = sphi 0, %s87
    %s104 = sphi 0, %s88
    %s114 = sphi 0, %s116
    %s117 = sphi 0, %s114
    %s118 = sphi 0, %s117
    %s134 = sphi 0, %s118
    %s144 = sphi 0, %s146
    %s147 = sphi 0, %s144
    %s148 = sphi 0, %s147
    %s164 = sphi 0, %s148
    %s172 = sphi 0, %s174
    %s175 = sphi 0, %s172
    %s176 = sphi 0, %s175
    %s192 = sphi 0, %s176
  $region4: #{_lambda_.7} parent=0 // loop_header_branch
    %14 = sbr.rel (%p12) target = $region8
  $region5: #{_lambda_.7} parent=0 // loop_body
    %s16 = ssub.s32 %s11, 1
    %s17 = ssub.s32 %s11, 2
    %s24 = sadd.s32 1, %s19
    %p25 = scmp.ge.s32.totalorder %s24, 1
    %s26 = scalar_select %p25, 0, %s24
    %s27 = sadd.s32 1, %s18
    %s28 = scalar_select %p25, %s27, %s18
    %p29 = scmp.ge.s32.totalorder %s28, 16
    %s30 = scalar_select %p29, 0, %s28
    %s32 = sadd.s32 %s31, 1
    %p35 = scmp.eq.s32.totalorder %s11, 15
    %p36 = scmp.ne.s32.totalorder %s31, %s33
    %p37 = scmp.eq.s32.totalorder %s11, 0
    %p38 = por %p36, %p37
    %p39 = scmp.ne.s32.totalorder %s31, %s33
    %p40 = scmp.eq.s32.totalorder %s16, 15
    %p41 = por %p39, %p40
    %p42 = scmp.ne.s32.totalorder %s33, %s34
    %p43 = scmp.eq.s32.totalorder %s16, 0
    %p44 = por %p42, %p43
    %p45 = scmp.ne.s32.totalorder %s33, %s34
    %p46 = scmp.eq.s32.totalorder %s17, 15
    %p47 = por %p45, %p46
    %p49 = scmp.ne.s32.totalorder %s34, %s48
    %p50 = scmp.eq.s32.totalorder %s17, 0
    %p51 = por %p49, %p50
    %s52 = ssub.s32 %s18, %s30
    %s53 = ssub.s32 %s19, %s26
    %s54 = sor.u32 %s52, %s53
    %p55 = scmp.eq.s32.totalorder %s54, 0
    %s57 = sadd.s32 %s56, 1
    %s58 = scalar_select %p55, %s56, %s57
    %p61 = pneg %p55
    %p62 = scmp.eq.s32.totalorder %s11, 15
    %p63 = por %p61, %p62
    %p64 = scmp.ne.s32.totalorder %s56, %s59
    %p65 = scmp.eq.s32.totalorder %s11, 0
    %p66 = por %p64, %p65
    %p67 = scmp.ne.s32.totalorder %s56, %s59
    %p68 = scmp.eq.s32.totalorder %s16, 15
    %p69 = por %p67, %p68
    %p70 = scmp.ne.s32.totalorder %s59, %s60
    %p71 = scmp.eq.s32.totalorder %s16, 0
    %p72 = por %p70, %p71
    %p73 = scmp.ne.s32.totalorder %s59, %s60
    %p74 = scmp.eq.s32.totalorder %s17, 15
    %p75 = por %p73, %p74
    %p77 = scmp.ne.s32.totalorder %s60, %s76
    %p78 = scmp.eq.s32.totalorder %s17, 0
    %p79 = por %p77, %p78
    %s80 = ssub.s32 %s18, %s30
    %s81 = ssub.s32 %s19, %s26
    %s82 = sor.u32 %s80, %s81
    %p83 = scmp.eq.s32.totalorder %s82, 0
    %s85 = sadd.s32 %s84, 1
    %s86 = scalar_select %p83, %s84, %s85
    %p89 = pneg %p83
    %p90 = scmp.eq.s32.totalorder %s11, 15
    %p91 = por %p89, %p90
    %p92 = scmp.ne.s32.totalorder %s84, %s87
    %p93 = scmp.eq.s32.totalorder %s11, 0
    %p94 = por %p92, %p93
    %p95 = scmp.ne.s32.totalorder %s84, %s87
    %p96 = scmp.eq.s32.totalorder %s16, 15
    %p97 = por %p95, %p96
    %p98 = scmp.ne.s32.totalorder %s87, %s88
    %p99 = scmp.eq.s32.totalorder %s16, 0
    %p100 = por %p98, %p99
    %p101 = scmp.ne.s32.totalorder %s87, %s88
    %p102 = scmp.eq.s32.totalorder %s17, 15
    %p103 = por %p101, %p102
    %p105 = scmp.ne.s32.totalorder %s88, %s104
    %p106 = scmp.eq.s32.totalorder %s17, 0
    %p107 = por %p105, %p106
    %s108 = sadd.s32 %s18, 16
    %s109 = sadd.s32 %s30, 16
    %s110 = ssub.s32 %s108, %s109
    %s111 = ssub.s32 %s19, %s26
    %s112 = sor.u32 %s110, %s111
    %p113 = scmp.eq.s32.totalorder %s112, 0
    %s115 = sadd.s32 %s114, 1
    %s116 = scalar_select %p113, %s114, %s115
    %p119 = pneg %p113
    %p120 = scmp.eq.s32.totalorder %s11, 15
    %p121 = por %p119, %p120
    %p122 = scmp.ne.s32.totalorder %s114, %s117
    %p123 = scmp.eq.s32.totalorder %s11, 0
    %p124 = por %p122, %p123
    %p125 = scmp.ne.s32.totalorder %s114, %s117
    %p126 = scmp.eq.s32.totalorder %s16, 15
    %p127 = por %p125, %p126
    %p128 = scmp.ne.s32.totalorder %s117, %s118
    %p129 = scmp.eq.s32.totalorder %s16, 0
    %p130 = por %p128, %p129
    %p131 = scmp.ne.s32.totalorder %s117, %s118
    %p132 = scmp.eq.s32.totalorder %s17, 15
    %p133 = por %p131, %p132
    %p135 = scmp.ne.s32.totalorder %s118, %s134
    %p136 = scmp.eq.s32.totalorder %s17, 0
    %p137 = por %p135, %p136
    %s138 = sadd.s32 %s18, 16
    %s139 = sadd.s32 %s30, 16
    %s140 = ssub.s32 %s138, %s139
    %s141 = ssub.s32 %s19, %s26
    %s142 = sor.u32 %s140, %s141
    %p143 = scmp.eq.s32.totalorder %s142, 0
    %s145 = sadd.s32 %s144, 1
    %s146 = scalar_select %p143, %s144, %s145
    %p149 = pneg %p143
    %p150 = scmp.eq.s32.totalorder %s11, 15
    %p151 = por %p149, %p150
    %p152 = scmp.ne.s32.totalorder %s144, %s147
    %p153 = scmp.eq.s32.totalorder %s11, 0
    %p154 = por %p152, %p153
    %p155 = scmp.ne.s32.totalorder %s144, %s147
    %p156 = scmp.eq.s32.totalorder %s16, 15
    %p157 = por %p155, %p156
    %p158 = scmp.ne.s32.totalorder %s147, %s148
    %p159 = scmp.eq.s32.totalorder %s16, 0
    %p160 = por %p158, %p159
    %p161 = scmp.ne.s32.totalorder %s147, %s148
    %p162 = scmp.eq.s32.totalorder %s17, 15
    %p163 = por %p161, %p162
    %p165 = scmp.ne.s32.totalorder %s148, %s164
    %p166 = scmp.eq.s32.totalorder %s17, 0
    %p167 = por %p165, %p166
    %s168 = ssub.s32 %s18, %s30
    %s169 = ssub.s32 %s19, %s26
    %s170 = sor.u32 %s168, %s169
    %p171 = scmp.eq.s32.totalorder %s170, 0
    %s173 = sadd.s32 %s172, 1
    %s174 = scalar_select %p171, %s172, %s173
    %p177 = pneg %p171
    %p178 = scmp.eq.s32.totalorder %s11, 15
    %p179 = por %p177, %p178
    %p180 = scmp.ne.s32.totalorder %s172, %s175
    %p181 = scmp.eq.s32.totalorder %s11, 0
    %p182 = por %p180, %p181
    %p183 = scmp.ne.s32.totalorder %s172, %s175
    %p184 = scmp.eq.s32.totalorder %s16, 15
    %p185 = por %p183, %p184
    %p186 = scmp.ne.s32.totalorder %s175, %s176
    %p187 = scmp.eq.s32.totalorder %s16, 0
    %p188 = por %p186, %p187
    %p189 = scmp.ne.s32.totalorder %s175, %s176
    %p190 = scmp.eq.s32.totalorder %s17, 15
    %p191 = por %p189, %p190
    %p193 = scmp.ne.s32.totalorder %s176, %s192
    %p194 = scmp.eq.s32.totalorder %s17, 0
    %p195 = por %p193, %p194
    %p196 = scmp.le.s32.totalorder 1, %s11
    %p197 = scmp.lt.s32.totalorder %s11, 17
    %p198 = pnand %p196, %p197
    %p199 = pneg %p198
    // Predicated region
    $region9: #{_lambda_.7} parent=5 // pred_check
      _
    $region10: #{_lambda_.7} parent=5 // pred_check_branch
      %201 = sbr.rel (%p198) target = $region12
    $region11: #{_lambda_.7} parent=5 // pred_region
      %s202 = ssub.s32 %s11, 1
      // Predicated region
      $region13: #{_lambda_.7} parent=11 // pred_check
        %p203 = pneg %p44
      $region14: #{_lambda_.7} parent=11 // pred_check_branch
        %205 = sbr.rel (%p203) target = $region16
      $region15: #{_lambda_.7} parent=11 // pred_region
        _
      $region16: #{_lambda_.7} parent=11 // pred_fallthru
        _
    $region12: #{_lambda_.7} parent=5 // pred_fallthru
      _
    %p206 = scmp.lt.s32.totalorder %s11, 16
    // Predicated region
    $region17: #{_lambda_.7} parent=5 // pred_check
      %p207 = pneg %p206
    $region18: #{_lambda_.7} parent=5 // pred_check_branch
      %209 = sbr.rel (%p207) target = $region20
    $region19: #{_lambda_.7} parent=5 // pred_region
      // Predicated region
      $region21: #{_lambda_.7} parent=19 // pred_check
        %p210 = pneg %p66
      $region22: #{_lambda_.7} parent=19 // pred_check_branch
        %212 = sbr.rel (%p210) target = $region24
      $region23: #{_lambda_.7} parent=19 // pred_region
        %s213 = smul.u32 2, %s19
        %p214 = scmp.lt.s32.totalorder %s18, 31
        %s215 = scalar_select %p214, %s18, 31
        %p216 = scmp.lt.s32.totalorder %s213, 1
        %s217 = scalar_select %p216, %s213, 1
        %s218 = smul.addr %s215, 4
        %s219 = sadd.s32 %s217, %s218
        %s220 = smul.addr %s219, 8
        %s221 = scalar_lea.vmem %s1, %s220
        %s222 = smul.u32 2, %s19
      $region24: #{_lambda_.7} parent=19 // pred_fallthru
        _
      // Predicated region
      $region25: #{_lambda_.7} parent=19 // pred_check
        %p223 = pneg %p94
      $region26: #{_lambda_.7} parent=19 // pred_check_branch
        %225 = sbr.rel (%p223) target = $region28
      $region27: #{_lambda_.7} parent=19 // pred_region
        %s226 = smul.u32 2, %s19
        %p227 = scmp.lt.s32.totalorder %s18, 31
        %s228 = scalar_select %p227, %s18, 31
        %p229 = scmp.lt.s32.totalorder %s226, 1
        %s230 = scalar_select %p229, %s226, 1
        %s231 = smul.addr %s228, 4
        %s232 = sadd.s32 %s230, %s231
        %s233 = smul.addr %s232, 8
        %s234 = scalar_lea.vmem %s2, %s233
        %s235 = smul.u32 2, %s19
      $region28: #{_lambda_.7} parent=19 // pred_fallthru
        _
      // Predicated region
      $region29: #{_lambda_.7} parent=19 // pred_check
        %p236 = pneg %p124
      $region30: #{_lambda_.7} parent=19 // pred_check_branch
        %238 = sbr.rel (%p236) target = $region32
      $region31: #{_lambda_.7} parent=19 // pred_region
        %s239 = sadd.s32 %s18, 16
        %s240 = smul.u32 2, %s19
        %p241 = scmp.lt.s32.totalorder %s239, 31
        %s242 = scalar_select %p241, %s239, 31
        %p243 = scmp.lt.s32.totalorder %s240, 1
        %s244 = scalar_select %p243, %s240, 1
        %s245 = smul.addr %s242, 4
        %s246 = sadd.s32 %s244, %s245
        %s247 = smul.addr %s246, 8
        %s248 = scalar_lea.vmem %s3, %s247
        %s249 = sadd.s32 %s18, 16
        %s250 = smul.u32 2, %s19
      $region32: #{_lambda_.7} parent=19 // pred_fallthru
        _
      // Predicated region
      $region33: #{_lambda_.7} parent=19 // pred_check
        %p251 = pneg %p154
      $region34: #{_lambda_.7} parent=19 // pred_check_branch
        %253 = sbr.rel (%p251) target = $region36
      $region35: #{_lambda_.7} parent=19 // pred_region
        %s254 = sadd.s32 %s18, 16
        %s255 = smul.u32 2, %s19
        %p256 = scmp.lt.s32.totalorder %s254, 31
        %s257 = scalar_select %p256, %s254, 31
        %p258 = scmp.lt.s32.totalorder %s255, 1
        %s259 = scalar_select %p258, %s255, 1
        %s260 = smul.addr %s257, 4
        %s261 = sadd.s32 %s259, %s260
        %s262 = smul.addr %s261, 8
        %s263 = scalar_lea.vmem %s4, %s262
        %s264 = sadd.s32 %s18, 16
        %s265 = smul.u32 2, %s19
      $region36: #{_lambda_.7} parent=19 // pred_fallthru
        _
    $region20: #{_lambda_.7} parent=5 // pred_fallthru
      _
    %p266 = scmp.le.s32.totalorder 1, %s11
    %p267 = scmp.lt.s32.totalorder %s11, 17
    %p268 = pnand %p266, %p267
    %p269 = pneg %p268
    // Predicated region
    $region37: #{_lambda_.7} parent=5 // pred_check
      _
    $region38: #{_lambda_.7} parent=5 // pred_check_branch
      %271 = sbr.rel (%p268) target = $region40
    $region39: #{_lambda_.7} parent=5 // pred_region
      %s272 = ssub.s32 %s11, 1
      %p273 = pneg %p44
      %p274 = pneg %p41
      %s275 = smul.u32 2, %s21
      %p276 = scmp.lt.s32.totalorder %s20, 31
      %s277 = scalar_select %p276, %s20, 31
      %p278 = scmp.lt.s32.totalorder %s275, 1
      %s279 = scalar_select %p278, %s275, 1
      %s280 = smul.addr %s277, 4
      %s281 = sadd.s32 %s279, %s280
      %s282 = smul.addr %s281, 8
      %s283 = scalar_lea.vmem %s1, %s282
      %p284 = pneg %p72
      %p285 = pneg %p69
      %s286 = smul.u32 2, %s21
      %p287 = scmp.lt.s32.totalorder %s20, 31
      %s288 = scalar_select %p287, %s20, 31
      %p289 = scmp.lt.s32.totalorder %s286, 1
      %s290 = scalar_select %p289, %s286, 1
      %s291 = smul.addr %s288, 4
      %s292 = sadd.s32 %s290, %s291
      %s293 = smul.addr %s292, 8
      %s294 = scalar_lea.vmem %s2, %s293
      %p295 = pneg %p100
      %p296 = pneg %p97
      %s297 = sadd.s32 %s20, 16
      %s298 = smul.u32 2, %s21
      %p299 = scmp.lt.s32.totalorder %s297, 31
      %s300 = scalar_select %p299, %s297, 31
      %p301 = scmp.lt.s32.totalorder %s298, 1
      %s302 = scalar_select %p301, %s298, 1
      %s303 = smul.addr %s300, 4
      %s304 = sadd.s32 %s302, %s303
      %s305 = smul.addr %s304, 8
      %s306 = scalar_lea.vmem %s3, %s305
      %p307 = pneg %p130
      %p308 = pneg %p127
      %s309 = sadd.s32 %s20, 16
      %s310 = smul.u32 2, %s21
      %p311 = scmp.lt.s32.totalorder %s309, 31
      %s312 = scalar_select %p311, %s309, 31
      %p313 = scmp.lt.s32.totalorder %s310, 1
      %s314 = scalar_select %p313, %s310, 1
      %s315 = smul.addr %s312, 4
      %s316 = sadd.s32 %s314, %s315
      %s317 = smul.addr %s316, 8
      %s318 = scalar_lea.vmem %s4, %s317
      %p319 = pneg %p160
      %p320 = pneg %p157
      %p321 = pneg %p188
      %p322 = pneg %p185
      %s323 = smul.u32 2, %s21
      %p324 = scmp.lt.s32.totalorder %s20, 15
      %s325 = scalar_select %p324, %s20, 15
      %p326 = scmp.lt.s32.totalorder %s323, 1
      %s327 = scalar_select %p326, %s323, 1
      %s328 = smul.addr %s325, 4
      %s329 = sadd.s32 %s327, %s328
      %s330 = smul.addr %s329, 8
      %s331 = scalar_lea.vmem %s5, %s330
      %s332 = smul.u32 2, %s21
      %p333 = scmp.lt.s32.totalorder %s20, 31
      %s334 = scalar_select %p333, %s20, 31
      %p335 = scmp.lt.s32.totalorder %s332, 1
      %s336 = scalar_select %p335, %s332, 1
      %s337 = smul.addr %s334, 4
      %s338 = sadd.s32 %s336, %s337
      %s339 = smul.addr %s338, 8
      %s340 = scalar_lea.vmem %s1, %s339
      %s341 = smul.u32 2, %s21
      %s342 = smul.u32 2, %s21
      %p343 = scmp.lt.s32.totalorder %s20, 31
      %s344 = scalar_select %p343, %s20, 31
      %p345 = scmp.lt.s32.totalorder %s342, 1
      %s346 = scalar_select %p345, %s342, 1
      %s347 = smul.addr %s344, 4
      %s348 = sadd.s32 %s346, %s347
      %s349 = smul.addr %s348, 8
      %s350 = scalar_lea.vmem %s2, %s349
      %s351 = smul.u32 2, %s21
      %s352 = sadd.s32 %s20, 16
      %s353 = smul.u32 2, %s21
      %p354 = scmp.lt.s32.totalorder %s352, 31
      %s355 = scalar_select %p354, %s352, 31
      %p356 = scmp.lt.s32.totalorder %s353, 1
      %s357 = scalar_select %p356, %s353, 1
      %s358 = smul.addr %s355, 4
      %s359 = sadd.s32 %s357, %s358
      %s360 = smul.addr %s359, 8
      %s361 = scalar_lea.vmem %s3, %s360
      %s362 = sadd.s32 %s20, 16
      %s363 = smul.u32 2, %s21
      %s364 = sadd.s32 %s20, 16
      %s365 = smul.u32 2, %s21
      %p366 = scmp.lt.s32.totalorder %s364, 31
      %s367 = scalar_select %p366, %s364, 31
      %p368 = scmp.lt.s32.totalorder %s365, 1
      %s369 = scalar_select %p368, %s365, 1
      %s370 = smul.addr %s367, 4
      %s371 = sadd.s32 %s369, %s370
      %s372 = smul.addr %s371, 8
      %s373 = scalar_lea.vmem %s4, %s372
      %s374 = sadd.s32 %s20, 16
      %s375 = smul.u32 2, %s21
      %s376 = smul.u32 2, %s21
      %p377 = scmp.lt.s32.totalorder %s20, 15
      %s378 = scalar_select %p377, %s20, 15
      %p379 = scmp.lt.s32.totalorder %s376, 1
      %s380 = scalar_select %p379, %s376, 1
      %s381 = smul.addr %s378, 4
      %s382 = sadd.s32 %s380, %s381
      %s383 = smul.addr %s382, 8
      %s384 = scalar_lea.vmem %s5, %s383
      %s385 = smul.u32 2, %s21
      %v386 = vld [vmem:[%s340] sm:$0xff]
      %v387 = vld [vmem:[%s340 + $0x8] sm:$0xff]
      %v388 = vld [vmem:[%s340 + $0x10] sm:$0xff]
      %v389 = vld [vmem:[%s340 + $0x18] sm:$0xff]
      %v390 = vld [vmem:[%s350] sm:$0xff]
      %v391 = vld [vmem:[%s350 + $0x8] sm:$0xff]
      %v392 = vld [vmem:[%s350 + $0x10] sm:$0xff]
      %v393 = vld [vmem:[%s350 + $0x18] sm:$0xff]
      %v394 = vld [vmem:[%s361] sm:$0xff]
      %v395 = vld [vmem:[%s361 + $0x8] sm:$0xff]
      %v396 = vld [vmem:[%s361 + $0x10] sm:$0xff]
      %v397 = vld [vmem:[%s361 + $0x18] sm:$0xff]
      %v398 = vld [vmem:[%s373] sm:$0xff]
      %v399 = vld [vmem:[%s373 + $0x8] sm:$0xff]
      %v400 = vld [vmem:[%s373 + $0x10] sm:$0xff]
      %v401 = vld [vmem:[%s373 + $0x18] sm:$0xff]
      %v402 = vmul.f32 %v386, %v386
      %v403 = vmul.f32 %v387, %v387
      %v404 = vmul.f32 %v388, %v388
      %v405 = vmul.f32 %v389, %v389
      %v406 = vmul.f32 %v390, %v390
      %v407 = vmul.f32 %v391, %v391
      %v408 = vmul.f32 %v392, %v392
      %v409 = vmul.f32 %v393, %v393
      %v410 = vsub.f32 %v402, %v406
      %v411 = vsub.f32 %v403, %v407
      %v412 = vsub.f32 %v404, %v408
      %v413 = vsub.f32 %v405, %v409
      %v414 = vmul.f32 %v394, %v394
      %v415 = vmul.f32 %v395, %v395
      %v416 = vmul.f32 %v396, %v396
      %v417 = vmul.f32 %v397, %v397
      %v418 = vadd.f32 %v410, %v414
      %v419 = vadd.f32 %v411, %v415
      %v420 = vadd.f32 %v412, %v416
      %v421 = vadd.f32 %v413, %v417
      %v422 = vmul.f32 %v398, %v398
      %v423 = vmul.f32 %v399, %v399
      %v424 = vmul.f32 %v400, %v400
      %v425 = vmul.f32 %v401, %v401
      %v426 = vsub.f32 %v418, %v422
      %v427 = vsub.f32 %v419, %v423
      %v428 = vsub.f32 %v420, %v424
      %v429 = vsub.f32 %v421, %v425
      %v430 = vmul.f32 %v386, %v390
      %v431 = vmul.f32 %v387, %v391
      %v432 = vmul.f32 %v388, %v392
      %v433 = vmul.f32 %v389, %v393
      %v434 = vmul.f32 %v394, %v398
      %v435 = vmul.f32 %v395, %v399
      %v436 = vmul.f32 %v396, %v400
      %v437 = vmul.f32 %v397, %v401
      %v438 = vadd.f32 %v430, %v434
      %v439 = vadd.f32 %v431, %v435
      %v440 = vadd.f32 %v432, %v436
      %v441 = vadd.f32 %v433, %v437
      %v442 = vmul.f32 %v438, 2.0
      %v443 = vmul.f32 %v439, 2.0
      %v444 = vmul.f32 %v440, 2.0
      %v445 = vmul.f32 %v441, 2.0
      %v446 = vmul.f32 %v426, %v426
      %v447 = vmul.f32 %v427, %v427
      %v448 = vmul.f32 %v428, %v428
      %v449 = vmul.f32 %v429, %v429
      %v450 = vmul.f32 %v442, %v442
      %v451 = vmul.f32 %v443, %v443
      %v452 = vmul.f32 %v444, %v444
      %v453 = vmul.f32 %v445, %v445
      %v454 = vadd.f32 %v446, %v450
      %v455 = vadd.f32 %v447, %v451
      %v456 = vadd.f32 %v448, %v452
      %v457 = vadd.f32 %v449, %v453
      %v458 = vrsqrt.pop %v454
      %v459 = vmul.f32 %v454, %v458
      %vm460 = vcmp.eq.f32.partialorder %v454, inf
      %v461 = vsel %vm460, %v454, %v459
      %vm462 = vcmp.eq.f32.partialorder %v454, 0.0
      %v463 = vand.u32 %v454, 2147483648
      %v464 = vsel %vm462, %v463, %v461
      %v465 = vrsqrt.pop %v455
      %v466 = vmul.f32 %v455, %v465
      %vm467 = vcmp.eq.f32.partialorder %v455, inf
      %v468 = vsel %vm467, %v455, %v466
      %vm469 = vcmp.eq.f32.partialorder %v455, 0.0
      %v470 = vand.u32 %v455, 2147483648
      %v471 = vsel %vm469, %v470, %v468
      %v472 = vrsqrt.pop %v456
      %v473 = vmul.f32 %v456, %v472
      %vm474 = vcmp.eq.f32.partialorder %v456, inf
      %v475 = vsel %vm474, %v456, %v473
      %vm476 = vcmp.eq.f32.partialorder %v456, 0.0
      %v477 = vand.u32 %v456, 2147483648
      %v478 = vsel %vm476, %v477, %v475
      %v479 = vrsqrt.pop %v457
      %v480 = vmul.f32 %v457, %v479
      %vm481 = vcmp.eq.f32.partialorder %v457, inf
      %v482 = vsel %vm481, %v457, %v480
      %vm483 = vcmp.eq.f32.partialorder %v457, 0.0
      %v484 = vand.u32 %v457, 2147483648
      %v485 = vsel %vm483, %v484, %v482
      %v486 = vadd.f32 %v464, %v426
      %v487 = vadd.f32 %v471, %v427
      %v488 = vadd.f32 %v478, %v428
      %v489 = vadd.f32 %v485, %v429
      %v490 = vmul.f32 %v486, 0.5
      %v491 = vmul.f32 %v487, 0.5
      %v492 = vmul.f32 %v488, 0.5
      %v493 = vmul.f32 %v489, 0.5
      %v494 = vmax.f32 %v490, 0.0
      %v495 = vmax.f32 %v491, 0.0
      %v496 = vmax.f32 %v492, 0.0
      %v497 = vmax.f32 %v493, 0.0
      %v498 = vrsqrt.pop %v494
      %v499 = vmul.f32 %v494, %v498
      %vm500 = vcmp.eq.f32.partialorder %v494, inf
      %v501 = vsel %vm500, %v494, %v499
      %vm502 = vcmp.eq.f32.partialorder %v494, 0.0
      %v503 = vand.u32 %v494, 2147483648
      %v504 = vsel %vm502, %v503, %v501
      %v505 = vrsqrt.pop %v495
      %v506 = vmul.f32 %v495, %v505
      %vm507 = vcmp.eq.f32.partialorder %v495, inf
      %v508 = vsel %vm507, %v495, %v506
      %vm509 = vcmp.eq.f32.partialorder %v495, 0.0
      %v510 = vand.u32 %v495, 2147483648
      %v511 = vsel %vm509, %v510, %v508
      %v512 = vrsqrt.pop %v496
      %v513 = vmul.f32 %v496, %v512
      %vm514 = vcmp.eq.f32.partialorder %v496, inf
      %v515 = vsel %vm514, %v496, %v513
      %vm516 = vcmp.eq.f32.partialorder %v496, 0.0
      %v517 = vand.u32 %v496, 2147483648
      %v518 = vsel %vm516, %v517, %v515
      %v519 = vrsqrt.pop %v497
      %v520 = vmul.f32 %v497, %v519
      %vm521 = vcmp.eq.f32.partialorder %v497, inf
      %v522 = vsel %vm521, %v497, %v520
      %vm523 = vcmp.eq.f32.partialorder %v497, 0.0
      %v524 = vand.u32 %v497, 2147483648
      %v525 = vsel %vm523, %v524, %v522
      %v526 = vld [vmem:[%s0] sm:$0xff]
      %v527 = vld [vmem:[%s0 + $0x8] sm:$0xff]
      %vm528 = vcmask 130048
      %v530 = vsel %vm528, %v526, 0
      %v533 = vsel %vm528, %v527, 0
      %535 = vmatprep.subr.mxu0 %v511
      %536 = vmatpush1.msra.mxu0 %v504
      %537 = vmatprep.subr.mxu0 %v525
      %538 = vmatpush1.msra.mxu0 %v518
      %539 = vmatprep.subr.mxu0 0.0
      %540 = vmatpush1.msra.mxu0 0.0
      %541 = vmatprep.subr.mxu0 0.0
      %542 = vmatpush1.msra.mxu0 0.0
      %543 = vmatprep.subr.mxu0 0.0
      %544 = vmatpush1.msra.mxu0 0.0
      %545 = vmatprep.subr.mxu0 0.0
      %546 = vmatpush1.msra.mxu0 0.0
      %547 = vmatprep.subr.mxu0 0.0
      %548 = vmatpush1.msra.mxu0 0.0
      %549 = vmatprep.subr.mxu0 0.0
      %550 = vmatpush1.msra.mxu0 0.0
      %551 = vmatprep.subr.mxu0 0.0
      %552 = vmatpush1.msra.mxu0 0.0
      %553 = vmatprep.subr.mxu0 0.0
      %554 = vmatpush1.msra.mxu0 0.0
      %555 = vmatprep.subr.mxu0 0.0
      %556 = vmatpush1.msra.mxu0 0.0
      %557 = vmatprep.subr.mxu0 0.0
      %558 = vmatpush1.msra.mxu0 0.0
      %559 = vmatprep.subr.mxu0 0.0
      %560 = vmatpush1.msra.mxu0 0.0
      %561 = vmatprep.subr.mxu0 0.0
      %562 = vmatpush1.msra.mxu0 0.0
      %563 = vmatprep.subr.mxu0 0.0
      %564 = vmatpush1.msra.mxu0 0.0
      %565 = vmatprep.subr.mxu0 0.0
      %566 = vmatpush1.msra.mxu0 0.0
      %567 = vmatprep.subr.mxu0 0.0
      %568 = vmatpush1.msra.mxu0 0.0
      %569 = vmatprep.subr.mxu0 0.0
      %570 = vmatpush1.msra.mxu0 0.0
      %571 = vmatprep.subr.mxu0 0.0
      %572 = vmatpush1.msra.mxu0 0.0
      %573 = vmatprep.subr.mxu0 0.0
      %574 = vmatpush1.msra.mxu0 0.0
      %575 = vmatprep.subr.mxu0 0.0
      %576 = vmatpush1.msra.mxu0 0.0
      %577 = vmatprep.subr.mxu0 0.0
      %578 = vmatpush1.msra.mxu0 0.0
      %579 = vmatprep.subr.mxu0 0.0
      %580 = vmatpush1.msra.mxu0 0.0
      %581 = vmatprep.subr.mxu0 0.0
      %582 = vmatpush1.msra.mxu0 0.0
      %583 = vmatprep.subr.mxu0 0.0
      %584 = vmatpush1.msra.mxu0 0.0
      %585 = vmatprep.subr.mxu0 0.0
      %586 = vmatpush1.msra.mxu0 0.0
      %587 = vmatprep.subr.mxu0 0.0
      %588 = vmatpush1.msra.mxu0 0.0
      %589 = vmatprep.subr.mxu0 0.0
      %590 = vmatpush1.msra.mxu0 0.0
      %591 = vmatprep.subr.mxu0 0.0
      %592 = vmatpush1.msra.mxu0 0.0
      %593 = vmatprep.subr.mxu0 0.0
      %594 = vmatpush1.msra.mxu0 0.0
      %595 = vmatprep.subr.mxu0 0.0
      %596 = vmatpush1.msra.mxu0 0.0
      %597 = vmatprep.subr.mxu0 0.0
      %598 = vmatpush1.msra.mxu0 0.0
      %599 = vmatprep.mubr.f32.mxu0 0.0
      %600 = vmatmul.mubr.f32.gmra.mrb[0].mxu0 %v530
      %v601 = vpop.f32.mrb[0].mxu0
      %v602 = vadd.f32 0.0, %v601
      %v603 = vpop.f32.mrb[0].mxu0
      %v604 = vadd.f32 0.0, %v603
      %605 = vmatprep.mubr.f32.mxu0 0.0
      %606 = vmatmul.mubr.f32.gmra.mrb[0].mxu0 %v533
      %v607 = vpop.f32.mrb[0].mxu0
      %v608 = vadd.f32 0.0, %v607
      %v609 = vpop.f32.mrb[0].mxu0
      %v610 = vadd.f32 0.0, %v609
      %611 = vdwg.mxu0
      %612 = vst [vmem:[%s384] sm:$0xff] %v602
      %613 = vst [vmem:[%s384 + $0x8] sm:$0xff] %v604
      %614 = vst [vmem:[%s384 + $0x10] sm:$0xff] %v608
      %615 = vst [vmem:[%s384 + $0x18] sm:$0xff] %v610
      %s616 = smul.u32 2, %s21
      %p617 = scmp.lt.s32.totalorder %s20, 15
      %s618 = scalar_select %p617, %s20, 15
      %p619 = scmp.lt.s32.totalorder %s616, 1
      %s620 = scalar_select %p619, %s616, 1
      %s621 = smul.addr %s618, 4
      %s622 = sadd.s32 %s620, %s621
      %s623 = smul.addr %s622, 8
      %s624 = scalar_lea.vmem %s5, %s623
      // Predicated region
      $region41: #{_lambda_.7} parent=39 // pred_check
        %p625 = pneg %p185
      $region42: #{_lambda_.7} parent=39 // pred_check_branch
        %627 = sbr.rel (%p625) target = $region44
      $region43: #{_lambda_.7} parent=39 // pred_region
        %s628 = smul.u32 2, %s21
      $region44: #{_lambda_.7} parent=39 // pred_fallthru
        _
    $region40: #{_lambda_.7} parent=5 // pred_fallthru
      _
    %p629 = scmp.le.s32.totalorder 2, %s11
    // Predicated region
    $region45: #{_lambda_.7} parent=5 // pred_check
      %p630 = pneg %p629
    $region46: #{_lambda_.7} parent=5 // pred_check_branch
      %632 = sbr.rel (%p630) target = $region48
    $region47: #{_lambda_.7} parent=5 // pred_region
      %s633 = ssub.s32 %s11, 2
      // Predicated region
      $region49: #{_lambda_.7} parent=47 // pred_check
        %p634 = pneg %p191
      $region50: #{_lambda_.7} parent=47 // pred_check_branch
        %636 = sbr.rel (%p634) target = $region52
      $region51: #{_lambda_.7} parent=47 // pred_region
        %s637 = smul.u32 2, %s23
        %p638 = scmp.lt.s32.totalorder %s22, 15
        %s639 = scalar_select %p638, %s22, 15
        %p640 = scmp.lt.s32.totalorder %s637, 1
        %s641 = scalar_select %p640, %s637, 1
        %s642 = smul.addr %s639, 4
        %s643 = sadd.s32 %s641, %s642
        %s644 = smul.addr %s643, 8
        %s645 = scalar_lea.vmem %s5, %s644
      $region52: #{_lambda_.7} parent=47 // pred_fallthru
        _
    $region48: #{_lambda_.7} parent=5 // pred_fallthru
      _
  $region6: #{_lambda_.7} parent=0 // loop_footer
    %s15 = sadd.s32 1, %s11
  $region7: #{_lambda_.7} parent=0 // loop_footer_branch
    %10 = sbr.rel target = $region3
  $region8: #{_lambda_.7} parent=0 // loop_exit
    _

</llo_original>
